<compile_context>
chip_gen: v7x
topology: tpu7x:2x2x1
jax: 0.10.0
libtpu: 0.0.40
codegen_flags: <defaults>
</compile_context>

<pallas_src>
import functools

import jax
import jax.numpy as jnp
from jax.experimental import pallas as pl
from jax.experimental.pallas import tpu as pltpu

P_DROP = 0.5
KEEP_SCALE = 1.0 / (1.0 - P_DROP)          # 2.0, exact in bf16

IN_FEATURES = 9216                          # 256 * 6 * 6 after AlexNet avgpool+flatten
H0 = 64                                     # lin0 out features
H0_PAD = 128                                # lane-padded lin0 width
VA = 2                                      # va_regressor out features
VA_PAD = 128                                # lane-padded va width


def _round_up(a, b):
    return ((a + b - 1) // b) * b


# --------------------------------------------------------------------------- kernel
def regressor_alex_kernel(x_ref, m0_ref, m1_ref, w0_ref, b0_ref, w1_ref, b1_ref,
                          w2_ref, b2_ref, va_ref, btl2_ref):
    # dropout0 -> lin0 -> relu  (bf16 matmul, f32 accumulate)
    x_do = x_ref[...] * m0_ref[...]                               # (tb, 9216) bf16
    h0 = jnp.dot(x_do, w0_ref[...],
                 preferred_element_type=jnp.float32) + b0_ref[...]
    h0 = jnp.maximum(h0, 0.0)                                     # (tb, 128) f32; lanes >=64 are 0

    # dropout1 -> lin1 -> relu
    h0_do = (h0 * m1_ref[...]).astype(jnp.bfloat16)               # (tb, 128) bf16
    h1 = jnp.dot(h0_do, w1_ref[...],
                 preferred_element_type=jnp.float32) + b1_ref[...]
    h1 = jnp.maximum(h1, 0.0)                                     # (tb, Lp) f32
    btl2_ref[...] = h1                                            # x_btl_2 (padded latent)

    # va_regressor (128-lane padded output; real values live in [:, :2])
    va_ref[...] = jnp.dot(h1.astype(jnp.bfloat16), w2_ref[...],
                          preferred_element_type=jnp.float32) + b2_ref[...]


# --------------------------------------------------------------------------- wrapper
def adaptive_avg_pool_6x6(x):
    """nn.AdaptiveAvgPool2d((6,6)) for spatial sizes that are multiples of 6."""
    B, C, H, W = x.shape
    if (H, W) == (6, 6):
        return x
    assert H % 6 == 0 and W % 6 == 0, "only multiples of 6 supported"
    # TODO(synk): general AdaptiveAvgPool2d bins for non-multiple spatial sizes.
    x = x.reshape(B, C, 6, H // 6, 6, W // 6)
    return x.mean(axis=(3, 5))


def regressor_alex(x_img, params, rng, *, latent_dim, training=True, batch_tile=256):
    """x_img: (B, 256, H, W) with H, W multiples of 6.  Returns (x_va, x_btl_2)."""
    w0, b0, w1, b1, w2, b2 = params
    Lp = w1.shape[1]                                  # padded latent width (multiple of 128)

    x = adaptive_avg_pool_6x6(x_img)
    B = x.shape[0]
    assert x.shape[1] * x.shape[2] * x.shape[3] == IN_FEATURES
    x = x.reshape(B, IN_FEATURES).astype(jnp.bfloat16)

    # Pre-scaled keep masks (train: {0, 2.0}; eval: identity).
    if training:
        k0, k1 = jax.random.split(rng)
        m0 = (jax.random.bernoulli(k0, 1.0 - P_DROP, (B, IN_FEATURES))
              .astype(jnp.bfloat16) * KEEP_SCALE)
        m1 = (jax.random.bernoulli(k1, 1.0 - P_DROP, (B, H0_PAD))
              .astype(jnp.float32) * KEEP_SCALE)
    else:
        m0 = jnp.ones((B, IN_FEATURES), jnp.bfloat16)
        m1 = jnp.ones((B, H0_PAD), jnp.float32)

    # Batch tiling (pad batch so the grid divides it; sublane-aligned).
    Bp = _round_up(B, 8)
    tb = min(batch_tile, Bp)
    Bp = _round_up(Bp, tb)
    if Bp != B:
        pad = ((0, Bp - B), (0, 0))
        x = jnp.pad(x, pad)
        m0 = jnp.pad(m0, pad)
        m1 = jnp.pad(m1, pad)
    grid = (Bp // tb,)

    row = lambda n: pl.BlockSpec((tb, n), lambda i: (i, 0))       # batch-blocked
    fix = lambda r, c: pl.BlockSpec((r, c), lambda i: (0, 0))     # VMEM-resident weights

    flops = 2 * Bp * (IN_FEATURES * H0_PAD + H0_PAD * Lp + Lp * VA_PAD)
    bytes_accessed = int(
        Bp * IN_FEATURES * 2 +               # x (bf16)
        Bp * IN_FEATURES * 2 +               # dropout0 mask (bf16)
        Bp * H0_PAD * 4 +                    # dropout1 mask (f32)
        (IN_FEATURES * H0_PAD + H0_PAD * Lp + Lp * VA_PAD) * 2 +   # weights (bf16)
        (H0_PAD + Lp + VA_PAD) * 4 +         # biases (f32)
        Bp * (VA_PAD + Lp) * 4)              # outputs (f32)

    va_pad, btl2_pad = pl.pallas_call(
        regressor_alex_kernel,
        out_shape=(jax.ShapeDtypeStruct((Bp, VA_PAD), jnp.float32),
                   jax.ShapeDtypeStruct((Bp, Lp), jnp.float32)),
        grid=grid,
        in_specs=[row(IN_FEATURES),              # x
                  row(IN_FEATURES),              # dropout0 mask
                  row(H0_PAD),                   # dropout1 mask
                  fix(IN_FEATURES, H0_PAD),      # w0
                  fix(1, H0_PAD),                # b0
                  fix(H0_PAD, Lp),               # w1
                  fix(1, Lp),                    # b1
                  fix(Lp, VA_PAD),               # w2
                  fix(1, VA_PAD)],               # b2
        out_specs=(row(VA_PAD), row(Lp)),
        compiler_params=pltpu.CompilerParams(
            dimension_semantics=("parallel",),
            vmem_limit_bytes=48 * 1024 * 1024),
        cost_estimate=pl.CostEstimate(flops=flops, transcendentals=0,
                                      bytes_accessed=bytes_accessed),
    )(x, m0, m1, w0, b0, w1, b1, w2, b2)

    return va_pad[:B, :VA], btl2_pad[:B, :latent_dim]


# --------------------------------------------------------------------------- params
def init_params(key, latent_dim):
    """PyTorch-style Linear init, pre-transposed to (in,out) and zero-padded to 128 lanes."""
    Lp = _round_up(latent_dim, 128)

    def linear(k, fan_in, fan_out, in_pad, out_pad):
        kw, kb = jax.random.split(k)
        bound = 1.0 / (fan_in ** 0.5)
        w = jax.random.uniform(kw, (fan_in, fan_out), jnp.float32, -bound, bound)
        b = jax.random.uniform(kb, (fan_out,), jnp.float32, -bound, bound)
        w_pad = jnp.zeros((in_pad, out_pad), jnp.float32).at[:fan_in, :fan_out].set(w)
        b_pad = jnp.zeros((1, out_pad), jnp.float32).at[0, :fan_out].set(b)
        return w_pad.astype(jnp.bfloat16), b_pad

    k0, k1, k2 = jax.random.split(key, 3)
    w0, b0 = linear(k0, IN_FEATURES, H0, IN_FEATURES, H0_PAD)
    w1, b1 = linear(k1, H0, latent_dim, H0_PAD, Lp)
    w2, b2 = linear(k2, latent_dim, VA, Lp, VA_PAD)
    return (w0, b0, w1, b1, w2, b2)


# --------------------------------------------------------------------------- demo
if __name__ == "__main__":
    key = jax.random.PRNGKey(0)
    kx, kp, kd = jax.random.split(key, 3)

    B, latent_dim = 2, 256
    x = jax.random.normal(kx, (B, 256, 6, 6), jnp.float32)   # AlexNet feature maps
    params = init_params(kp, latent_dim)

    x_va, x_btl_2 = regressor_alex(x, params, kd, latent_dim=latent_dim, training=True)
    jax.block_until_ready((x_va, x_btl_2))

    assert x_va.shape == (B, VA) and x_va.dtype == jnp.float32
    assert x_btl_2.shape == (B, latent_dim) and x_btl_2.dtype == jnp.float32
    assert bool(jnp.all(x_btl_2 >= 0.0))          # ReLU output
    assert bool(jnp.all(jnp.isfinite(x_va)))
    print("KERNEL_OK")
</pallas_src>

<mosaic_0001>
module attributes {stable_mosaic.version = 11 : i64} {
  func.func @regressor_alex_kernel(%arg0: i32, %arg1: memref<8x9216xbf16, #tpu.memory_space<vmem>>, %arg2: memref<8x9216xbf16, #tpu.memory_space<vmem>>, %arg3: memref<8x128xf32, #tpu.memory_space<vmem>>, %arg4: memref<9216x128xbf16, #tpu.memory_space<vmem>>, %arg5: memref<1x128xf32, #tpu.memory_space<vmem>>, %arg6: memref<128x256xbf16, #tpu.memory_space<vmem>>, %arg7: memref<1x256xf32, #tpu.memory_space<vmem>>, %arg8: memref<256x128xbf16, #tpu.memory_space<vmem>>, %arg9: memref<1x128xf32, #tpu.memory_space<vmem>>, %arg10: memref<8x128xf32, #tpu.memory_space<vmem>>, %arg11: memref<8x256xf32, #tpu.memory_space<vmem>>) attributes {dimension_semantics = [#tpu.dimension_semantics<parallel>], iteration_bounds = array<i64: 1>, scalar_prefetch = 0 : i64, scratch_operands = 0 : i64, tpu.core_type = #tpu.core_type<tc>, window_params = [{transform_indices = @transform_0, window_bounds = array<i64: 8, 9216>}, {transform_indices = @transform_1, window_bounds = array<i64: 8, 9216>}, {transform_indices = @transform_2, window_bounds = array<i64: 8, 128>}, {pipeline_mode = #tpu.pipeline_mode<synchronous>, transform_indices = @transform_3, window_bounds = array<i64: 9216, 128>}, {pipeline_mode = #tpu.pipeline_mode<synchronous>, transform_indices = @transform_4, window_bounds = array<i64: 1, 128>}, {pipeline_mode = #tpu.pipeline_mode<synchronous>, transform_indices = @transform_5, window_bounds = array<i64: 128, 256>}, {pipeline_mode = #tpu.pipeline_mode<synchronous>, transform_indices = @transform_6, window_bounds = array<i64: 1, 256>}, {pipeline_mode = #tpu.pipeline_mode<synchronous>, transform_indices = @transform_7, window_bounds = array<i64: 256, 128>}, {pipeline_mode = #tpu.pipeline_mode<synchronous>, transform_indices = @transform_8, window_bounds = array<i64: 1, 128>}, {transform_indices = @transform_9, window_bounds = array<i64: 8, 128>}, {transform_indices = @transform_10, window_bounds = array<i64: 8, 256>}]} {
    %c0 = arith.constant 0 : index
    %c0_0 = arith.constant 0 : index
    %0 = vector.load %arg1[%c0, %c0_0] : memref<8x9216xbf16, #tpu.memory_space<vmem>>, vector<8x9216xbf16>
    %c0_1 = arith.constant 0 : index
    %c0_2 = arith.constant 0 : index
    %1 = vector.load %arg2[%c0_1, %c0_2] : memref<8x9216xbf16, #tpu.memory_space<vmem>>, vector<8x9216xbf16>
    %2 = arith.mulf %0, %1 : vector<8x9216xbf16>
    %c0_3 = arith.constant 0 : index
    %c0_4 = arith.constant 0 : index
    %3 = vector.load %arg4[%c0_3, %c0_4] : memref<9216x128xbf16, #tpu.memory_space<vmem>>, vector<9216x128xbf16>
    %cst = arith.constant dense<0.000000e+00> : vector<8x128xf32>
    %4 = tpu.matmul %2, %3, %cst {dimension_numbers = #tpu.dot_dimension_numbers<[1], [0], [0], [1], [0, 0, 1, 1], [], []>} : vector<8x9216xbf16>, vector<9216x128xbf16>, vector<8x128xf32> -> vector<8x128xf32>
    %c0_5 = arith.constant 0 : index
    %c0_6 = arith.constant 0 : index
    %5 = vector.load %arg5[%c0_5, %c0_6] : memref<1x128xf32, #tpu.memory_space<vmem>>, vector<1x128xf32>
    %6 = vector.broadcast %5 : vector<1x128xf32> to vector<8x128xf32>
    %7 = arith.addf %4, %6 : vector<8x128xf32>
    %cst_7 = arith.constant 0.000000e+00 : f32
    %8 = vector.broadcast %cst_7 : f32 to vector<8x128xf32>
    %9 = arith.maximumf %7, %8 : vector<8x128xf32>
    %c0_8 = arith.constant 0 : index
    %c0_9 = arith.constant 0 : index
    %10 = vector.load %arg3[%c0_8, %c0_9] : memref<8x128xf32, #tpu.memory_space<vmem>>, vector<8x128xf32>
    %11 = arith.mulf %9, %10 : vector<8x128xf32>
    %12 = arith.truncf %11 : vector<8x128xf32> to vector<8x128xbf16>
    %c0_10 = arith.constant 0 : index
    %c0_11 = arith.constant 0 : index
    %13 = vector.load %arg6[%c0_10, %c0_11] : memref<128x256xbf16, #tpu.memory_space<vmem>>, vector<128x256xbf16>
    %cst_12 = arith.constant dense<0.000000e+00> : vector<8x256xf32>
    %14 = tpu.matmul %12, %13, %cst_12 {dimension_numbers = #tpu.dot_dimension_numbers<[1], [0], [0], [1], [0, 0, 1, 1], [], []>} : vector<8x128xbf16>, vector<128x256xbf16>, vector<8x256xf32> -> vector<8x256xf32>
    %c0_13 = arith.constant 0 : index
    %c0_14 = arith.constant 0 : index
    %15 = vector.load %arg7[%c0_13, %c0_14] : memref<1x256xf32, #tpu.memory_space<vmem>>, vector<1x256xf32>
    %16 = vector.broadcast %15 : vector<1x256xf32> to vector<8x256xf32>
    %17 = arith.addf %14, %16 : vector<8x256xf32>
    %cst_15 = arith.constant 0.000000e+00 : f32
    %18 = vector.broadcast %cst_15 : f32 to vector<8x256xf32>
    %19 = arith.maximumf %17, %18 : vector<8x256xf32>
    %c0_16 = arith.constant 0 : index
    %c0_17 = arith.constant 0 : index
    %20 = vector.load %arg11[%c0_16, %c0_17] : memref<8x256xf32, #tpu.memory_space<vmem>>, vector<8x256xf32>
    tpu.vector_store %arg11[%c0_16, %c0_17], %19 {strides = array<i32>} : memref<8x256xf32, #tpu.memory_space<vmem>>, vector<8x256xf32>,
    %21 = arith.truncf %19 : vector<8x256xf32> to vector<8x256xbf16>
    %c0_18 = arith.constant 0 : index
    %c0_19 = arith.constant 0 : index
    %22 = vector.load %arg8[%c0_18, %c0_19] : memref<256x128xbf16, #tpu.memory_space<vmem>>, vector<256x128xbf16>
    %cst_20 = arith.constant dense<0.000000e+00> : vector<8x128xf32>
    %23 = tpu.matmul %21, %22, %cst_20 {dimension_numbers = #tpu.dot_dimension_numbers<[1], [0], [0], [1], [0, 0, 1, 1], [], []>} : vector<8x256xbf16>, vector<256x128xbf16>, vector<8x128xf32> -> vector<8x128xf32>
    %c0_21 = arith.constant 0 : index
    %c0_22 = arith.constant 0 : index
    %24 = vector.load %arg9[%c0_21, %c0_22] : memref<1x128xf32, #tpu.memory_space<vmem>>, vector<1x128xf32>
    %25 = vector.broadcast %24 : vector<1x128xf32> to vector<8x128xf32>
    %26 = arith.addf %23, %25 : vector<8x128xf32>
    %c0_23 = arith.constant 0 : index
    %c0_24 = arith.constant 0 : index
    %27 = vector.load %arg10[%c0_23, %c0_24] : memref<8x128xf32, #tpu.memory_space<vmem>>, vector<8x128xf32>
    tpu.vector_store %arg10[%c0_23, %c0_24], %26 {strides = array<i32>} : memref<8x128xf32, #tpu.memory_space<vmem>>, vector<8x128xf32>,
    return
  }
  func.func @transform_0(%arg0: i32) -> (i32, i32) {
    %c0_i32 = arith.constant 0 : i32
    %c0_i32_0 = arith.constant 0 : i32
    return %arg0, %c0_i32 : i32, i32
  }
  func.func @transform_1(%arg0: i32) -> (i32, i32) {
    %c0_i32 = arith.constant 0 : i32
    %c0_i32_0 = arith.constant 0 : i32
    return %arg0, %c0_i32 : i32, i32
  }
  func.func @transform_2(%arg0: i32) -> (i32, i32) {
    %c0_i32 = arith.constant 0 : i32
    %c0_i32_0 = arith.constant 0 : i32
    return %arg0, %c0_i32 : i32, i32
  }
  func.func @transform_3(%arg0: i32) -> (i32, i32) {
    %c0_i32 = arith.constant 0 : i32
    %c0_i32_0 = arith.constant 0 : i32
    %c0_i32_1 = arith.constant 0 : i32
    return %c0_i32, %c0_i32_0 : i32, i32
  }
  func.func @transform_4(%arg0: i32) -> (i32, i32) {
    %c0_i32 = arith.constant 0 : i32
    %c0_i32_0 = arith.constant 0 : i32
    %c0_i32_1 = arith.constant 0 : i32
    return %c0_i32, %c0_i32_0 : i32, i32
  }
  func.func @transform_5(%arg0: i32) -> (i32, i32) {
    %c0_i32 = arith.constant 0 : i32
    %c0_i32_0 = arith.constant 0 : i32
    %c0_i32_1 = arith.constant 0 : i32
    return %c0_i32, %c0_i32_0 : i32, i32
  }
  func.func @transform_6(%arg0: i32) -> (i32, i32) {
    %c0_i32 = arith.constant 0 : i32
    %c0_i32_0 = arith.constant 0 : i32
    %c0_i32_1 = arith.constant 0 : i32
    return %c0_i32, %c0_i32_0 : i32, i32
  }
  func.func @transform_7(%arg0: i32) -> (i32, i32) {
    %c0_i32 = arith.constant 0 : i32
    %c0_i32_0 = arith.constant 0 : i32
    %c0_i32_1 = arith.constant 0 : i32
    return %c0_i32, %c0_i32_0 : i32, i32
  }
  func.func @transform_8(%arg0: i32) -> (i32, i32) {
    %c0_i32 = arith.constant 0 : i32
    %c0_i32_0 = arith.constant 0 : i32
    %c0_i32_1 = arith.constant 0 : i32
    return %c0_i32, %c0_i32_0 : i32, i32
  }
  func.func @transform_9(%arg0: i32) -> (i32, i32) {
    %c0_i32 = arith.constant 0 : i32
    %c0_i32_0 = arith.constant 0 : i32
    return %arg0, %c0_i32 : i32, i32
  }
  func.func @transform_10(%arg0: i32) -> (i32, i32) {
    %c0_i32 = arith.constant 0 : i32
    %c0_i32_0 = arith.constant 0 : i32
    return %arg0, %c0_i32 : i32, i32
  }
}

</mosaic_0001>

<llo_original>
// kernel: tpu_custom_call.1
$region0: #{tpu_custom_call.1}
  #allocation0 [shape = 'u32[]', space=smem, size = 0x4, offset = 0x4, fixed_abs, tag = 'smem constant byte address 0x4 - core index']
  #allocation1 [shape = 'u32[144,128]{1,0:T(1,128)}', space=vmem, size = 0x12000, scoped, tag = 'internal scratch']
  %s0 = inlined_call_operand.hbm [shape: bf16[8,9216], index: 0, kind: input, shape index: {}]
  %s1 = inlined_call_operand.hbm [shape: bf16[8,9216], index: 1, kind: input, shape index: {}]
  %s2 = inlined_call_operand.hbm [shape: f32[8,128], index: 2, kind: input, shape index: {}]
  %s3 = inlined_call_operand.hbm [shape: bf16[9216,128], index: 3, kind: input, shape index: {}]
  %s4 = inlined_call_operand.hbm [shape: f32[1,128], index: 4, kind: input, shape index: {}]
  %s5 = inlined_call_operand.hbm [shape: bf16[128,256], index: 5, kind: input, shape index: {}]
  %s6 = inlined_call_operand.hbm [shape: f32[1,256], index: 6, kind: input, shape index: {}]
  %s7 = inlined_call_operand.hbm [shape: bf16[256,128], index: 7, kind: input, shape index: {}]
  %s8 = inlined_call_operand.hbm [shape: f32[1,128], index: 8, kind: input, shape index: {}]
  %s9 = inlined_call_operand.hbm [shape: f32[8,128], index: 9, kind: output, shape index: {0}]
  %s10 = inlined_call_operand.hbm [shape: f32[8,256], index: 10, kind: output, shape index: {1}]
  %11 = xla_tuple %s9, %s10
  %s12 = sld [smem:[#allocation0]]
  $region90: #{tpu_custom_call.1} parent=0
    _
  %s14 = ssub.s32 1, %s12
  %s15 = scalar_select 0, %s14, %s12
  $region1: #{tpu_custom_call.1} parent=0
    #allocation2 [shape = 'u8[147456]{0}', space=vmem, size = 0x24000, scoped, tag = 'input window, operand 0, single buffered']
    #allocation3 [shape = 's32[1]{0}', space=sflag, size = 0x4, scoped, tag = 'scoped memory for tpu_custom_call.1']
    #allocation4 [shape = 's32[1]{0}', space=sflag, size = 0x4, scoped, tag = 'scoped memory for tpu_custom_call.1']
    #allocation5 [shape = 'u8[147456]{0}', space=vmem, size = 0x24000, scoped, tag = 'input window, operand 1, single buffered']
    #allocation6 [shape = 's32[1]{0}', space=sflag, size = 0x4, scoped, tag = 'scoped memory for tpu_custom_call.1']
    #allocation7 [shape = 'u8[4096]{0}', space=vmem, size = 0x1000, scoped, tag = 'input window, operand 2, single buffered']
    #allocation8 [shape = 'u8[2359296]{0}', space=vmem, size = 0x240000, scoped, tag = 'input window, operand 3, single buffered']
    #allocation9 [shape = 's32[1]{0}', space=sflag, size = 0x4, scoped, tag = 'scoped memory for tpu_custom_call.1']
    #allocation10 [shape = 'u8[512]{0}', space=vmem, size = 0x400, scoped, tag = 'input window, operand 4, single buffered']
    #allocation11 [shape = 'u8[65536]{0}', space=vmem, size = 0x10000, scoped, tag = 'input window, operand 5, single buffered']
    #allocation12 [shape = 's32[1]{0}', space=sflag, size = 0x4, scoped, tag = 'scoped memory for tpu_custom_call.1']
    #allocation13 [shape = 'u8[1024]{0}', space=vmem, size = 0x400, scoped, tag = 'input window, operand 6, single buffered']
    #allocation14 [shape = 'u8[65536]{0}', space=vmem, size = 0x10000, scoped, tag = 'input window, operand 7, single buffered']
    #allocation15 [shape = 's32[1]{0}', space=sflag, size = 0x4, scoped, tag = 'scoped memory for tpu_custom_call.1']
    #allocation16 [shape = 'u8[512]{0}', space=vmem, size = 0x400, scoped, tag = 'input window, operand 8, single buffered']
    #allocation17 [shape = 'u8[4096]{0}', space=vmem, size = 0x1000, scoped, tag = 'output window, operand 0, single buffered']
    #allocation18 [shape = 'u8[8192]{0}', space=vmem, size = 0x2000, scoped, tag = 'output window, operand 1, single buffered']
    #allocation19 [shape = 's32[1]{0}', space=sflag, size = 0x4, scoped, tag = 'scoped memory for tpu_custom_call.1']
    %16 = vsyncpa [#allocation3], 0
    %17 = vsyncpa [#allocation6], 0
    %18 = vsyncpa [#allocation9], 0
    %19 = vsyncpa [#allocation12], 0
    %20 = vsyncpa [#allocation15], 0
    %21 = vsyncpa [#allocation4], 0
    %22 = vsyncpa [#allocation19], 0
    // Predicated region
    $region2: #{tpu_custom_call.1} parent=1 // pred_check
      _
    $region3: #{tpu_custom_call.1} parent=1 // pred_check_branch
      %24 = sbr.rel (0) target = $region5
    $region4: #{tpu_custom_call.1} parent=1 // pred_region
      %s26 = ssub.s32 4608, 4608
      %27 = vsyncadd [#allocation3], %s26
      %s29 = sshll.u32 [#allocation2], 4
      %s30 = int_to_ptr.vmem [resolvable:$true] %s29
      %32 = dma.hbm_to_vmem [thread:$0]  %s0, 4608, %s30, [#allocation3]
    $region5: #{tpu_custom_call.1} parent=1 // pred_fallthru
      _
    // Predicated region
    $region6: #{tpu_custom_call.1} parent=1 // pred_check
      _
    $region7: #{tpu_custom_call.1} parent=1 // pred_check_branch
      %34 = sbr.rel (0) target = $region9
    $region8: #{tpu_custom_call.1} parent=1 // pred_region
      %s36 = ssub.s32 4608, 4608
      %37 = vsyncadd [#allocation6], %s36
      %s39 = sshll.u32 [#allocation5], 4
      %s40 = int_to_ptr.vmem [resolvable:$true] %s39
      %42 = dma.hbm_to_vmem [thread:$0]  %s1, 4608, %s40, [#allocation6]
    $region9: #{tpu_custom_call.1} parent=1 // pred_fallthru
      _
    // Predicated region
    $region10: #{tpu_custom_call.1} parent=1 // pred_check
      _
    $region11: #{tpu_custom_call.1} parent=1 // pred_check_branch
      %44 = sbr.rel (0) target = $region13
    $region12: #{tpu_custom_call.1} parent=1 // pred_region
      %s46 = ssub.s32 128, 128
      %47 = vsyncadd [#allocation6], %s46
      %s49 = sshll.u32 [#allocation7], 4
      %s50 = int_to_ptr.vmem [resolvable:$true] %s49
      %52 = dma.hbm_to_vmem [thread:$0]  %s2, 128, %s50, [#allocation6]
    $region13: #{tpu_custom_call.1} parent=1 // pred_fallthru
      _
    // Predicated region
    $region14: #{tpu_custom_call.1} parent=1 // pred_check
      _
    $region15: #{tpu_custom_call.1} parent=1 // pred_check_branch
      %54 = sbr.rel (0) target = $region17
    $region16: #{tpu_custom_call.1} parent=1 // pred_region
      %s56 = ssub.s32 73728, 73728
      %57 = vsyncadd [#allocation9], %s56
      %s58 = sshll.u32 [#allocation8], 4
      %s59 = int_to_ptr.vmem [resolvable:$true] %s58
      %64 = dma.hbm_to_vmem [thread:$0]  %s3, 73728, %s59, [#allocation9], 64, 64, 4
    $region17: #{tpu_custom_call.1} parent=1 // pred_fallthru
      _
    // Predicated region
    $region18: #{tpu_custom_call.1} parent=1 // pred_check
      _
    $region19: #{tpu_custom_call.1} parent=1 // pred_check_branch
      %66 = sbr.rel (0) target = $region21
    $region20: #{tpu_custom_call.1} parent=1 // pred_region
      %s68 = ssub.s32 16, 16
      %69 = vsyncadd [#allocation9], %s68
      %s71 = sshll.u32 [#allocation10], 4
      %s72 = int_to_ptr.vmem [resolvable:$true] %s71
      %74 = dma.hbm_to_vmem [thread:$0]  %s4, 16, %s72, [#allocation9]
    $region21: #{tpu_custom_call.1} parent=1 // pred_fallthru
      _
    // Predicated region
    $region22: #{tpu_custom_call.1} parent=1 // pred_check
      _
    $region23: #{tpu_custom_call.1} parent=1 // pred_check_branch
      %76 = sbr.rel (0) target = $region25
    $region24: #{tpu_custom_call.1} parent=1 // pred_region
      %s78 = ssub.s32 2048, 2048
      %79 = vsyncadd [#allocation12], %s78
      %s80 = sshll.u32 [#allocation11], 4
      %s81 = int_to_ptr.vmem [resolvable:$true] %s80
      %86 = dma.hbm_to_vmem [thread:$0]  %s5, 2048, %s81, [#allocation12], 128, 128, 8
    $region25: #{tpu_custom_call.1} parent=1 // pred_fallthru
      _
    // Predicated region
    $region26: #{tpu_custom_call.1} parent=1 // pred_check
      _
    $region27: #{tpu_custom_call.1} parent=1 // pred_check_branch
      %88 = sbr.rel (0) target = $region29
    $region28: #{tpu_custom_call.1} parent=1 // pred_region
      %s90 = ssub.s32 32, 32
      %91 = vsyncadd [#allocation12], %s90
      %s93 = sshll.u32 [#allocation13], 4
      %s94 = int_to_ptr.vmem [resolvable:$true] %s93
      %96 = dma.hbm_to_vmem [thread:$0]  %s6, 32, %s94, [#allocation12]
    $region29: #{tpu_custom_call.1} parent=1 // pred_fallthru
      _
    // Predicated region
    $region30: #{tpu_custom_call.1} parent=1 // pred_check
      _
    $region31: #{tpu_custom_call.1} parent=1 // pred_check_branch
      %98 = sbr.rel (0) target = $region33
    $region32: #{tpu_custom_call.1} parent=1 // pred_region
      %s100 = ssub.s32 2048, 2048
      %101 = vsyncadd [#allocation15], %s100
      %s102 = sshll.u32 [#allocation14], 4
      %s103 = int_to_ptr.vmem [resolvable:$true] %s102
      %108 = dma.hbm_to_vmem [thread:$0]  %s7, 2048, %s103, [#allocation15], 64, 64, 4
    $region33: #{tpu_custom_call.1} parent=1 // pred_fallthru
      _
    // Predicated region
    $region34: #{tpu_custom_call.1} parent=1 // pred_check
      _
    $region35: #{tpu_custom_call.1} parent=1 // pred_check_branch
      %110 = sbr.rel (0) target = $region37
    $region36: #{tpu_custom_call.1} parent=1 // pred_region
      %s112 = ssub.s32 16, 16
      %113 = vsyncadd [#allocation15], %s112
      %s115 = sshll.u32 [#allocation16], 4
      %s116 = int_to_ptr.vmem [resolvable:$true] %s115
      %118 = dma.hbm_to_vmem [thread:$0]  %s8, 16, %s116, [#allocation15]
    $region37: #{tpu_custom_call.1} parent=1 // pred_fallthru
      _
    // Predicated region
    $region38: #{tpu_custom_call.1} parent=1 // pred_check
      _
    $region39: #{tpu_custom_call.1} parent=1 // pred_check_branch
      %120 = sbr.rel (0) target = $region41
    $region40: #{tpu_custom_call.1} parent=1 // pred_region
      %121 = dma.done [#allocation3], 4608
    $region41: #{tpu_custom_call.1} parent=1 // pred_fallthru
      _
    // Predicated region
    $region42: #{tpu_custom_call.1} parent=1 // pred_check
      _
    $region43: #{tpu_custom_call.1} parent=1 // pred_check_branch
      %123 = sbr.rel (0) target = $region45
    $region44: #{tpu_custom_call.1} parent=1 // pred_region
      %124 = dma.done [#allocation6], 4608
    $region45: #{tpu_custom_call.1} parent=1 // pred_fallthru
      _
    // Predicated region
    $region46: #{tpu_custom_call.1} parent=1 // pred_check
      _
    $region47: #{tpu_custom_call.1} parent=1 // pred_check_branch
      %126 = sbr.rel (0) target = $region49
    $region48: #{tpu_custom_call.1} parent=1 // pred_region
      %127 = dma.done [#allocation6], 128
    $region49: #{tpu_custom_call.1} parent=1 // pred_fallthru
      _
    // Predicated region
    $region50: #{tpu_custom_call.1} parent=1 // pred_check
      _
    $region51: #{tpu_custom_call.1} parent=1 // pred_check_branch
      %129 = sbr.rel (0) target = $region53
    $region52: #{tpu_custom_call.1} parent=1 // pred_region
      %130 = dma.done [#allocation9], 73728
    $region53: #{tpu_custom_call.1} parent=1 // pred_fallthru
      _
    // Predicated region
    $region54: #{tpu_custom_call.1} parent=1 // pred_check
      _
    $region55: #{tpu_custom_call.1} parent=1 // pred_check_branch
      %132 = sbr.rel (0) target = $region57
    $region56: #{tpu_custom_call.1} parent=1 // pred_region
      %133 = dma.done [#allocation9], 16
    $region57: #{tpu_custom_call.1} parent=1 // pred_fallthru
      _
    // Predicated region
    $region58: #{tpu_custom_call.1} parent=1 // pred_check
      _
    $region59: #{tpu_custom_call.1} parent=1 // pred_check_branch
      %135 = sbr.rel (0) target = $region61
    $region60: #{tpu_custom_call.1} parent=1 // pred_region
      %136 = dma.done [#allocation12], 2048
    $region61: #{tpu_custom_call.1} parent=1 // pred_fallthru
      _
    // Predicated region
    $region62: #{tpu_custom_call.1} parent=1 // pred_check
      _
    $region63: #{tpu_custom_call.1} parent=1 // pred_check_branch
      %138 = sbr.rel (0) target = $region65
    $region64: #{tpu_custom_call.1} parent=1 // pred_region
      %139 = dma.done [#allocation12], 32
    $region65: #{tpu_custom_call.1} parent=1 // pred_fallthru
      _
    // Predicated region
    $region66: #{tpu_custom_call.1} parent=1 // pred_check
      _
    $region67: #{tpu_custom_call.1} parent=1 // pred_check_branch
      %141 = sbr.rel (0) target = $region69
    $region68: #{tpu_custom_call.1} parent=1 // pred_region
      %142 = dma.done [#allocation15], 2048
    $region69: #{tpu_custom_call.1} parent=1 // pred_fallthru
      _
    // Predicated region
    $region70: #{tpu_custom_call.1} parent=1 // pred_check
      _
    $region71: #{tpu_custom_call.1} parent=1 // pred_check_branch
      %144 = sbr.rel (0) target = $region73
    $region72: #{tpu_custom_call.1} parent=1 // pred_region
      %145 = dma.done [#allocation15], 16
    $region73: #{tpu_custom_call.1} parent=1 // pred_fallthru
      _
    %v147 = vld [vmem:[#allocation2] sm:$0xff]
    %v148 = vld [vmem:[#allocation2 + $0x8] sm:$0xff]
    %v149 = vld [vmem:[#allocation2 + $0x10] sm:$0xff]
    %v150 = vld [vmem:[#allocation2 + $0x18] sm:$0xff]
    %v151 = vld [vmem:[#allocation2 + $0x20] sm:$0xff]
    %v152 = vld [vmem:[#allocation2 + $0x28] sm:$0xff]
    %v153 = vld [vmem:[#allocation2 + $0x30] sm:$0xff]
    %v154 = vld [vmem:[#allocation2 + $0x38] sm:$0xff]
    %v155 = vld [vmem:[#allocation2 + $0x40] sm:$0xff]
    %v156 = vld [vmem:[#allocation2 + $0x48] sm:$0xff]
    %v157 = vld [vmem:[#allocation2 + $0x50] sm:$0xff]
    %v158 = vld [vmem:[#allocation2 + $0x58] sm:$0xff]
    %v159 = vld [vmem:[#allocation2 + $0x60] sm:$0xff]
    %v160 = vld [vmem:[#allocation2 + $0x68] sm:$0xff]
    %v161 = vld [vmem:[#allocation2 + $0x70] sm:$0xff]
    %v162 = vld [vmem:[#allocation2 + $0x78] sm:$0xff]
    %v163 = vld [vmem:[#allocation2 + $0x80] sm:$0xff]
    %v164 = vld [vmem:[#allocation2 + $0x88] sm:$0xff]
    %v165 = vld [vmem:[#allocation2 + $0x90] sm:$0xff]
    %v166 = vld [vmem:[#allocation2 + $0x98] sm:$0xff]
    %v167 = vld [vmem:[#allocation2 + $0xa0] sm:$0xff]
    %v168 = vld [vmem:[#allocation2 + $0xa8] sm:$0xff]
    %v169 = vld [vmem:[#allocation2 + $0xb0] sm:$0xff]
    %v170 = vld [vmem:[#allocation2 + $0xb8] sm:$0xff]
    %v171 = vld [vmem:[#allocation2 + $0xc0] sm:$0xff]
    %v172 = vld [vmem:[#allocation2 + $0xc8] sm:$0xff]
    %v173 = vld [vmem:[#allocation2 + $0xd0] sm:$0xff]
    %v174 = vld [vmem:[#allocation2 + $0xd8] sm:$0xff]
    %v175 = vld [vmem:[#allocation2 + $0xe0] sm:$0xff]
    %v176 = vld [vmem:[#allocation2 + $0xe8] sm:$0xff]
    %v177 = vld [vmem:[#allocation2 + $0xf0] sm:$0xff]
    %v178 = vld [vmem:[#allocation2 + $0xf8] sm:$0xff]
    %v179 = vld [vmem:[#allocation2 + $0x100] sm:$0xff]
    %v180 = vld [vmem:[#allocation2 + $0x108] sm:$0xff]
    %v181 = vld [vmem:[#allocation2 + $0x110] sm:$0xff]
    %v182 = vld [vmem:[#allocation2 + $0x118] sm:$0xff]
    %v183 = vld [vmem:[#allocation5] sm:$0xff]
    %v184 = vld [vmem:[#allocation5 + $0x8] sm:$0xff]
    %v185 = vld [vmem:[#allocation5 + $0x10] sm:$0xff]
    %v186 = vld [vmem:[#allocation5 + $0x18] sm:$0xff]
    %v187 = vld [vmem:[#allocation5 + $0x20] sm:$0xff]
    %v188 = vld [vmem:[#allocation5 + $0x28] sm:$0xff]
    %v189 = vld [vmem:[#allocation5 + $0x30] sm:$0xff]
    %v190 = vld [vmem:[#allocation5 + $0x38] sm:$0xff]
    %v191 = vld [vmem:[#allocation5 + $0x40] sm:$0xff]
    %v192 = vld [vmem:[#allocation5 + $0x48] sm:$0xff]
    %v193 = vld [vmem:[#allocation5 + $0x50] sm:$0xff]
    %v194 = vld [vmem:[#allocation5 + $0x58] sm:$0xff]
    %v195 = vld [vmem:[#allocation5 + $0x60] sm:$0xff]
    %v196 = vld [vmem:[#allocation5 + $0x68] sm:$0xff]
    %v197 = vld [vmem:[#allocation5 + $0x70] sm:$0xff]
    %v198 = vld [vmem:[#allocation5 + $0x78] sm:$0xff]
    %v199 = vld [vmem:[#allocation5 + $0x80] sm:$0xff]
    %v200 = vld [vmem:[#allocation5 + $0x88] sm:$0xff]
    %v201 = vld [vmem:[#allocation5 + $0x90] sm:$0xff]
    %v202 = vld [vmem:[#allocation5 + $0x98] sm:$0xff]
    %v203 = vld [vmem:[#allocation5 + $0xa0] sm:$0xff]
    %v204 = vld [vmem:[#allocation5 + $0xa8] sm:$0xff]
    %v205 = vld [vmem:[#allocation5 + $0xb0] sm:$0xff]
    %v206 = vld [vmem:[#allocation5 + $0xb8] sm:$0xff]
    %v207 = vld [vmem:[#allocation5 + $0xc0] sm:$0xff]
    %v208 = vld [vmem:[#allocation5 + $0xc8] sm:$0xff]
    %v209 = vld [vmem:[#allocation5 + $0xd0] sm:$0xff]
    %v210 = vld [vmem:[#allocation5 + $0xd8] sm:$0xff]
    %v211 = vld [vmem:[#allocation5 + $0xe0] sm:$0xff]
    %v212 = vld [vmem:[#allocation5 + $0xe8] sm:$0xff]
    %v213 = vld [vmem:[#allocation5 + $0xf0] sm:$0xff]
    %v214 = vld [vmem:[#allocation5 + $0xf8] sm:$0xff]
    %v215 = vld [vmem:[#allocation5 + $0x100] sm:$0xff]
    %v216 = vld [vmem:[#allocation5 + $0x108] sm:$0xff]
    %v217 = vld [vmem:[#allocation5 + $0x110] sm:$0xff]
    %v218 = vld [vmem:[#allocation5 + $0x118] sm:$0xff]
    %v219 = vmul.bf16 %v147, %v183
    %v220 = vmul.bf16 %v148, %v184
    %v221 = vmul.bf16 %v149, %v185
    %v222 = vmul.bf16 %v150, %v186
    %v223 = vmul.bf16 %v151, %v187
    %v224 = vmul.bf16 %v152, %v188
    %v225 = vmul.bf16 %v153, %v189
    %v226 = vmul.bf16 %v154, %v190
    %v227 = vmul.bf16 %v155, %v191
    %v228 = vmul.bf16 %v156, %v192
    %v229 = vmul.bf16 %v157, %v193
    %v230 = vmul.bf16 %v158, %v194
    %v231 = vmul.bf16 %v159, %v195
    %v232 = vmul.bf16 %v160, %v196
    %v233 = vmul.bf16 %v161, %v197
    %v234 = vmul.bf16 %v162, %v198
    %v235 = vmul.bf16 %v163, %v199
    %v236 = vmul.bf16 %v164, %v200
    %v237 = vmul.bf16 %v165, %v201
    %v238 = vmul.bf16 %v166, %v202
    %v239 = vmul.bf16 %v167, %v203
    %v240 = vmul.bf16 %v168, %v204
    %v241 = vmul.bf16 %v169, %v205
    %v242 = vmul.bf16 %v170, %v206
    %v243 = vmul.bf16 %v171, %v207
    %v244 = vmul.bf16 %v172, %v208
    %v245 = vmul.bf16 %v173, %v209
    %v246 = vmul.bf16 %v174, %v210
    %v247 = vmul.bf16 %v175, %v211
    %v248 = vmul.bf16 %v176, %v212
    %v249 = vmul.bf16 %v177, %v213
    %v250 = vmul.bf16 %v178, %v214
    %v251 = vmul.bf16 %v179, %v215
    %v252 = vmul.bf16 %v180, %v216
    %v253 = vmul.bf16 %v181, %v217
    %v254 = vmul.bf16 %v182, %v218
    %v255 = vld [vmem:[#allocation8] sm:$0xf]
    %v256 = vld [vmem:[#allocation8 + $0x4] sm:$0xf]
    %v257 = vld [vmem:[#allocation8 + $0x8] sm:$0xf]
    %v258 = vld [vmem:[#allocation8 + $0xc] sm:$0xf]
    %v259 = vld [vmem:[#allocation8 + $0x10] sm:$0xf]
    %v260 = vld [vmem:[#allocation8 + $0x14] sm:$0xf]
    %v261 = vld [vmem:[#allocation8 + $0x18] sm:$0xf]
    %v262 = vld [vmem:[#allocation8 + $0x1c] sm:$0xf]
    %v263 = vld [vmem:[#allocation8 + $0x20] sm:$0xf]
    %v264 = vld [vmem:[#allocation8 + $0x24] sm:$0xf]
    %v265 = vld [vmem:[#allocation8 + $0x28] sm:$0xf]
    %v266 = vld [vmem:[#allocation8 + $0x2c] sm:$0xf]
    %v267 = vld [vmem:[#allocation8 + $0x30] sm:$0xf]
    %v268 = vld [vmem:[#allocation8 + $0x34] sm:$0xf]
    %v269 = vld [vmem:[#allocation8 + $0x38] sm:$0xf]
    %v270 = vld [vmem:[#allocation8 + $0x3c] sm:$0xf]
    %v271 = vld [vmem:[#allocation8 + $0x40] sm:$0xf]
    %v272 = vld [vmem:[#allocation8 + $0x44] sm:$0xf]
    %v273 = vld [vmem:[#allocation8 + $0x48] sm:$0xf]
    %v274 = vld [vmem:[#allocation8 + $0x4c] sm:$0xf]
    %v275 = vld [vmem:[#allocation8 + $0x50] sm:$0xf]
    %v276 = vld [vmem:[#allocation8 + $0x54] sm:$0xf]
    %v277 = vld [vmem:[#allocation8 + $0x58] sm:$0xf]
    %v278 = vld [vmem:[#allocation8 + $0x5c] sm:$0xf]
    %v279 = vld [vmem:[#allocation8 + $0x60] sm:$0xf]
    %v280 = vld [vmem:[#allocation8 + $0x64] sm:$0xf]
    %v281 = vld [vmem:[#allocation8 + $0x68] sm:$0xf]
    %v282 = vld [vmem:[#allocation8 + $0x6c] sm:$0xf]
    %v283 = vld [vmem:[#allocation8 + $0x70] sm:$0xf]
    %v284 = vld [vmem:[#allocation8 + $0x74] sm:$0xf]
    %v285 = vld [vmem:[#allocation8 + $0x78] sm:$0xf]
    %v286 = vld [vmem:[#allocation8 + $0x7c] sm:$0xf]
    %v287 = vld [vmem:[#allocation8 + $0x80] sm:$0xf]
    %v288 = vld [vmem:[#allocation8 + $0x84] sm:$0xf]
    %v289 = vld [vmem:[#allocation8 + $0x88] sm:$0xf]
    %v290 = vld [vmem:[#allocation8 + $0x8c] sm:$0xf]
    %v291 = vld [vmem:[#allocation8 + $0x90] sm:$0xf]
    %v292 = vld [vmem:[#allocation8 + $0x94] sm:$0xf]
    %v293 = vld [vmem:[#allocation8 + $0x98] sm:$0xf]
    %v294 = vld [vmem:[#allocation8 + $0x9c] sm:$0xf]
    %v295 = vld [vmem:[#allocation8 + $0xa0] sm:$0xf]
    %v296 = vld [vmem:[#allocation8 + $0xa4] sm:$0xf]
    %v297 = vld [vmem:[#allocation8 + $0xa8] sm:$0xf]
    %v298 = vld [vmem:[#allocation8 + $0xac] sm:$0xf]
    %v299 = vld [vmem:[#allocation8 + $0xb0] sm:$0xf]
    %v300 = vld [vmem:[#allocation8 + $0xb4] sm:$0xf]
    %v301 = vld [vmem:[#allocation8 + $0xb8] sm:$0xf]
    %v302 = vld [vmem:[#allocation8 + $0xbc] sm:$0xf]
    %v303 = vld [vmem:[#allocation8 + $0xc0] sm:$0xf]
    %v304 = vld [vmem:[#allocation8 + $0xc4] sm:$0xf]
    %v305 = vld [vmem:[#allocation8 + $0xc8] sm:$0xf]
    %v306 = vld [vmem:[#allocation8 + $0xcc] sm:$0xf]
    %v307 = vld [vmem:[#allocation8 + $0xd0] sm:$0xf]
    %v308 = vld [vmem:[#allocation8 + $0xd4] sm:$0xf]
    %v309 = vld [vmem:[#allocation8 + $0xd8] sm:$0xf]
    %v310 = vld [vmem:[#allocation8 + $0xdc] sm:$0xf]
    %v311 = vld [vmem:[#allocation8 + $0xe0] sm:$0xf]
    %v312 = vld [vmem:[#allocation8 + $0xe4] sm:$0xf]
    %v313 = vld [vmem:[#allocation8 + $0xe8] sm:$0xf]
    %v314 = vld [vmem:[#allocation8 + $0xec] sm:$0xf]
    %v315 = vld [vmem:[#allocation8 + $0xf0] sm:$0xf]
    %v316 = vld [vmem:[#allocation8 + $0xf4] sm:$0xf]
    %v317 = vld [vmem:[#allocation8 + $0xf8] sm:$0xf]
    %v318 = vld [vmem:[#allocation8 + $0xfc] sm:$0xf]
    %v319 = vld [vmem:[#allocation8 + $0x100] sm:$0xf]
    %v320 = vld [vmem:[#allocation8 + $0x104] sm:$0xf]
    %v321 = vld [vmem:[#allocation8 + $0x108] sm:$0xf]
    %v322 = vld [vmem:[#allocation8 + $0x10c] sm:$0xf]
    %v323 = vld [vmem:[#allocation8 + $0x110] sm:$0xf]
    %v324 = vld [vmem:[#allocation8 + $0x114] sm:$0xf]
    %v325 = vld [vmem:[#allocation8 + $0x118] sm:$0xf]
    %v326 = vld [vmem:[#allocation8 + $0x11c] sm:$0xf]
    %v327 = vld [vmem:[#allocation8 + $0x120] sm:$0xf]
    %v328 = vld [vmem:[#allocation8 + $0x124] sm:$0xf]
    %v329 = vld [vmem:[#allocation8 + $0x128] sm:$0xf]
    %v330 = vld [vmem:[#allocation8 + $0x12c] sm:$0xf]
    %v331 = vld [vmem:[#allocation8 + $0x130] sm:$0xf]
    %v332 = vld [vmem:[#allocation8 + $0x134] sm:$0xf]
    %v333 = vld [vmem:[#allocation8 + $0x138] sm:$0xf]
    %v334 = vld [vmem:[#allocation8 + $0x13c] sm:$0xf]
    %v335 = vld [vmem:[#allocation8 + $0x140] sm:$0xf]
    %v336 = vld [vmem:[#allocation8 + $0x144] sm:$0xf]
    %v337 = vld [vmem:[#allocation8 + $0x148] sm:$0xf]
    %v338 = vld [vmem:[#allocation8 + $0x14c] sm:$0xf]
    %v339 = vld [vmem:[#allocation8 + $0x150] sm:$0xf]
    %v340 = vld [vmem:[#allocation8 + $0x154] sm:$0xf]
    %v341 = vld [vmem:[#allocation8 + $0x158] sm:$0xf]
    %v342 = vld [vmem:[#allocation8 + $0x15c] sm:$0xf]
    %v343 = vld [vmem:[#allocation8 + $0x160] sm:$0xf]
    %v344 = vld [vmem:[#allocation8 + $0x164] sm:$0xf]
    %v345 = vld [vmem:[#allocation8 + $0x168] sm:$0xf]
    %v346 = vld [vmem:[#allocation8 + $0x16c] sm:$0xf]
    %v347 = vld [vmem:[#allocation8 + $0x170] sm:$0xf]
    %v348 = vld [vmem:[#allocation8 + $0x174] sm:$0xf]
    %v349 = vld [vmem:[#allocation8 + $0x178] sm:$0xf]
    %v350 = vld [vmem:[#allocation8 + $0x17c] sm:$0xf]
    %v351 = vld [vmem:[#allocation8 + $0x180] sm:$0xf]
    %v352 = vld [vmem:[#allocation8 + $0x184] sm:$0xf]
    %v353 = vld [vmem:[#allocation8 + $0x188] sm:$0xf]
    %v354 = vld [vmem:[#allocation8 + $0x18c] sm:$0xf]
    %v355 = vld [vmem:[#allocation8 + $0x190] sm:$0xf]
    %v356 = vld [vmem:[#allocation8 + $0x194] sm:$0xf]
    %v357 = vld [vmem:[#allocation8 + $0x198] sm:$0xf]
    %v358 = vld [vmem:[#allocation8 + $0x19c] sm:$0xf]
    %v359 = vld [vmem:[#allocation8 + $0x1a0] sm:$0xf]
    %v360 = vld [vmem:[#allocation8 + $0x1a4] sm:$0xf]
    %v361 = vld [vmem:[#allocation8 + $0x1a8] sm:$0xf]
    %v362 = vld [vmem:[#allocation8 + $0x1ac] sm:$0xf]
    %v363 = vld [vmem:[#allocation8 + $0x1b0] sm:$0xf]
    %v364 = vld [vmem:[#allocation8 + $0x1b4] sm:$0xf]
    %v365 = vld [vmem:[#allocation8 + $0x1b8] sm:$0xf]
    %v366 = vld [vmem:[#allocation8 + $0x1bc] sm:$0xf]
    %v367 = vld [vmem:[#allocation8 + $0x1c0] sm:$0xf]
    %v368 = vld [vmem:[#allocation8 + $0x1c4] sm:$0xf]
    %v369 = vld [vmem:[#allocation8 + $0x1c8] sm:$0xf]
    %v370 = vld [vmem:[#allocation8 + $0x1cc] sm:$0xf]
    %v371 = vld [vmem:[#allocation8 + $0x1d0] sm:$0xf]
    %v372 = vld [vmem:[#allocation8 + $0x1d4] sm:$0xf]
    %v373 = vld [vmem:[#allocation8 + $0x1d8] sm:$0xf]
    %v374 = vld [vmem:[#allocation8 + $0x1dc] sm:$0xf]
    %v375 = vld [vmem:[#allocation8 + $0x1e0] sm:$0xf]
    %v376 = vld [vmem:[#allocation8 + $0x1e4] sm:$0xf]
    %v377 = vld [vmem:[#allocation8 + $0x1e8] sm:$0xf]
    %v378 = vld [vmem:[#allocation8 + $0x1ec] sm:$0xf]
    %v379 = vld [vmem:[#allocation8 + $0x1f0] sm:$0xf]
    %v380 = vld [vmem:[#allocation8 + $0x1f4] sm:$0xf]
    %v381 = vld [vmem:[#allocation8 + $0x1f8] sm:$0xf]
    %v382 = vld [vmem:[#allocation8 + $0x1fc] sm:$0xf]
    %v383 = vld [vmem:[#allocation8 + $0x200] sm:$0xf]
    %v384 = vld [vmem:[#allocation8 + $0x204] sm:$0xf]
    %v385 = vld [vmem:[#allocation8 + $0x208] sm:$0xf]
    %v386 = vld [vmem:[#allocation8 + $0x20c] sm:$0xf]
    %v387 = vld [vmem:[#allocation8 + $0x210] sm:$0xf]
    %v388 = vld [vmem:[#allocation8 + $0x214] sm:$0xf]
    %v389 = vld [vmem:[#allocation8 + $0x218] sm:$0xf]
    %v390 = vld [vmem:[#allocation8 + $0x21c] sm:$0xf]
    %v391 = vld [vmem:[#allocation8 + $0x220] sm:$0xf]
    %v392 = vld [vmem:[#allocation8 + $0x224] sm:$0xf]
    %v393 = vld [vmem:[#allocation8 + $0x228] sm:$0xf]
    %v394 = vld [vmem:[#allocation8 + $0x22c] sm:$0xf]
    %v395 = vld [vmem:[#allocation8 + $0x230] sm:$0xf]
    %v396 = vld [vmem:[#allocation8 + $0x234] sm:$0xf]
    %v397 = vld [vmem:[#allocation8 + $0x238] sm:$0xf]
    %v398 = vld [vmem:[#allocation8 + $0x23c] sm:$0xf]
    %v399 = vld [vmem:[#allocation8 + $0x240] sm:$0xf]
    %v400 = vld [vmem:[#allocation8 + $0x244] sm:$0xf]
    %v401 = vld [vmem:[#allocation8 + $0x248] sm:$0xf]
    %v402 = vld [vmem:[#allocation8 + $0x24c] sm:$0xf]
    %v403 = vld [vmem:[#allocation8 + $0x250] sm:$0xf]
    %v404 = vld [vmem:[#allocation8 + $0x254] sm:$0xf]
    %v405 = vld [vmem:[#allocation8 + $0x258] sm:$0xf]
    %v406 = vld [vmem:[#allocation8 + $0x25c] sm:$0xf]
    %v407 = vld [vmem:[#allocation8 + $0x260] sm:$0xf]
    %v408 = vld [vmem:[#allocation8 + $0x264] sm:$0xf]
    %v409 = vld [vmem:[#allocation8 + $0x268] sm:$0xf]
    %v410 = vld [vmem:[#allocation8 + $0x26c] sm:$0xf]
    %v411 = vld [vmem:[#allocation8 + $0x270] sm:$0xf]
    %v412 = vld [vmem:[#allocation8 + $0x274] sm:$0xf]
    %v413 = vld [vmem:[#allocation8 + $0x278] sm:$0xf]
    %v414 = vld [vmem:[#allocation8 + $0x27c] sm:$0xf]
    %v415 = vld [vmem:[#allocation8 + $0x280] sm:$0xf]
    %v416 = vld [vmem:[#allocation8 + $0x284] sm:$0xf]
    %v417 = vld [vmem:[#allocation8 + $0x288] sm:$0xf]
    %v418 = vld [vmem:[#allocation8 + $0x28c] sm:$0xf]
    %v419 = vld [vmem:[#allocation8 + $0x290] sm:$0xf]
    %v420 = vld [vmem:[#allocation8 + $0x294] sm:$0xf]
    %v421 = vld [vmem:[#allocation8 + $0x298] sm:$0xf]
    %v422 = vld [vmem:[#allocation8 + $0x29c] sm:$0xf]
    %v423 = vld [vmem:[#allocation8 + $0x2a0] sm:$0xf]
    %v424 = vld [vmem:[#allocation8 + $0x2a4] sm:$0xf]
    %v425 = vld [vmem:[#allocation8 + $0x2a8] sm:$0xf]
    %v426 = vld [vmem:[#allocation8 + $0x2ac] sm:$0xf]
    %v427 = vld [vmem:[#allocation8 + $0x2b0] sm:$0xf]
    %v428 = vld [vmem:[#allocation8 + $0x2b4] sm:$0xf]
    %v429 = vld [vmem:[#allocation8 + $0x2b8] sm:$0xf]
    %v430 = vld [vmem:[#allocation8 + $0x2bc] sm:$0xf]
    %v431 = vld [vmem:[#allocation8 + $0x2c0] sm:$0xf]
    %v432 = vld [vmem:[#allocation8 + $0x2c4] sm:$0xf]
    %v433 = vld [vmem:[#allocation8 + $0x2c8] sm:$0xf]
    %v434 = vld [vmem:[#allocation8 + $0x2cc] sm:$0xf]
    %v435 = vld [vmem:[#allocation8 + $0x2d0] sm:$0xf]
    %v436 = vld [vmem:[#allocation8 + $0x2d4] sm:$0xf]
    %v437 = vld [vmem:[#allocation8 + $0x2d8] sm:$0xf]
    %v438 = vld [vmem:[#allocation8 + $0x2dc] sm:$0xf]
    %v439 = vld [vmem:[#allocation8 + $0x2e0] sm:$0xf]
    %v440 = vld [vmem:[#allocation8 + $0x2e4] sm:$0xf]
    %v441 = vld [vmem:[#allocation8 + $0x2e8] sm:$0xf]
    %v442 = vld [vmem:[#allocation8 + $0x2ec] sm:$0xf]
    %v443 = vld [vmem:[#allocation8 + $0x2f0] sm:$0xf]
    %v444 = vld [vmem:[#allocation8 + $0x2f4] sm:$0xf]
    %v445 = vld [vmem:[#allocation8 + $0x2f8] sm:$0xf]
    %v446 = vld [vmem:[#allocation8 + $0x2fc] sm:$0xf]
    %v447 = vld [vmem:[#allocation8 + $0x300] sm:$0xf]
    %v448 = vld [vmem:[#allocation8 + $0x304] sm:$0xf]
    %v449 = vld [vmem:[#allocation8 + $0x308] sm:$0xf]
    %v450 = vld [vmem:[#allocation8 + $0x30c] sm:$0xf]
    %v451 = vld [vmem:[#allocation8 + $0x310] sm:$0xf]
    %v452 = vld [vmem:[#allocation8 + $0x314] sm:$0xf]
    %v453 = vld [vmem:[#allocation8 + $0x318] sm:$0xf]
    %v454 = vld [vmem:[#allocation8 + $0x31c] sm:$0xf]
    %v455 = vld [vmem:[#allocation8 + $0x320] sm:$0xf]
    %v456 = vld [vmem:[#allocation8 + $0x324] sm:$0xf]
    %v457 = vld [vmem:[#allocation8 + $0x328] sm:$0xf]
    %v458 = vld [vmem:[#allocation8 + $0x32c] sm:$0xf]
    %v459 = vld [vmem:[#allocation8 + $0x330] sm:$0xf]
    %v460 = vld [vmem:[#allocation8 + $0x334] sm:$0xf]
    %v461 = vld [vmem:[#allocation8 + $0x338] sm:$0xf]
    %v462 = vld [vmem:[#allocation8 + $0x33c] sm:$0xf]
    %v463 = vld [vmem:[#allocation8 + $0x340] sm:$0xf]
    %v464 = vld [vmem:[#allocation8 + $0x344] sm:$0xf]
    %v465 = vld [vmem:[#allocation8 + $0x348] sm:$0xf]
    %v466 = vld [vmem:[#allocation8 + $0x34c] sm:$0xf]
    %v467 = vld [vmem:[#allocation8 + $0x350] sm:$0xf]
    %v468 = vld [vmem:[#allocation8 + $0x354] sm:$0xf]
    %v469 = vld [vmem:[#allocation8 + $0x358] sm:$0xf]
    %v470 = vld [vmem:[#allocation8 + $0x35c] sm:$0xf]
    %v471 = vld [vmem:[#allocation8 + $0x360] sm:$0xf]
    %v472 = vld [vmem:[#allocation8 + $0x364] sm:$0xf]
    %v473 = vld [vmem:[#allocation8 + $0x368] sm:$0xf]
    %v474 = vld [vmem:[#allocation8 + $0x36c] sm:$0xf]
    %v475 = vld [vmem:[#allocation8 + $0x370] sm:$0xf]
    %v476 = vld [vmem:[#allocation8 + $0x374] sm:$0xf]
    %v477 = vld [vmem:[#allocation8 + $0x378] sm:$0xf]
    %v478 = vld [vmem:[#allocation8 + $0x37c] sm:$0xf]
    %v479 = vld [vmem:[#allocation8 + $0x380] sm:$0xf]
    %v480 = vld [vmem:[#allocation8 + $0x384] sm:$0xf]
    %v481 = vld [vmem:[#allocation8 + $0x388] sm:$0xf]
    %v482 = vld [vmem:[#allocation8 + $0x38c] sm:$0xf]
    %v483 = vld [vmem:[#allocation8 + $0x390] sm:$0xf]
    %v484 = vld [vmem:[#allocation8 + $0x394] sm:$0xf]
    %v485 = vld [vmem:[#allocation8 + $0x398] sm:$0xf]
    %v486 = vld [vmem:[#allocation8 + $0x39c] sm:$0xf]
    %v487 = vld [vmem:[#allocation8 + $0x3a0] sm:$0xf]
    %v488 = vld [vmem:[#allocation8 + $0x3a4] sm:$0xf]
    %v489 = vld [vmem:[#allocation8 + $0x3a8] sm:$0xf]
    %v490 = vld [vmem:[#allocation8 + $0x3ac] sm:$0xf]
    %v491 = vld [vmem:[#allocation8 + $0x3b0] sm:$0xf]
    %v492 = vld [vmem:[#allocation8 + $0x3b4] sm:$0xf]
    %v493 = vld [vmem:[#allocation8 + $0x3b8] sm:$0xf]
    %v494 = vld [vmem:[#allocation8 + $0x3bc] sm:$0xf]
    %v495 = vld [vmem:[#allocation8 + $0x3c0] sm:$0xf]
    %v496 = vld [vmem:[#allocation8 + $0x3c4] sm:$0xf]
    %v497 = vld [vmem:[#allocation8 + $0x3c8] sm:$0xf]
    %v498 = vld [vmem:[#allocation8 + $0x3cc] sm:$0xf]
    %v499 = vld [vmem:[#allocation8 + $0x3d0] sm:$0xf]
    %v500 = vld [vmem:[#allocation8 + $0x3d4] sm:$0xf]
    %v501 = vld [vmem:[#allocation8 + $0x3d8] sm:$0xf]
    %v502 = vld [vmem:[#allocation8 + $0x3dc] sm:$0xf]
    %v503 = vld [vmem:[#allocation8 + $0x3e0] sm:$0xf]
    %v504 = vld [vmem:[#allocation8 + $0x3e4] sm:$0xf]
    %v505 = vld [vmem:[#allocation8 + $0x3e8] sm:$0xf]
    %v506 = vld [vmem:[#allocation8 + $0x3ec] sm:$0xf]
    %v507 = vld [vmem:[#allocation8 + $0x3f0] sm:$0xf]
    %v508 = vld [vmem:[#allocation8 + $0x3f4] sm:$0xf]
    %v509 = vld [vmem:[#allocation8 + $0x3f8] sm:$0xf]
    %v510 = vld [vmem:[#allocation8 + $0x3fc] sm:$0xf]
    %v511 = vld [vmem:[#allocation8 + $0x400] sm:$0xf]
    %v512 = vld [vmem:[#allocation8 + $0x404] sm:$0xf]
    %v513 = vld [vmem:[#allocation8 + $0x408] sm:$0xf]
    %v514 = vld [vmem:[#allocation8 + $0x40c] sm:$0xf]
    %v515 = vld [vmem:[#allocation8 + $0x410] sm:$0xf]
    %v516 = vld [vmem:[#allocation8 + $0x414] sm:$0xf]
    %v517 = vld [vmem:[#allocation8 + $0x418] sm:$0xf]
    %v518 = vld [vmem:[#allocation8 + $0x41c] sm:$0xf]
    %v519 = vld [vmem:[#allocation8 + $0x420] sm:$0xf]
    %v520 = vld [vmem:[#allocation8 + $0x424] sm:$0xf]
    %v521 = vld [vmem:[#allocation8 + $0x428] sm:$0xf]
    %v522 = vld [vmem:[#allocation8 + $0x42c] sm:$0xf]
    %v523 = vld [vmem:[#allocation8 + $0x430] sm:$0xf]
    %v524 = vld [vmem:[#allocation8 + $0x434] sm:$0xf]
    %v525 = vld [vmem:[#allocation8 + $0x438] sm:$0xf]
    %v526 = vld [vmem:[#allocation8 + $0x43c] sm:$0xf]
    %v527 = vld [vmem:[#allocation8 + $0x440] sm:$0xf]
    %v528 = vld [vmem:[#allocation8 + $0x444] sm:$0xf]
    %v529 = vld [vmem:[#allocation8 + $0x448] sm:$0xf]
    %v530 = vld [vmem:[#allocation8 + $0x44c] sm:$0xf]
    %v531 = vld [vmem:[#allocation8 + $0x450] sm:$0xf]
    %v532 = vld [vmem:[#allocation8 + $0x454] sm:$0xf]
    %v533 = vld [vmem:[#allocation8 + $0x458] sm:$0xf]
    %v534 = vld [vmem:[#allocation8 + $0x45c] sm:$0xf]
    %v535 = vld [vmem:[#allocation8 + $0x460] sm:$0xf]
    %v536 = vld [vmem:[#allocation8 + $0x464] sm:$0xf]
    %v537 = vld [vmem:[#allocation8 + $0x468] sm:$0xf]
    %v538 = vld [vmem:[#allocation8 + $0x46c] sm:$0xf]
    %v539 = vld [vmem:[#allocation8 + $0x470] sm:$0xf]
    %v540 = vld [vmem:[#allocation8 + $0x474] sm:$0xf]
    %v541 = vld [vmem:[#allocation8 + $0x478] sm:$0xf]
    %v542 = vld [vmem:[#allocation8 + $0x47c] sm:$0xf]
    %v543 = vld [vmem:[#allocation8 + $0x480] sm:$0xf]
    %v544 = vld [vmem:[#allocation8 + $0x484] sm:$0xf]
    %v545 = vld [vmem:[#allocation8 + $0x488] sm:$0xf]
    %v546 = vld [vmem:[#allocation8 + $0x48c] sm:$0xf]
    %v547 = vld [vmem:[#allocation8 + $0x490] sm:$0xf]
    %v548 = vld [vmem:[#allocation8 + $0x494] sm:$0xf]
    %v549 = vld [vmem:[#allocation8 + $0x498] sm:$0xf]
    %v550 = vld [vmem:[#allocation8 + $0x49c] sm:$0xf]
    %v551 = vld [vmem:[#allocation8 + $0x4a0] sm:$0xf]
    %v552 = vld [vmem:[#allocation8 + $0x4a4] sm:$0xf]
    %v553 = vld [vmem:[#allocation8 + $0x4a8] sm:$0xf]
    %v554 = vld [vmem:[#allocation8 + $0x4ac] sm:$0xf]
    %v555 = vld [vmem:[#allocation8 + $0x4b0] sm:$0xf]
    %v556 = vld [vmem:[#allocation8 + $0x4b4] sm:$0xf]
    %v557 = vld [vmem:[#allocation8 + $0x4b8] sm:$0xf]
    %v558 = vld [vmem:[#allocation8 + $0x4bc] sm:$0xf]
    %v559 = vld [vmem:[#allocation8 + $0x4c0] sm:$0xf]
    %v560 = vld [vmem:[#allocation8 + $0x4c4] sm:$0xf]
    %v561 = vld [vmem:[#allocation8 + $0x4c8] sm:$0xf]
    %v562 = vld [vmem:[#allocation8 + $0x4cc] sm:$0xf]
    %v563 = vld [vmem:[#allocation8 + $0x4d0] sm:$0xf]
    %v564 = vld [vmem:[#allocation8 + $0x4d4] sm:$0xf]
    %v565 = vld [vmem:[#allocation8 + $0x4d8] sm:$0xf]
    %v566 = vld [vmem:[#allocation8 + $0x4dc] sm:$0xf]
    %v567 = vld [vmem:[#allocation8 + $0x4e0] sm:$0xf]
    %v568 = vld [vmem:[#allocation8 + $0x4e4] sm:$0xf]
    %v569 = vld [vmem:[#allocation8 + $0x4e8] sm:$0xf]
    %v570 = vld [vmem:[#allocation8 + $0x4ec] sm:$0xf]
    %v571 = vld [vmem:[#allocation8 + $0x4f0] sm:$0xf]
    %v572 = vld [vmem:[#allocation8 + $0x4f4] sm:$0xf]
    %v573 = vld [vmem:[#allocation8 + $0x4f8] sm:$0xf]
    %v574 = vld [vmem:[#allocation8 + $0x4fc] sm:$0xf]
    %v575 = vld [vmem:[#allocation8 + $0x500] sm:$0xf]
    %v576 = vld [vmem:[#allocation8 + $0x504] sm:$0xf]
    %v577 = vld [vmem:[#allocation8 + $0x508] sm:$0xf]
    %v578 = vld [vmem:[#allocation8 + $0x50c] sm:$0xf]
    %v579 = vld [vmem:[#allocation8 + $0x510] sm:$0xf]
    %v580 = vld [vmem:[#allocation8 + $0x514] sm:$0xf]
    %v581 = vld [vmem:[#allocation8 + $0x518] sm:$0xf]
    %v582 = vld [vmem:[#allocation8 + $0x51c] sm:$0xf]
    %v583 = vld [vmem:[#allocation8 + $0x520] sm:$0xf]
    %v584 = vld [vmem:[#allocation8 + $0x524] sm:$0xf]
    %v585 = vld [vmem:[#allocation8 + $0x528] sm:$0xf]
    %v586 = vld [vmem:[#allocation8 + $0x52c] sm:$0xf]
    %v587 = vld [vmem:[#allocation8 + $0x530] sm:$0xf]
    %v588 = vld [vmem:[#allocation8 + $0x534] sm:$0xf]
    %v589 = vld [vmem:[#allocation8 + $0x538] sm:$0xf]
    %v590 = vld [vmem:[#allocation8 + $0x53c] sm:$0xf]
    %v591 = vld [vmem:[#allocation8 + $0x540] sm:$0xf]
    %v592 = vld [vmem:[#allocation8 + $0x544] sm:$0xf]
    %v593 = vld [vmem:[#allocation8 + $0x548] sm:$0xf]
    %v594 = vld [vmem:[#allocation8 + $0x54c] sm:$0xf]
    %v595 = vld [vmem:[#allocation8 + $0x550] sm:$0xf]
    %v596 = vld [vmem:[#allocation8 + $0x554] sm:$0xf]
    %v597 = vld [vmem:[#allocation8 + $0x558] sm:$0xf]
    %v598 = vld [vmem:[#allocation8 + $0x55c] sm:$0xf]
    %v599 = vld [vmem:[#allocation8 + $0x560] sm:$0xf]
    %v600 = vld [vmem:[#allocation8 + $0x564] sm:$0xf]
    %v601 = vld [vmem:[#allocation8 + $0x568] sm:$0xf]
    %v602 = vld [vmem:[#allocation8 + $0x56c] sm:$0xf]
    %v603 = vld [vmem:[#allocation8 + $0x570] sm:$0xf]
    %v604 = vld [vmem:[#allocation8 + $0x574] sm:$0xf]
    %v605 = vld [vmem:[#allocation8 + $0x578] sm:$0xf]
    %v606 = vld [vmem:[#allocation8 + $0x57c] sm:$0xf]
    %v607 = vld [vmem:[#allocation8 + $0x580] sm:$0xf]
    %v608 = vld [vmem:[#allocation8 + $0x584] sm:$0xf]
    %v609 = vld [vmem:[#allocation8 + $0x588] sm:$0xf]
    %v610 = vld [vmem:[#allocation8 + $0x58c] sm:$0xf]
    %v611 = vld [vmem:[#allocation8 + $0x590] sm:$0xf]
    %v612 = vld [vmem:[#allocation8 + $0x594] sm:$0xf]
    %v613 = vld [vmem:[#allocation8 + $0x598] sm:$0xf]
    %v614 = vld [vmem:[#allocation8 + $0x59c] sm:$0xf]
    %v615 = vld [vmem:[#allocation8 + $0x5a0] sm:$0xf]
    %v616 = vld [vmem:[#allocation8 + $0x5a4] sm:$0xf]
    %v617 = vld [vmem:[#allocation8 + $0x5a8] sm:$0xf]
    %v618 = vld [vmem:[#allocation8 + $0x5ac] sm:$0xf]
    %v619 = vld [vmem:[#allocation8 + $0x5b0] sm:$0xf]
    %v620 = vld [vmem:[#allocation8 + $0x5b4] sm:$0xf]
    %v621 = vld [vmem:[#allocation8 + $0x5b8] sm:$0xf]
    %v622 = vld [vmem:[#allocation8 + $0x5bc] sm:$0xf]
    %v623 = vld [vmem:[#allocation8 + $0x5c0] sm:$0xf]
    %v624 = vld [vmem:[#allocation8 + $0x5c4] sm:$0xf]
    %v625 = vld [vmem:[#allocation8 + $0x5c8] sm:$0xf]
    %v626 = vld [vmem:[#allocation8 + $0x5cc] sm:$0xf]
    %v627 = vld [vmem:[#allocation8 + $0x5d0] sm:$0xf]
    %v628 = vld [vmem:[#allocation8 + $0x5d4] sm:$0xf]
    %v629 = vld [vmem:[#allocation8 + $0x5d8] sm:$0xf]
    %v630 = vld [vmem:[#allocation8 + $0x5dc] sm:$0xf]
    %v631 = vld [vmem:[#allocation8 + $0x5e0] sm:$0xf]
    %v632 = vld [vmem:[#allocation8 + $0x5e4] sm:$0xf]
    %v633 = vld [vmem:[#allocation8 + $0x5e8] sm:$0xf]
    %v634 = vld [vmem:[#allocation8 + $0x5ec] sm:$0xf]
    %v635 = vld [vmem:[#allocation8 + $0x5f0] sm:$0xf]
    %v636 = vld [vmem:[#allocation8 + $0x5f4] sm:$0xf]
    %v637 = vld [vmem:[#allocation8 + $0x5f8] sm:$0xf]
    %v638 = vld [vmem:[#allocation8 + $0x5fc] sm:$0xf]
    %v639 = vld [vmem:[#allocation8 + $0x600] sm:$0xf]
    %v640 = vld [vmem:[#allocation8 + $0x604] sm:$0xf]
    %v641 = vld [vmem:[#allocation8 + $0x608] sm:$0xf]
    %v642 = vld [vmem:[#allocation8 + $0x60c] sm:$0xf]
    %v643 = vld [vmem:[#allocation8 + $0x610] sm:$0xf]
    %v644 = vld [vmem:[#allocation8 + $0x614] sm:$0xf]
    %v645 = vld [vmem:[#allocation8 + $0x618] sm:$0xf]
    %v646 = vld [vmem:[#allocation8 + $0x61c] sm:$0xf]
    %v647 = vld [vmem:[#allocation8 + $0x620] sm:$0xf]
    %v648 = vld [vmem:[#allocation8 + $0x624] sm:$0xf]
    %v649 = vld [vmem:[#allocation8 + $0x628] sm:$0xf]
    %v650 = vld [vmem:[#allocation8 + $0x62c] sm:$0xf]
    %v651 = vld [vmem:[#allocation8 + $0x630] sm:$0xf]
    %v652 = vld [vmem:[#allocation8 + $0x634] sm:$0xf]
    %v653 = vld [vmem:[#allocation8 + $0x638] sm:$0xf]
    %v654 = vld [vmem:[#allocation8 + $0x63c] sm:$0xf]
    %v655 = vld [vmem:[#allocation8 + $0x640] sm:$0xf]
    %v656 = vld [vmem:[#allocation8 + $0x644] sm:$0xf]
    %v657 = vld [vmem:[#allocation8 + $0x648] sm:$0xf]
    %v658 = vld [vmem:[#allocation8 + $0x64c] sm:$0xf]
    %v659 = vld [vmem:[#allocation8 + $0x650] sm:$0xf]
    %v660 = vld [vmem:[#allocation8 + $0x654] sm:$0xf]
    %v661 = vld [vmem:[#allocation8 + $0x658] sm:$0xf]
    %v662 = vld [vmem:[#allocation8 + $0x65c] sm:$0xf]
    %v663 = vld [vmem:[#allocation8 + $0x660] sm:$0xf]
    %v664 = vld [vmem:[#allocation8 + $0x664] sm:$0xf]
    %v665 = vld [vmem:[#allocation8 + $0x668] sm:$0xf]
    %v666 = vld [vmem:[#allocation8 + $0x66c] sm:$0xf]
    %v667 = vld [vmem:[#allocation8 + $0x670] sm:$0xf]
    %v668 = vld [vmem:[#allocation8 + $0x674] sm:$0xf]
    %v669 = vld [vmem:[#allocation8 + $0x678] sm:$0xf]
    %v670 = vld [vmem:[#allocation8 + $0x67c] sm:$0xf]
    %v671 = vld [vmem:[#allocation8 + $0x680] sm:$0xf]
    %v672 = vld [vmem:[#allocation8 + $0x684] sm:$0xf]
    %v673 = vld [vmem:[#allocation8 + $0x688] sm:$0xf]
    %v674 = vld [vmem:[#allocation8 + $0x68c] sm:$0xf]
    %v675 = vld [vmem:[#allocation8 + $0x690] sm:$0xf]
    %v676 = vld [vmem:[#allocation8 + $0x694] sm:$0xf]
    %v677 = vld [vmem:[#allocation8 + $0x698] sm:$0xf]
    %v678 = vld [vmem:[#allocation8 + $0x69c] sm:$0xf]
    %v679 = vld [vmem:[#allocation8 + $0x6a0] sm:$0xf]
    %v680 = vld [vmem:[#allocation8 + $0x6a4] sm:$0xf]
    %v681 = vld [vmem:[#allocation8 + $0x6a8] sm:$0xf]
    %v682 = vld [vmem:[#allocation8 + $0x6ac] sm:$0xf]
    %v683 = vld [vmem:[#allocation8 + $0x6b0] sm:$0xf]
    %v684 = vld [vmem:[#allocation8 + $0x6b4] sm:$0xf]
    %v685 = vld [vmem:[#allocation8 + $0x6b8] sm:$0xf]
    %v686 = vld [vmem:[#allocation8 + $0x6bc] sm:$0xf]
    %v687 = vld [vmem:[#allocation8 + $0x6c0] sm:$0xf]
    %v688 = vld [vmem:[#allocation8 + $0x6c4] sm:$0xf]
    %v689 = vld [vmem:[#allocation8 + $0x6c8] sm:$0xf]
    %v690 = vld [vmem:[#allocation8 + $0x6cc] sm:$0xf]
    %v691 = vld [vmem:[#allocation8 + $0x6d0] sm:$0xf]
    %v692 = vld [vmem:[#allocation8 + $0x6d4] sm:$0xf]
    %v693 = vld [vmem:[#allocation8 + $0x6d8] sm:$0xf]
    %v694 = vld [vmem:[#allocation8 + $0x6dc] sm:$0xf]
    %v695 = vld [vmem:[#allocation8 + $0x6e0] sm:$0xf]
    %v696 = vld [vmem:[#allocation8 + $0x6e4] sm:$0xf]
    %v697 = vld [vmem:[#allocation8 + $0x6e8] sm:$0xf]
    %v698 = vld [vmem:[#allocation8 + $0x6ec] sm:$0xf]
    %v699 = vld [vmem:[#allocation8 + $0x6f0] sm:$0xf]
    %v700 = vld [vmem:[#allocation8 + $0x6f4] sm:$0xf]
    %v701 = vld [vmem:[#allocation8 + $0x6f8] sm:$0xf]
    %v702 = vld [vmem:[#allocation8 + $0x6fc] sm:$0xf]
    %v703 = vld [vmem:[#allocation8 + $0x700] sm:$0xf]
    %v704 = vld [vmem:[#allocation8 + $0x704] sm:$0xf]
    %v705 = vld [vmem:[#allocation8 + $0x708] sm:$0xf]
    %v706 = vld [vmem:[#allocation8 + $0x70c] sm:$0xf]
    %v707 = vld [vmem:[#allocation8 + $0x710] sm:$0xf]
    %v708 = vld [vmem:[#allocation8 + $0x714] sm:$0xf]
    %v709 = vld [vmem:[#allocation8 + $0x718] sm:$0xf]
    %v710 = vld [vmem:[#allocation8 + $0x71c] sm:$0xf]
    %v711 = vld [vmem:[#allocation8 + $0x720] sm:$0xf]
    %v712 = vld [vmem:[#allocation8 + $0x724] sm:$0xf]
    %v713 = vld [vmem:[#allocation8 + $0x728] sm:$0xf]
    %v714 = vld [vmem:[#allocation8 + $0x72c] sm:$0xf]
    %v715 = vld [vmem:[#allocation8 + $0x730] sm:$0xf]
    %v716 = vld [vmem:[#allocation8 + $0x734] sm:$0xf]
    %v717 = vld [vmem:[#allocation8 + $0x738] sm:$0xf]
    %v718 = vld [vmem:[#allocation8 + $0x73c] sm:$0xf]
    %v719 = vld [vmem:[#allocation8 + $0x740] sm:$0xf]
    %v720 = vld [vmem:[#allocation8 + $0x744] sm:$0xf]
    %v721 = vld [vmem:[#allocation8 + $0x748] sm:$0xf]
    %v722 = vld [vmem:[#allocation8 + $0x74c] sm:$0xf]
    %v723 = vld [vmem:[#allocation8 + $0x750] sm:$0xf]
    %v724 = vld [vmem:[#allocation8 + $0x754] sm:$0xf]
    %v725 = vld [vmem:[#allocation8 + $0x758] sm:$0xf]
    %v726 = vld [vmem:[#allocation8 + $0x75c] sm:$0xf]
    %v727 = vld [vmem:[#allocation8 + $0x760] sm:$0xf]
    %v728 = vld [vmem:[#allocation8 + $0x764] sm:$0xf]
    %v729 = vld [vmem:[#allocation8 + $0x768] sm:$0xf]
    %v730 = vld [vmem:[#allocation8 + $0x76c] sm:$0xf]
    %v731 = vld [vmem:[#allocation8 + $0x770] sm:$0xf]
    %v732 = vld [vmem:[#allocation8 + $0x774] sm:$0xf]
    %v733 = vld [vmem:[#allocation8 + $0x778] sm:$0xf]
    %v734 = vld [vmem:[#allocation8 + $0x77c] sm:$0xf]
    %v735 = vld [vmem:[#allocation8 + $0x780] sm:$0xf]
    %v736 = vld [vmem:[#allocation8 + $0x784] sm:$0xf]
    %v737 = vld [vmem:[#allocation8 + $0x788] sm:$0xf]
    %v738 = vld [vmem:[#allocation8 + $0x78c] sm:$0xf]
    %v739 = vld [vmem:[#allocation8 + $0x790] sm:$0xf]
    %v740 = vld [vmem:[#allocation8 + $0x794] sm:$0xf]
    %v741 = vld [vmem:[#allocation8 + $0x798] sm:$0xf]
    %v742 = vld [vmem:[#allocation8 + $0x79c] sm:$0xf]
    %v743 = vld [vmem:[#allocation8 + $0x7a0] sm:$0xf]
    %v744 = vld [vmem:[#allocation8 + $0x7a4] sm:$0xf]
    %v745 = vld [vmem:[#allocation8 + $0x7a8] sm:$0xf]
    %v746 = vld [vmem:[#allocation8 + $0x7ac] sm:$0xf]
    %v747 = vld [vmem:[#allocation8 + $0x7b0] sm:$0xf]
    %v748 = vld [vmem:[#allocation8 + $0x7b4] sm:$0xf]
    %v749 = vld [vmem:[#allocation8 + $0x7b8] sm:$0xf]
    %v750 = vld [vmem:[#allocation8 + $0x7bc] sm:$0xf]
    %v751 = vld [vmem:[#allocation8 + $0x7c0] sm:$0xf]
    %v752 = vld [vmem:[#allocation8 + $0x7c4] sm:$0xf]
    %v753 = vld [vmem:[#allocation8 + $0x7c8] sm:$0xf]
    %v754 = vld [vmem:[#allocation8 + $0x7cc] sm:$0xf]
    %v755 = vld [vmem:[#allocation8 + $0x7d0] sm:$0xf]
    %v756 = vld [vmem:[#allocation8 + $0x7d4] sm:$0xf]
    %v757 = vld [vmem:[#allocation8 + $0x7d8] sm:$0xf]
    %v758 = vld [vmem:[#allocation8 + $0x7dc] sm:$0xf]
    %v759 = vld [vmem:[#allocation8 + $0x7e0] sm:$0xf]
    %v760 = vld [vmem:[#allocation8 + $0x7e4] sm:$0xf]
    %v761 = vld [vmem:[#allocation8 + $0x7e8] sm:$0xf]
    %v762 = vld [vmem:[#allocation8 + $0x7ec] sm:$0xf]
    %v763 = vld [vmem:[#allocation8 + $0x7f0] sm:$0xf]
    %v764 = vld [vmem:[#allocation8 + $0x7f4] sm:$0xf]
    %v765 = vld [vmem:[#allocation8 + $0x7f8] sm:$0xf]
    %v766 = vld [vmem:[#allocation8 + $0x7fc] sm:$0xf]
    %v767 = vld [vmem:[#allocation8 + $0x800] sm:$0xf]
    %v768 = vld [vmem:[#allocation8 + $0x804] sm:$0xf]
    %v769 = vld [vmem:[#allocation8 + $0x808] sm:$0xf]
    %v770 = vld [vmem:[#allocation8 + $0x80c] sm:$0xf]
    %v771 = vld [vmem:[#allocation8 + $0x810] sm:$0xf]
    %v772 = vld [vmem:[#allocation8 + $0x814] sm:$0xf]
    %v773 = vld [vmem:[#allocation8 + $0x818] sm:$0xf]
    %v774 = vld [vmem:[#allocation8 + $0x81c] sm:$0xf]
    %v775 = vld [vmem:[#allocation8 + $0x820] sm:$0xf]
    %v776 = vld [vmem:[#allocation8 + $0x824] sm:$0xf]
    %v777 = vld [vmem:[#allocation8 + $0x828] sm:$0xf]
    %v778 = vld [vmem:[#allocation8 + $0x82c] sm:$0xf]
    %v779 = vld [vmem:[#allocation8 + $0x830] sm:$0xf]
    %v780 = vld [vmem:[#allocation8 + $0x834] sm:$0xf]
    %v781 = vld [vmem:[#allocation8 + $0x838] sm:$0xf]
    %v782 = vld [vmem:[#allocation8 + $0x83c] sm:$0xf]
    %v783 = vld [vmem:[#allocation8 + $0x840] sm:$0xf]
    %v784 = vld [vmem:[#allocation8 + $0x844] sm:$0xf]
    %v785 = vld [vmem:[#allocation8 + $0x848] sm:$0xf]
    %v786 = vld [vmem:[#allocation8 + $0x84c] sm:$0xf]
    %v787 = vld [vmem:[#allocation8 + $0x850] sm:$0xf]
    %v788 = vld [vmem:[#allocation8 + $0x854] sm:$0xf]
    %v789 = vld [vmem:[#allocation8 + $0x858] sm:$0xf]
    %v790 = vld [vmem:[#allocation8 + $0x85c] sm:$0xf]
    %v791 = vld [vmem:[#allocation8 + $0x860] sm:$0xf]
    %v792 = vld [vmem:[#allocation8 + $0x864] sm:$0xf]
    %v793 = vld [vmem:[#allocation8 + $0x868] sm:$0xf]
    %v794 = vld [vmem:[#allocation8 + $0x86c] sm:$0xf]
    %v795 = vld [vmem:[#allocation8 + $0x870] sm:$0xf]
    %v796 = vld [vmem:[#allocation8 + $0x874] sm:$0xf]
    %v797 = vld [vmem:[#allocation8 + $0x878] sm:$0xf]
    %v798 = vld [vmem:[#allocation8 + $0x87c] sm:$0xf]
    %v799 = vld [vmem:[#allocation8 + $0x880] sm:$0xf]
    %v800 = vld [vmem:[#allocation8 + $0x884] sm:$0xf]
    %v801 = vld [vmem:[#allocation8 + $0x888] sm:$0xf]
    %v802 = vld [vmem:[#allocation8 + $0x88c] sm:$0xf]
    %v803 = vld [vmem:[#allocation8 + $0x890] sm:$0xf]
    %v804 = vld [vmem:[#allocation8 + $0x894] sm:$0xf]
    %v805 = vld [vmem:[#allocation8 + $0x898] sm:$0xf]
    %v806 = vld [vmem:[#allocation8 + $0x89c] sm:$0xf]
    %v807 = vld [vmem:[#allocation8 + $0x8a0] sm:$0xf]
    %v808 = vld [vmem:[#allocation8 + $0x8a4] sm:$0xf]
    %v809 = vld [vmem:[#allocation8 + $0x8a8] sm:$0xf]
    %v810 = vld [vmem:[#allocation8 + $0x8ac] sm:$0xf]
    %v811 = vld [vmem:[#allocation8 + $0x8b0] sm:$0xf]
    %v812 = vld [vmem:[#allocation8 + $0x8b4] sm:$0xf]
    %v813 = vld [vmem:[#allocation8 + $0x8b8] sm:$0xf]
    %v814 = vld [vmem:[#allocation8 + $0x8bc] sm:$0xf]
    %v815 = vld [vmem:[#allocation8 + $0x8c0] sm:$0xf]
    %v816 = vld [vmem:[#allocation8 + $0x8c4] sm:$0xf]
    %v817 = vld [vmem:[#allocation8 + $0x8c8] sm:$0xf]
    %v818 = vld [vmem:[#allocation8 + $0x8cc] sm:$0xf]
    %v819 = vld [vmem:[#allocation8 + $0x8d0] sm:$0xf]
    %v820 = vld [vmem:[#allocation8 + $0x8d4] sm:$0xf]
    %v821 = vld [vmem:[#allocation8 + $0x8d8] sm:$0xf]
    %v822 = vld [vmem:[#allocation8 + $0x8dc] sm:$0xf]
    %v823 = vld [vmem:[#allocation8 + $0x8e0] sm:$0xf]
    %v824 = vld [vmem:[#allocation8 + $0x8e4] sm:$0xf]
    %v825 = vld [vmem:[#allocation8 + $0x8e8] sm:$0xf]
    %v826 = vld [vmem:[#allocation8 + $0x8ec] sm:$0xf]
    %v827 = vld [vmem:[#allocation8 + $0x8f0] sm:$0xf]
    %v828 = vld [vmem:[#allocation8 + $0x8f4] sm:$0xf]
    %v829 = vld [vmem:[#allocation8 + $0x8f8] sm:$0xf]
    %v830 = vld [vmem:[#allocation8 + $0x8fc] sm:$0xf]
    %v831 = vld [vmem:[#allocation8 + $0x900] sm:$0xf]
    %v832 = vld [vmem:[#allocation8 + $0x904] sm:$0xf]
    %v833 = vld [vmem:[#allocation8 + $0x908] sm:$0xf]
    %v834 = vld [vmem:[#allocation8 + $0x90c] sm:$0xf]
    %v835 = vld [vmem:[#allocation8 + $0x910] sm:$0xf]
    %v836 = vld [vmem:[#allocation8 + $0x914] sm:$0xf]
    %v837 = vld [vmem:[#allocation8 + $0x918] sm:$0xf]
    %v838 = vld [vmem:[#allocation8 + $0x91c] sm:$0xf]
    %v839 = vld [vmem:[#allocation8 + $0x920] sm:$0xf]
    %v840 = vld [vmem:[#allocation8 + $0x924] sm:$0xf]
    %v841 = vld [vmem:[#allocation8 + $0x928] sm:$0xf]
    %v842 = vld [vmem:[#allocation8 + $0x92c] sm:$0xf]
    %v843 = vld [vmem:[#allocation8 + $0x930] sm:$0xf]
    %v844 = vld [vmem:[#allocation8 + $0x934] sm:$0xf]
    %v845 = vld [vmem:[#allocation8 + $0x938] sm:$0xf]
    %v846 = vld [vmem:[#allocation8 + $0x93c] sm:$0xf]
    %v847 = vld [vmem:[#allocation8 + $0x940] sm:$0xf]
    %v848 = vld [vmem:[#allocation8 + $0x944] sm:$0xf]
    %v849 = vld [vmem:[#allocation8 + $0x948] sm:$0xf]
    %v850 = vld [vmem:[#allocation8 + $0x94c] sm:$0xf]
    %v851 = vld [vmem:[#allocation8 + $0x950] sm:$0xf]
    %v852 = vld [vmem:[#allocation8 + $0x954] sm:$0xf]
    %v853 = vld [vmem:[#allocation8 + $0x958] sm:$0xf]
    %v854 = vld [vmem:[#allocation8 + $0x95c] sm:$0xf]
    %v855 = vld [vmem:[#allocation8 + $0x960] sm:$0xf]
    %v856 = vld [vmem:[#allocation8 + $0x964] sm:$0xf]
    %v857 = vld [vmem:[#allocation8 + $0x968] sm:$0xf]
    %v858 = vld [vmem:[#allocation8 + $0x96c] sm:$0xf]
    %v859 = vld [vmem:[#allocation8 + $0x970] sm:$0xf]
    %v860 = vld [vmem:[#allocation8 + $0x974] sm:$0xf]
    %v861 = vld [vmem:[#allocation8 + $0x978] sm:$0xf]
    %v862 = vld [vmem:[#allocation8 + $0x97c] sm:$0xf]
    %v863 = vld [vmem:[#allocation8 + $0x980] sm:$0xf]
    %v864 = vld [vmem:[#allocation8 + $0x984] sm:$0xf]
    %v865 = vld [vmem:[#allocation8 + $0x988] sm:$0xf]
    %v866 = vld [vmem:[#allocation8 + $0x98c] sm:$0xf]
    %v867 = vld [vmem:[#allocation8 + $0x990] sm:$0xf]
    %v868 = vld [vmem:[#allocation8 + $0x994] sm:$0xf]
    %v869 = vld [vmem:[#allocation8 + $0x998] sm:$0xf]
    %v870 = vld [vmem:[#allocation8 + $0x99c] sm:$0xf]
    %v871 = vld [vmem:[#allocation8 + $0x9a0] sm:$0xf]
    %v872 = vld [vmem:[#allocation8 + $0x9a4] sm:$0xf]
    %v873 = vld [vmem:[#allocation8 + $0x9a8] sm:$0xf]
    %v874 = vld [vmem:[#allocation8 + $0x9ac] sm:$0xf]
    %v875 = vld [vmem:[#allocation8 + $0x9b0] sm:$0xf]
    %v876 = vld [vmem:[#allocation8 + $0x9b4] sm:$0xf]
    %v877 = vld [vmem:[#allocation8 + $0x9b8] sm:$0xf]
    %v878 = vld [vmem:[#allocation8 + $0x9bc] sm:$0xf]
    %v879 = vld [vmem:[#allocation8 + $0x9c0] sm:$0xf]
    %v880 = vld [vmem:[#allocation8 + $0x9c4] sm:$0xf]
    %v881 = vld [vmem:[#allocation8 + $0x9c8] sm:$0xf]
    %v882 = vld [vmem:[#allocation8 + $0x9cc] sm:$0xf]
    %v883 = vld [vmem:[#allocation8 + $0x9d0] sm:$0xf]
    %v884 = vld [vmem:[#allocation8 + $0x9d4] sm:$0xf]
    %v885 = vld [vmem:[#allocation8 + $0x9d8] sm:$0xf]
    %v886 = vld [vmem:[#allocation8 + $0x9dc] sm:$0xf]
    %v887 = vld [vmem:[#allocation8 + $0x9e0] sm:$0xf]
    %v888 = vld [vmem:[#allocation8 + $0x9e4] sm:$0xf]
    %v889 = vld [vmem:[#allocation8 + $0x9e8] sm:$0xf]
    %v890 = vld [vmem:[#allocation8 + $0x9ec] sm:$0xf]
    %v891 = vld [vmem:[#allocation8 + $0x9f0] sm:$0xf]
    %v892 = vld [vmem:[#allocation8 + $0x9f4] sm:$0xf]
    %v893 = vld [vmem:[#allocation8 + $0x9f8] sm:$0xf]
    %v894 = vld [vmem:[#allocation8 + $0x9fc] sm:$0xf]
    %v895 = vld [vmem:[#allocation8 + $0xa00] sm:$0xf]
    %v896 = vld [vmem:[#allocation8 + $0xa04] sm:$0xf]
    %v897 = vld [vmem:[#allocation8 + $0xa08] sm:$0xf]
    %v898 = vld [vmem:[#allocation8 + $0xa0c] sm:$0xf]
    %v899 = vld [vmem:[#allocation8 + $0xa10] sm:$0xf]
    %v900 = vld [vmem:[#allocation8 + $0xa14] sm:$0xf]
    %v901 = vld [vmem:[#allocation8 + $0xa18] sm:$0xf]
    %v902 = vld [vmem:[#allocation8 + $0xa1c] sm:$0xf]
    %v903 = vld [vmem:[#allocation8 + $0xa20] sm:$0xf]
    %v904 = vld [vmem:[#allocation8 + $0xa24] sm:$0xf]
    %v905 = vld [vmem:[#allocation8 + $0xa28] sm:$0xf]
    %v906 = vld [vmem:[#allocation8 + $0xa2c] sm:$0xf]
    %v907 = vld [vmem:[#allocation8 + $0xa30] sm:$0xf]
    %v908 = vld [vmem:[#allocation8 + $0xa34] sm:$0xf]
    %v909 = vld [vmem:[#allocation8 + $0xa38] sm:$0xf]
    %v910 = vld [vmem:[#allocation8 + $0xa3c] sm:$0xf]
    %v911 = vld [vmem:[#allocation8 + $0xa40] sm:$0xf]
    %v912 = vld [vmem:[#allocation8 + $0xa44] sm:$0xf]
    %v913 = vld [vmem:[#allocation8 + $0xa48] sm:$0xf]
    %v914 = vld [vmem:[#allocation8 + $0xa4c] sm:$0xf]
    %v915 = vld [vmem:[#allocation8 + $0xa50] sm:$0xf]
    %v916 = vld [vmem:[#allocation8 + $0xa54] sm:$0xf]
    %v917 = vld [vmem:[#allocation8 + $0xa58] sm:$0xf]
    %v918 = vld [vmem:[#allocation8 + $0xa5c] sm:$0xf]
    %v919 = vld [vmem:[#allocation8 + $0xa60] sm:$0xf]
    %v920 = vld [vmem:[#allocation8 + $0xa64] sm:$0xf]
    %v921 = vld [vmem:[#allocation8 + $0xa68] sm:$0xf]
    %v922 = vld [vmem:[#allocation8 + $0xa6c] sm:$0xf]
    %v923 = vld [vmem:[#allocation8 + $0xa70] sm:$0xf]
    %v924 = vld [vmem:[#allocation8 + $0xa74] sm:$0xf]
    %v925 = vld [vmem:[#allocation8 + $0xa78] sm:$0xf]
    %v926 = vld [vmem:[#allocation8 + $0xa7c] sm:$0xf]
    %v927 = vld [vmem:[#allocation8 + $0xa80] sm:$0xf]
    %v928 = vld [vmem:[#allocation8 + $0xa84] sm:$0xf]
    %v929 = vld [vmem:[#allocation8 + $0xa88] sm:$0xf]
    %v930 = vld [vmem:[#allocation8 + $0xa8c] sm:$0xf]
    %v931 = vld [vmem:[#allocation8 + $0xa90] sm:$0xf]
    %v932 = vld [vmem:[#allocation8 + $0xa94] sm:$0xf]
    %v933 = vld [vmem:[#allocation8 + $0xa98] sm:$0xf]
    %v934 = vld [vmem:[#allocation8 + $0xa9c] sm:$0xf]
    %v935 = vld [vmem:[#allocation8 + $0xaa0] sm:$0xf]
    %v936 = vld [vmem:[#allocation8 + $0xaa4] sm:$0xf]
    %v937 = vld [vmem:[#allocation8 + $0xaa8] sm:$0xf]
    %v938 = vld [vmem:[#allocation8 + $0xaac] sm:$0xf]
    %v939 = vld [vmem:[#allocation8 + $0xab0] sm:$0xf]
    %v940 = vld [vmem:[#allocation8 + $0xab4] sm:$0xf]
    %v941 = vld [vmem:[#allocation8 + $0xab8] sm:$0xf]
    %v942 = vld [vmem:[#allocation8 + $0xabc] sm:$0xf]
    %v943 = vld [vmem:[#allocation8 + $0xac0] sm:$0xf]
    %v944 = vld [vmem:[#allocation8 + $0xac4] sm:$0xf]
    %v945 = vld [vmem:[#allocation8 + $0xac8] sm:$0xf]
    %v946 = vld [vmem:[#allocation8 + $0xacc] sm:$0xf]
    %v947 = vld [vmem:[#allocation8 + $0xad0] sm:$0xf]
    %v948 = vld [vmem:[#allocation8 + $0xad4] sm:$0xf]
    %v949 = vld [vmem:[#allocation8 + $0xad8] sm:$0xf]
    %v950 = vld [vmem:[#allocation8 + $0xadc] sm:$0xf]
    %v951 = vld [vmem:[#allocation8 + $0xae0] sm:$0xf]
    %v952 = vld [vmem:[#allocation8 + $0xae4] sm:$0xf]
    %v953 = vld [vmem:[#allocation8 + $0xae8] sm:$0xf]
    %v954 = vld [vmem:[#allocation8 + $0xaec] sm:$0xf]
    %v955 = vld [vmem:[#allocation8 + $0xaf0] sm:$0xf]
    %v956 = vld [vmem:[#allocation8 + $0xaf4] sm:$0xf]
    %v957 = vld [vmem:[#allocation8 + $0xaf8] sm:$0xf]
    %v958 = vld [vmem:[#allocation8 + $0xafc] sm:$0xf]
    %v959 = vld [vmem:[#allocation8 + $0xb00] sm:$0xf]
    %v960 = vld [vmem:[#allocation8 + $0xb04] sm:$0xf]
    %v961 = vld [vmem:[#allocation8 + $0xb08] sm:$0xf]
    %v962 = vld [vmem:[#allocation8 + $0xb0c] sm:$0xf]
    %v963 = vld [vmem:[#allocation8 + $0xb10] sm:$0xf]
    %v964 = vld [vmem:[#allocation8 + $0xb14] sm:$0xf]
    %v965 = vld [vmem:[#allocation8 + $0xb18] sm:$0xf]
    %v966 = vld [vmem:[#allocation8 + $0xb1c] sm:$0xf]
    %v967 = vld [vmem:[#allocation8 + $0xb20] sm:$0xf]
    %v968 = vld [vmem:[#allocation8 + $0xb24] sm:$0xf]
    %v969 = vld [vmem:[#allocation8 + $0xb28] sm:$0xf]
    %v970 = vld [vmem:[#allocation8 + $0xb2c] sm:$0xf]
    %v971 = vld [vmem:[#allocation8 + $0xb30] sm:$0xf]
    %v972 = vld [vmem:[#allocation8 + $0xb34] sm:$0xf]
    %v973 = vld [vmem:[#allocation8 + $0xb38] sm:$0xf]
    %v974 = vld [vmem:[#allocation8 + $0xb3c] sm:$0xf]
    %v975 = vld [vmem:[#allocation8 + $0xb40] sm:$0xf]
    %v976 = vld [vmem:[#allocation8 + $0xb44] sm:$0xf]
    %v977 = vld [vmem:[#allocation8 + $0xb48] sm:$0xf]
    %v978 = vld [vmem:[#allocation8 + $0xb4c] sm:$0xf]
    %v979 = vld [vmem:[#allocation8 + $0xb50] sm:$0xf]
    %v980 = vld [vmem:[#allocation8 + $0xb54] sm:$0xf]
    %v981 = vld [vmem:[#allocation8 + $0xb58] sm:$0xf]
    %v982 = vld [vmem:[#allocation8 + $0xb5c] sm:$0xf]
    %v983 = vld [vmem:[#allocation8 + $0xb60] sm:$0xf]
    %v984 = vld [vmem:[#allocation8 + $0xb64] sm:$0xf]
    %v985 = vld [vmem:[#allocation8 + $0xb68] sm:$0xf]
    %v986 = vld [vmem:[#allocation8 + $0xb6c] sm:$0xf]
    %v987 = vld [vmem:[#allocation8 + $0xb70] sm:$0xf]
    %v988 = vld [vmem:[#allocation8 + $0xb74] sm:$0xf]
    %v989 = vld [vmem:[#allocation8 + $0xb78] sm:$0xf]
    %v990 = vld [vmem:[#allocation8 + $0xb7c] sm:$0xf]
    %v991 = vld [vmem:[#allocation8 + $0xb80] sm:$0xf]
    %v992 = vld [vmem:[#allocation8 + $0xb84] sm:$0xf]
    %v993 = vld [vmem:[#allocation8 + $0xb88] sm:$0xf]
    %v994 = vld [vmem:[#allocation8 + $0xb8c] sm:$0xf]
    %v995 = vld [vmem:[#allocation8 + $0xb90] sm:$0xf]
    %v996 = vld [vmem:[#allocation8 + $0xb94] sm:$0xf]
    %v997 = vld [vmem:[#allocation8 + $0xb98] sm:$0xf]
    %v998 = vld [vmem:[#allocation8 + $0xb9c] sm:$0xf]
    %v999 = vld [vmem:[#allocation8 + $0xba0] sm:$0xf]
    %v1000 = vld [vmem:[#allocation8 + $0xba4] sm:$0xf]
    %v1001 = vld [vmem:[#allocation8 + $0xba8] sm:$0xf]
    %v1002 = vld [vmem:[#allocation8 + $0xbac] sm:$0xf]
    %v1003 = vld [vmem:[#allocation8 + $0xbb0] sm:$0xf]
    %v1004 = vld [vmem:[#allocation8 + $0xbb4] sm:$0xf]
    %v1005 = vld [vmem:[#allocation8 + $0xbb8] sm:$0xf]
    %v1006 = vld [vmem:[#allocation8 + $0xbbc] sm:$0xf]
    %v1007 = vld [vmem:[#allocation8 + $0xbc0] sm:$0xf]
    %v1008 = vld [vmem:[#allocation8 + $0xbc4] sm:$0xf]
    %v1009 = vld [vmem:[#allocation8 + $0xbc8] sm:$0xf]
    %v1010 = vld [vmem:[#allocation8 + $0xbcc] sm:$0xf]
    %v1011 = vld [vmem:[#allocation8 + $0xbd0] sm:$0xf]
    %v1012 = vld [vmem:[#allocation8 + $0xbd4] sm:$0xf]
    %v1013 = vld [vmem:[#allocation8 + $0xbd8] sm:$0xf]
    %v1014 = vld [vmem:[#allocation8 + $0xbdc] sm:$0xf]
    %v1015 = vld [vmem:[#allocation8 + $0xbe0] sm:$0xf]
    %v1016 = vld [vmem:[#allocation8 + $0xbe4] sm:$0xf]
    %v1017 = vld [vmem:[#allocation8 + $0xbe8] sm:$0xf]
    %v1018 = vld [vmem:[#allocation8 + $0xbec] sm:$0xf]
    %v1019 = vld [vmem:[#allocation8 + $0xbf0] sm:$0xf]
    %v1020 = vld [vmem:[#allocation8 + $0xbf4] sm:$0xf]
    %v1021 = vld [vmem:[#allocation8 + $0xbf8] sm:$0xf]
    %v1022 = vld [vmem:[#allocation8 + $0xbfc] sm:$0xf]
    %v1023 = vld [vmem:[#allocation8 + $0xc00] sm:$0xf]
    %v1024 = vld [vmem:[#allocation8 + $0xc04] sm:$0xf]
    %v1025 = vld [vmem:[#allocation8 + $0xc08] sm:$0xf]
    %v1026 = vld [vmem:[#allocation8 + $0xc0c] sm:$0xf]
    %v1027 = vld [vmem:[#allocation8 + $0xc10] sm:$0xf]
    %v1028 = vld [vmem:[#allocation8 + $0xc14] sm:$0xf]
    %v1029 = vld [vmem:[#allocation8 + $0xc18] sm:$0xf]
    %v1030 = vld [vmem:[#allocation8 + $0xc1c] sm:$0xf]
    %v1031 = vld [vmem:[#allocation8 + $0xc20] sm:$0xf]
    %v1032 = vld [vmem:[#allocation8 + $0xc24] sm:$0xf]
    %v1033 = vld [vmem:[#allocation8 + $0xc28] sm:$0xf]
    %v1034 = vld [vmem:[#allocation8 + $0xc2c] sm:$0xf]
    %v1035 = vld [vmem:[#allocation8 + $0xc30] sm:$0xf]
    %v1036 = vld [vmem:[#allocation8 + $0xc34] sm:$0xf]
    %v1037 = vld [vmem:[#allocation8 + $0xc38] sm:$0xf]
    %v1038 = vld [vmem:[#allocation8 + $0xc3c] sm:$0xf]
    %v1039 = vld [vmem:[#allocation8 + $0xc40] sm:$0xf]
    %v1040 = vld [vmem:[#allocation8 + $0xc44] sm:$0xf]
    %v1041 = vld [vmem:[#allocation8 + $0xc48] sm:$0xf]
    %v1042 = vld [vmem:[#allocation8 + $0xc4c] sm:$0xf]
    %v1043 = vld [vmem:[#allocation8 + $0xc50] sm:$0xf]
    %v1044 = vld [vmem:[#allocation8 + $0xc54] sm:$0xf]
    %v1045 = vld [vmem:[#allocation8 + $0xc58] sm:$0xf]
    %v1046 = vld [vmem:[#allocation8 + $0xc5c] sm:$0xf]
    %v1047 = vld [vmem:[#allocation8 + $0xc60] sm:$0xf]
    %v1048 = vld [vmem:[#allocation8 + $0xc64] sm:$0xf]
    %v1049 = vld [vmem:[#allocation8 + $0xc68] sm:$0xf]
    %v1050 = vld [vmem:[#allocation8 + $0xc6c] sm:$0xf]
    %v1051 = vld [vmem:[#allocation8 + $0xc70] sm:$0xf]
    %v1052 = vld [vmem:[#allocation8 + $0xc74] sm:$0xf]
    %v1053 = vld [vmem:[#allocation8 + $0xc78] sm:$0xf]
    %v1054 = vld [vmem:[#allocation8 + $0xc7c] sm:$0xf]
    %v1055 = vld [vmem:[#allocation8 + $0xc80] sm:$0xf]
    %v1056 = vld [vmem:[#allocation8 + $0xc84] sm:$0xf]
    %v1057 = vld [vmem:[#allocation8 + $0xc88] sm:$0xf]
    %v1058 = vld [vmem:[#allocation8 + $0xc8c] sm:$0xf]
    %v1059 = vld [vmem:[#allocation8 + $0xc90] sm:$0xf]
    %v1060 = vld [vmem:[#allocation8 + $0xc94] sm:$0xf]
    %v1061 = vld [vmem:[#allocation8 + $0xc98] sm:$0xf]
    %v1062 = vld [vmem:[#allocation8 + $0xc9c] sm:$0xf]
    %v1063 = vld [vmem:[#allocation8 + $0xca0] sm:$0xf]
    %v1064 = vld [vmem:[#allocation8 + $0xca4] sm:$0xf]
    %v1065 = vld [vmem:[#allocation8 + $0xca8] sm:$0xf]
    %v1066 = vld [vmem:[#allocation8 + $0xcac] sm:$0xf]
    %v1067 = vld [vmem:[#allocation8 + $0xcb0] sm:$0xf]
    %v1068 = vld [vmem:[#allocation8 + $0xcb4] sm:$0xf]
    %v1069 = vld [vmem:[#allocation8 + $0xcb8] sm:$0xf]
    %v1070 = vld [vmem:[#allocation8 + $0xcbc] sm:$0xf]
    %v1071 = vld [vmem:[#allocation8 + $0xcc0] sm:$0xf]
    %v1072 = vld [vmem:[#allocation8 + $0xcc4] sm:$0xf]
    %v1073 = vld [vmem:[#allocation8 + $0xcc8] sm:$0xf]
    %v1074 = vld [vmem:[#allocation8 + $0xccc] sm:$0xf]
    %v1075 = vld [vmem:[#allocation8 + $0xcd0] sm:$0xf]
    %v1076 = vld [vmem:[#allocation8 + $0xcd4] sm:$0xf]
    %v1077 = vld [vmem:[#allocation8 + $0xcd8] sm:$0xf]
    %v1078 = vld [vmem:[#allocation8 + $0xcdc] sm:$0xf]
    %v1079 = vld [vmem:[#allocation8 + $0xce0] sm:$0xf]
    %v1080 = vld [vmem:[#allocation8 + $0xce4] sm:$0xf]
    %v1081 = vld [vmem:[#allocation8 + $0xce8] sm:$0xf]
    %v1082 = vld [vmem:[#allocation8 + $0xcec] sm:$0xf]
    %v1083 = vld [vmem:[#allocation8 + $0xcf0] sm:$0xf]
    %v1084 = vld [vmem:[#allocation8 + $0xcf4] sm:$0xf]
    %v1085 = vld [vmem:[#allocation8 + $0xcf8] sm:$0xf]
    %v1086 = vld [vmem:[#allocation8 + $0xcfc] sm:$0xf]
    %v1087 = vld [vmem:[#allocation8 + $0xd00] sm:$0xf]
    %v1088 = vld [vmem:[#allocation8 + $0xd04] sm:$0xf]
    %v1089 = vld [vmem:[#allocation8 + $0xd08] sm:$0xf]
    %v1090 = vld [vmem:[#allocation8 + $0xd0c] sm:$0xf]
    %v1091 = vld [vmem:[#allocation8 + $0xd10] sm:$0xf]
    %v1092 = vld [vmem:[#allocation8 + $0xd14] sm:$0xf]
    %v1093 = vld [vmem:[#allocation8 + $0xd18] sm:$0xf]
    %v1094 = vld [vmem:[#allocation8 + $0xd1c] sm:$0xf]
    %v1095 = vld [vmem:[#allocation8 + $0xd20] sm:$0xf]
    %v1096 = vld [vmem:[#allocation8 + $0xd24] sm:$0xf]
    %v1097 = vld [vmem:[#allocation8 + $0xd28] sm:$0xf]
    %v1098 = vld [vmem:[#allocation8 + $0xd2c] sm:$0xf]
    %v1099 = vld [vmem:[#allocation8 + $0xd30] sm:$0xf]
    %v1100 = vld [vmem:[#allocation8 + $0xd34] sm:$0xf]
    %v1101 = vld [vmem:[#allocation8 + $0xd38] sm:$0xf]
    %v1102 = vld [vmem:[#allocation8 + $0xd3c] sm:$0xf]
    %v1103 = vld [vmem:[#allocation8 + $0xd40] sm:$0xf]
    %v1104 = vld [vmem:[#allocation8 + $0xd44] sm:$0xf]
    %v1105 = vld [vmem:[#allocation8 + $0xd48] sm:$0xf]
    %v1106 = vld [vmem:[#allocation8 + $0xd4c] sm:$0xf]
    %v1107 = vld [vmem:[#allocation8 + $0xd50] sm:$0xf]
    %v1108 = vld [vmem:[#allocation8 + $0xd54] sm:$0xf]
    %v1109 = vld [vmem:[#allocation8 + $0xd58] sm:$0xf]
    %v1110 = vld [vmem:[#allocation8 + $0xd5c] sm:$0xf]
    %v1111 = vld [vmem:[#allocation8 + $0xd60] sm:$0xf]
    %v1112 = vld [vmem:[#allocation8 + $0xd64] sm:$0xf]
    %v1113 = vld [vmem:[#allocation8 + $0xd68] sm:$0xf]
    %v1114 = vld [vmem:[#allocation8 + $0xd6c] sm:$0xf]
    %v1115 = vld [vmem:[#allocation8 + $0xd70] sm:$0xf]
    %v1116 = vld [vmem:[#allocation8 + $0xd74] sm:$0xf]
    %v1117 = vld [vmem:[#allocation8 + $0xd78] sm:$0xf]
    %v1118 = vld [vmem:[#allocation8 + $0xd7c] sm:$0xf]
    %v1119 = vld [vmem:[#allocation8 + $0xd80] sm:$0xf]
    %v1120 = vld [vmem:[#allocation8 + $0xd84] sm:$0xf]
    %v1121 = vld [vmem:[#allocation8 + $0xd88] sm:$0xf]
    %v1122 = vld [vmem:[#allocation8 + $0xd8c] sm:$0xf]
    %v1123 = vld [vmem:[#allocation8 + $0xd90] sm:$0xf]
    %v1124 = vld [vmem:[#allocation8 + $0xd94] sm:$0xf]
    %v1125 = vld [vmem:[#allocation8 + $0xd98] sm:$0xf]
    %v1126 = vld [vmem:[#allocation8 + $0xd9c] sm:$0xf]
    %v1127 = vld [vmem:[#allocation8 + $0xda0] sm:$0xf]
    %v1128 = vld [vmem:[#allocation8 + $0xda4] sm:$0xf]
    %v1129 = vld [vmem:[#allocation8 + $0xda8] sm:$0xf]
    %v1130 = vld [vmem:[#allocation8 + $0xdac] sm:$0xf]
    %v1131 = vld [vmem:[#allocation8 + $0xdb0] sm:$0xf]
    %v1132 = vld [vmem:[#allocation8 + $0xdb4] sm:$0xf]
    %v1133 = vld [vmem:[#allocation8 + $0xdb8] sm:$0xf]
    %v1134 = vld [vmem:[#allocation8 + $0xdbc] sm:$0xf]
    %v1135 = vld [vmem:[#allocation8 + $0xdc0] sm:$0xf]
    %v1136 = vld [vmem:[#allocation8 + $0xdc4] sm:$0xf]
    %v1137 = vld [vmem:[#allocation8 + $0xdc8] sm:$0xf]
    %v1138 = vld [vmem:[#allocation8 + $0xdcc] sm:$0xf]
    %v1139 = vld [vmem:[#allocation8 + $0xdd0] sm:$0xf]
    %v1140 = vld [vmem:[#allocation8 + $0xdd4] sm:$0xf]
    %v1141 = vld [vmem:[#allocation8 + $0xdd8] sm:$0xf]
    %v1142 = vld [vmem:[#allocation8 + $0xddc] sm:$0xf]
    %v1143 = vld [vmem:[#allocation8 + $0xde0] sm:$0xf]
    %v1144 = vld [vmem:[#allocation8 + $0xde4] sm:$0xf]
    %v1145 = vld [vmem:[#allocation8 + $0xde8] sm:$0xf]
    %v1146 = vld [vmem:[#allocation8 + $0xdec] sm:$0xf]
    %v1147 = vld [vmem:[#allocation8 + $0xdf0] sm:$0xf]
    %v1148 = vld [vmem:[#allocation8 + $0xdf4] sm:$0xf]
    %v1149 = vld [vmem:[#allocation8 + $0xdf8] sm:$0xf]
    %v1150 = vld [vmem:[#allocation8 + $0xdfc] sm:$0xf]
    %v1151 = vld [vmem:[#allocation8 + $0xe00] sm:$0xf]
    %v1152 = vld [vmem:[#allocation8 + $0xe04] sm:$0xf]
    %v1153 = vld [vmem:[#allocation8 + $0xe08] sm:$0xf]
    %v1154 = vld [vmem:[#allocation8 + $0xe0c] sm:$0xf]
    %v1155 = vld [vmem:[#allocation8 + $0xe10] sm:$0xf]
    %v1156 = vld [vmem:[#allocation8 + $0xe14] sm:$0xf]
    %v1157 = vld [vmem:[#allocation8 + $0xe18] sm:$0xf]
    %v1158 = vld [vmem:[#allocation8 + $0xe1c] sm:$0xf]
    %v1159 = vld [vmem:[#allocation8 + $0xe20] sm:$0xf]
    %v1160 = vld [vmem:[#allocation8 + $0xe24] sm:$0xf]
    %v1161 = vld [vmem:[#allocation8 + $0xe28] sm:$0xf]
    %v1162 = vld [vmem:[#allocation8 + $0xe2c] sm:$0xf]
    %v1163 = vld [vmem:[#allocation8 + $0xe30] sm:$0xf]
    %v1164 = vld [vmem:[#allocation8 + $0xe34] sm:$0xf]
    %v1165 = vld [vmem:[#allocation8 + $0xe38] sm:$0xf]
    %v1166 = vld [vmem:[#allocation8 + $0xe3c] sm:$0xf]
    %v1167 = vld [vmem:[#allocation8 + $0xe40] sm:$0xf]
    %v1168 = vld [vmem:[#allocation8 + $0xe44] sm:$0xf]
    %v1169 = vld [vmem:[#allocation8 + $0xe48] sm:$0xf]
    %v1170 = vld [vmem:[#allocation8 + $0xe4c] sm:$0xf]
    %v1171 = vld [vmem:[#allocation8 + $0xe50] sm:$0xf]
    %v1172 = vld [vmem:[#allocation8 + $0xe54] sm:$0xf]
    %v1173 = vld [vmem:[#allocation8 + $0xe58] sm:$0xf]
    %v1174 = vld [vmem:[#allocation8 + $0xe5c] sm:$0xf]
    %v1175 = vld [vmem:[#allocation8 + $0xe60] sm:$0xf]
    %v1176 = vld [vmem:[#allocation8 + $0xe64] sm:$0xf]
    %v1177 = vld [vmem:[#allocation8 + $0xe68] sm:$0xf]
    %v1178 = vld [vmem:[#allocation8 + $0xe6c] sm:$0xf]
    %v1179 = vld [vmem:[#allocation8 + $0xe70] sm:$0xf]
    %v1180 = vld [vmem:[#allocation8 + $0xe74] sm:$0xf]
    %v1181 = vld [vmem:[#allocation8 + $0xe78] sm:$0xf]
    %v1182 = vld [vmem:[#allocation8 + $0xe7c] sm:$0xf]
    %v1183 = vld [vmem:[#allocation8 + $0xe80] sm:$0xf]
    %v1184 = vld [vmem:[#allocation8 + $0xe84] sm:$0xf]
    %v1185 = vld [vmem:[#allocation8 + $0xe88] sm:$0xf]
    %v1186 = vld [vmem:[#allocation8 + $0xe8c] sm:$0xf]
    %v1187 = vld [vmem:[#allocation8 + $0xe90] sm:$0xf]
    %v1188 = vld [vmem:[#allocation8 + $0xe94] sm:$0xf]
    %v1189 = vld [vmem:[#allocation8 + $0xe98] sm:$0xf]
    %v1190 = vld [vmem:[#allocation8 + $0xe9c] sm:$0xf]
    %v1191 = vld [vmem:[#allocation8 + $0xea0] sm:$0xf]
    %v1192 = vld [vmem:[#allocation8 + $0xea4] sm:$0xf]
    %v1193 = vld [vmem:[#allocation8 + $0xea8] sm:$0xf]
    %v1194 = vld [vmem:[#allocation8 + $0xeac] sm:$0xf]
    %v1195 = vld [vmem:[#allocation8 + $0xeb0] sm:$0xf]
    %v1196 = vld [vmem:[#allocation8 + $0xeb4] sm:$0xf]
    %v1197 = vld [vmem:[#allocation8 + $0xeb8] sm:$0xf]
    %v1198 = vld [vmem:[#allocation8 + $0xebc] sm:$0xf]
    %v1199 = vld [vmem:[#allocation8 + $0xec0] sm:$0xf]
    %v1200 = vld [vmem:[#allocation8 + $0xec4] sm:$0xf]
    %v1201 = vld [vmem:[#allocation8 + $0xec8] sm:$0xf]
    %v1202 = vld [vmem:[#allocation8 + $0xecc] sm:$0xf]
    %v1203 = vld [vmem:[#allocation8 + $0xed0] sm:$0xf]
    %v1204 = vld [vmem:[#allocation8 + $0xed4] sm:$0xf]
    %v1205 = vld [vmem:[#allocation8 + $0xed8] sm:$0xf]
    %v1206 = vld [vmem:[#allocation8 + $0xedc] sm:$0xf]
    %v1207 = vld [vmem:[#allocation8 + $0xee0] sm:$0xf]
    %v1208 = vld [vmem:[#allocation8 + $0xee4] sm:$0xf]
    %v1209 = vld [vmem:[#allocation8 + $0xee8] sm:$0xf]
    %v1210 = vld [vmem:[#allocation8 + $0xeec] sm:$0xf]
    %v1211 = vld [vmem:[#allocation8 + $0xef0] sm:$0xf]
    %v1212 = vld [vmem:[#allocation8 + $0xef4] sm:$0xf]
    %v1213 = vld [vmem:[#allocation8 + $0xef8] sm:$0xf]
    %v1214 = vld [vmem:[#allocation8 + $0xefc] sm:$0xf]
    %v1215 = vld [vmem:[#allocation8 + $0xf00] sm:$0xf]
    %v1216 = vld [vmem:[#allocation8 + $0xf04] sm:$0xf]
    %v1217 = vld [vmem:[#allocation8 + $0xf08] sm:$0xf]
    %v1218 = vld [vmem:[#allocation8 + $0xf0c] sm:$0xf]
    %v1219 = vld [vmem:[#allocation8 + $0xf10] sm:$0xf]
    %v1220 = vld [vmem:[#allocation8 + $0xf14] sm:$0xf]
    %v1221 = vld [vmem:[#allocation8 + $0xf18] sm:$0xf]
    %v1222 = vld [vmem:[#allocation8 + $0xf1c] sm:$0xf]
    %v1223 = vld [vmem:[#allocation8 + $0xf20] sm:$0xf]
    %v1224 = vld [vmem:[#allocation8 + $0xf24] sm:$0xf]
    %v1225 = vld [vmem:[#allocation8 + $0xf28] sm:$0xf]
    %v1226 = vld [vmem:[#allocation8 + $0xf2c] sm:$0xf]
    %v1227 = vld [vmem:[#allocation8 + $0xf30] sm:$0xf]
    %v1228 = vld [vmem:[#allocation8 + $0xf34] sm:$0xf]
    %v1229 = vld [vmem:[#allocation8 + $0xf38] sm:$0xf]
    %v1230 = vld [vmem:[#allocation8 + $0xf3c] sm:$0xf]
    %v1231 = vld [vmem:[#allocation8 + $0xf40] sm:$0xf]
    %v1232 = vld [vmem:[#allocation8 + $0xf44] sm:$0xf]
    %v1233 = vld [vmem:[#allocation8 + $0xf48] sm:$0xf]
    %v1234 = vld [vmem:[#allocation8 + $0xf4c] sm:$0xf]
    %v1235 = vld [vmem:[#allocation8 + $0xf50] sm:$0xf]
    %v1236 = vld [vmem:[#allocation8 + $0xf54] sm:$0xf]
    %v1237 = vld [vmem:[#allocation8 + $0xf58] sm:$0xf]
    %v1238 = vld [vmem:[#allocation8 + $0xf5c] sm:$0xf]
    %v1239 = vld [vmem:[#allocation8 + $0xf60] sm:$0xf]
    %v1240 = vld [vmem:[#allocation8 + $0xf64] sm:$0xf]
    %v1241 = vld [vmem:[#allocation8 + $0xf68] sm:$0xf]
    %v1242 = vld [vmem:[#allocation8 + $0xf6c] sm:$0xf]
    %v1243 = vld [vmem:[#allocation8 + $0xf70] sm:$0xf]
    %v1244 = vld [vmem:[#allocation8 + $0xf74] sm:$0xf]
    %v1245 = vld [vmem:[#allocation8 + $0xf78] sm:$0xf]
    %v1246 = vld [vmem:[#allocation8 + $0xf7c] sm:$0xf]
    %v1247 = vld [vmem:[#allocation8 + $0xf80] sm:$0xf]
    %v1248 = vld [vmem:[#allocation8 + $0xf84] sm:$0xf]
    %v1249 = vld [vmem:[#allocation8 + $0xf88] sm:$0xf]
    %v1250 = vld [vmem:[#allocation8 + $0xf8c] sm:$0xf]
    %v1251 = vld [vmem:[#allocation8 + $0xf90] sm:$0xf]
    %v1252 = vld [vmem:[#allocation8 + $0xf94] sm:$0xf]
    %v1253 = vld [vmem:[#allocation8 + $0xf98] sm:$0xf]
    %v1254 = vld [vmem:[#allocation8 + $0xf9c] sm:$0xf]
    %v1255 = vld [vmem:[#allocation8 + $0xfa0] sm:$0xf]
    %v1256 = vld [vmem:[#allocation8 + $0xfa4] sm:$0xf]
    %v1257 = vld [vmem:[#allocation8 + $0xfa8] sm:$0xf]
    %v1258 = vld [vmem:[#allocation8 + $0xfac] sm:$0xf]
    %v1259 = vld [vmem:[#allocation8 + $0xfb0] sm:$0xf]
    %v1260 = vld [vmem:[#allocation8 + $0xfb4] sm:$0xf]
    %v1261 = vld [vmem:[#allocation8 + $0xfb8] sm:$0xf]
    %v1262 = vld [vmem:[#allocation8 + $0xfbc] sm:$0xf]
    %v1263 = vld [vmem:[#allocation8 + $0xfc0] sm:$0xf]
    %v1264 = vld [vmem:[#allocation8 + $0xfc4] sm:$0xf]
    %v1265 = vld [vmem:[#allocation8 + $0xfc8] sm:$0xf]
    %v1266 = vld [vmem:[#allocation8 + $0xfcc] sm:$0xf]
    %v1267 = vld [vmem:[#allocation8 + $0xfd0] sm:$0xf]
    %v1268 = vld [vmem:[#allocation8 + $0xfd4] sm:$0xf]
    %v1269 = vld [vmem:[#allocation8 + $0xfd8] sm:$0xf]
    %v1270 = vld [vmem:[#allocation8 + $0xfdc] sm:$0xf]
    %v1271 = vld [vmem:[#allocation8 + $0xfe0] sm:$0xf]
    %v1272 = vld [vmem:[#allocation8 + $0xfe4] sm:$0xf]
    %v1273 = vld [vmem:[#allocation8 + $0xfe8] sm:$0xf]
    %v1274 = vld [vmem:[#allocation8 + $0xfec] sm:$0xf]
    %v1275 = vld [vmem:[#allocation8 + $0xff0] sm:$0xf]
    %v1276 = vld [vmem:[#allocation8 + $0xff4] sm:$0xf]
    %v1277 = vld [vmem:[#allocation8 + $0xff8] sm:$0xf]
    %v1278 = vld [vmem:[#allocation8 + $0xffc] sm:$0xf]
    %v1279 = vld [vmem:[#allocation8 + $0x1000] sm:$0xf]
    %v1280 = vld [vmem:[#allocation8 + $0x1004] sm:$0xf]
    %v1281 = vld [vmem:[#allocation8 + $0x1008] sm:$0xf]
    %v1282 = vld [vmem:[#allocation8 + $0x100c] sm:$0xf]
    %v1283 = vld [vmem:[#allocation8 + $0x1010] sm:$0xf]
    %v1284 = vld [vmem:[#allocation8 + $0x1014] sm:$0xf]
    %v1285 = vld [vmem:[#allocation8 + $0x1018] sm:$0xf]
    %v1286 = vld [vmem:[#allocation8 + $0x101c] sm:$0xf]
    %v1287 = vld [vmem:[#allocation8 + $0x1020] sm:$0xf]
    %v1288 = vld [vmem:[#allocation8 + $0x1024] sm:$0xf]
    %v1289 = vld [vmem:[#allocation8 + $0x1028] sm:$0xf]
    %v1290 = vld [vmem:[#allocation8 + $0x102c] sm:$0xf]
    %v1291 = vld [vmem:[#allocation8 + $0x1030] sm:$0xf]
    %v1292 = vld [vmem:[#allocation8 + $0x1034] sm:$0xf]
    %v1293 = vld [vmem:[#allocation8 + $0x1038] sm:$0xf]
    %v1294 = vld [vmem:[#allocation8 + $0x103c] sm:$0xf]
    %v1295 = vld [vmem:[#allocation8 + $0x1040] sm:$0xf]
    %v1296 = vld [vmem:[#allocation8 + $0x1044] sm:$0xf]
    %v1297 = vld [vmem:[#allocation8 + $0x1048] sm:$0xf]
    %v1298 = vld [vmem:[#allocation8 + $0x104c] sm:$0xf]
    %v1299 = vld [vmem:[#allocation8 + $0x1050] sm:$0xf]
    %v1300 = vld [vmem:[#allocation8 + $0x1054] sm:$0xf]
    %v1301 = vld [vmem:[#allocation8 + $0x1058] sm:$0xf]
    %v1302 = vld [vmem:[#allocation8 + $0x105c] sm:$0xf]
    %v1303 = vld [vmem:[#allocation8 + $0x1060] sm:$0xf]
    %v1304 = vld [vmem:[#allocation8 + $0x1064] sm:$0xf]
    %v1305 = vld [vmem:[#allocation8 + $0x1068] sm:$0xf]
    %v1306 = vld [vmem:[#allocation8 + $0x106c] sm:$0xf]
    %v1307 = vld [vmem:[#allocation8 + $0x1070] sm:$0xf]
    %v1308 = vld [vmem:[#allocation8 + $0x1074] sm:$0xf]
    %v1309 = vld [vmem:[#allocation8 + $0x1078] sm:$0xf]
    %v1310 = vld [vmem:[#allocation8 + $0x107c] sm:$0xf]
    %v1311 = vld [vmem:[#allocation8 + $0x1080] sm:$0xf]
    %v1312 = vld [vmem:[#allocation8 + $0x1084] sm:$0xf]
    %v1313 = vld [vmem:[#allocation8 + $0x1088] sm:$0xf]
    %v1314 = vld [vmem:[#allocation8 + $0x108c] sm:$0xf]
    %v1315 = vld [vmem:[#allocation8 + $0x1090] sm:$0xf]
    %v1316 = vld [vmem:[#allocation8 + $0x1094] sm:$0xf]
    %v1317 = vld [vmem:[#allocation8 + $0x1098] sm:$0xf]
    %v1318 = vld [vmem:[#allocation8 + $0x109c] sm:$0xf]
    %v1319 = vld [vmem:[#allocation8 + $0x10a0] sm:$0xf]
    %v1320 = vld [vmem:[#allocation8 + $0x10a4] sm:$0xf]
    %v1321 = vld [vmem:[#allocation8 + $0x10a8] sm:$0xf]
    %v1322 = vld [vmem:[#allocation8 + $0x10ac] sm:$0xf]
    %v1323 = vld [vmem:[#allocation8 + $0x10b0] sm:$0xf]
    %v1324 = vld [vmem:[#allocation8 + $0x10b4] sm:$0xf]
    %v1325 = vld [vmem:[#allocation8 + $0x10b8] sm:$0xf]
    %v1326 = vld [vmem:[#allocation8 + $0x10bc] sm:$0xf]
    %v1327 = vld [vmem:[#allocation8 + $0x10c0] sm:$0xf]
    %v1328 = vld [vmem:[#allocation8 + $0x10c4] sm:$0xf]
    %v1329 = vld [vmem:[#allocation8 + $0x10c8] sm:$0xf]
    %v1330 = vld [vmem:[#allocation8 + $0x10cc] sm:$0xf]
    %v1331 = vld [vmem:[#allocation8 + $0x10d0] sm:$0xf]
    %v1332 = vld [vmem:[#allocation8 + $0x10d4] sm:$0xf]
    %v1333 = vld [vmem:[#allocation8 + $0x10d8] sm:$0xf]
    %v1334 = vld [vmem:[#allocation8 + $0x10dc] sm:$0xf]
    %v1335 = vld [vmem:[#allocation8 + $0x10e0] sm:$0xf]
    %v1336 = vld [vmem:[#allocation8 + $0x10e4] sm:$0xf]
    %v1337 = vld [vmem:[#allocation8 + $0x10e8] sm:$0xf]
    %v1338 = vld [vmem:[#allocation8 + $0x10ec] sm:$0xf]
    %v1339 = vld [vmem:[#allocation8 + $0x10f0] sm:$0xf]
    %v1340 = vld [vmem:[#allocation8 + $0x10f4] sm:$0xf]
    %v1341 = vld [vmem:[#allocation8 + $0x10f8] sm:$0xf]
    %v1342 = vld [vmem:[#allocation8 + $0x10fc] sm:$0xf]
    %v1343 = vld [vmem:[#allocation8 + $0x1100] sm:$0xf]
    %v1344 = vld [vmem:[#allocation8 + $0x1104] sm:$0xf]
    %v1345 = vld [vmem:[#allocation8 + $0x1108] sm:$0xf]
    %v1346 = vld [vmem:[#allocation8 + $0x110c] sm:$0xf]
    %v1347 = vld [vmem:[#allocation8 + $0x1110] sm:$0xf]
    %v1348 = vld [vmem:[#allocation8 + $0x1114] sm:$0xf]
    %v1349 = vld [vmem:[#allocation8 + $0x1118] sm:$0xf]
    %v1350 = vld [vmem:[#allocation8 + $0x111c] sm:$0xf]
    %v1351 = vld [vmem:[#allocation8 + $0x1120] sm:$0xf]
    %v1352 = vld [vmem:[#allocation8 + $0x1124] sm:$0xf]
    %v1353 = vld [vmem:[#allocation8 + $0x1128] sm:$0xf]
    %v1354 = vld [vmem:[#allocation8 + $0x112c] sm:$0xf]
    %v1355 = vld [vmem:[#allocation8 + $0x1130] sm:$0xf]
    %v1356 = vld [vmem:[#allocation8 + $0x1134] sm:$0xf]
    %v1357 = vld [vmem:[#allocation8 + $0x1138] sm:$0xf]
    %v1358 = vld [vmem:[#allocation8 + $0x113c] sm:$0xf]
    %v1359 = vld [vmem:[#allocation8 + $0x1140] sm:$0xf]
    %v1360 = vld [vmem:[#allocation8 + $0x1144] sm:$0xf]
    %v1361 = vld [vmem:[#allocation8 + $0x1148] sm:$0xf]
    %v1362 = vld [vmem:[#allocation8 + $0x114c] sm:$0xf]
    %v1363 = vld [vmem:[#allocation8 + $0x1150] sm:$0xf]
    %v1364 = vld [vmem:[#allocation8 + $0x1154] sm:$0xf]
    %v1365 = vld [vmem:[#allocation8 + $0x1158] sm:$0xf]
    %v1366 = vld [vmem:[#allocation8 + $0x115c] sm:$0xf]
    %v1367 = vld [vmem:[#allocation8 + $0x1160] sm:$0xf]
    %v1368 = vld [vmem:[#allocation8 + $0x1164] sm:$0xf]
    %v1369 = vld [vmem:[#allocation8 + $0x1168] sm:$0xf]
    %v1370 = vld [vmem:[#allocation8 + $0x116c] sm:$0xf]
    %v1371 = vld [vmem:[#allocation8 + $0x1170] sm:$0xf]
    %v1372 = vld [vmem:[#allocation8 + $0x1174] sm:$0xf]
    %v1373 = vld [vmem:[#allocation8 + $0x1178] sm:$0xf]
    %v1374 = vld [vmem:[#allocation8 + $0x117c] sm:$0xf]
    %v1375 = vld [vmem:[#allocation8 + $0x1180] sm:$0xf]
    %v1376 = vld [vmem:[#allocation8 + $0x1184] sm:$0xf]
    %v1377 = vld [vmem:[#allocation8 + $0x1188] sm:$0xf]
    %v1378 = vld [vmem:[#allocation8 + $0x118c] sm:$0xf]
    %v1379 = vld [vmem:[#allocation8 + $0x1190] sm:$0xf]
    %v1380 = vld [vmem:[#allocation8 + $0x1194] sm:$0xf]
    %v1381 = vld [vmem:[#allocation8 + $0x1198] sm:$0xf]
    %v1382 = vld [vmem:[#allocation8 + $0x119c] sm:$0xf]
    %v1383 = vld [vmem:[#allocation8 + $0x11a0] sm:$0xf]
    %v1384 = vld [vmem:[#allocation8 + $0x11a4] sm:$0xf]
    %v1385 = vld [vmem:[#allocation8 + $0x11a8] sm:$0xf]
    %v1386 = vld [vmem:[#allocation8 + $0x11ac] sm:$0xf]
    %v1387 = vld [vmem:[#allocation8 + $0x11b0] sm:$0xf]
    %v1388 = vld [vmem:[#allocation8 + $0x11b4] sm:$0xf]
    %v1389 = vld [vmem:[#allocation8 + $0x11b8] sm:$0xf]
    %v1390 = vld [vmem:[#allocation8 + $0x11bc] sm:$0xf]
    %v1391 = vld [vmem:[#allocation8 + $0x11c0] sm:$0xf]
    %v1392 = vld [vmem:[#allocation8 + $0x11c4] sm:$0xf]
    %v1393 = vld [vmem:[#allocation8 + $0x11c8] sm:$0xf]
    %v1394 = vld [vmem:[#allocation8 + $0x11cc] sm:$0xf]
    %v1395 = vld [vmem:[#allocation8 + $0x11d0] sm:$0xf]
    %v1396 = vld [vmem:[#allocation8 + $0x11d4] sm:$0xf]
    %v1397 = vld [vmem:[#allocation8 + $0x11d8] sm:$0xf]
    %v1398 = vld [vmem:[#allocation8 + $0x11dc] sm:$0xf]
    %v1399 = vld [vmem:[#allocation8 + $0x11e0] sm:$0xf]
    %v1400 = vld [vmem:[#allocation8 + $0x11e4] sm:$0xf]
    %v1401 = vld [vmem:[#allocation8 + $0x11e8] sm:$0xf]
    %v1402 = vld [vmem:[#allocation8 + $0x11ec] sm:$0xf]
    %v1403 = vld [vmem:[#allocation8 + $0x11f0] sm:$0xf]
    %v1404 = vld [vmem:[#allocation8 + $0x11f4] sm:$0xf]
    %v1405 = vld [vmem:[#allocation8 + $0x11f8] sm:$0xf]
    %v1406 = vld [vmem:[#allocation8 + $0x11fc] sm:$0xf]
    %v1407 = vld [vmem:[#allocation10] sm:$0x1]
    %v1409 = vlaneseq
    %v1410 = vshrl.u32 %v1409, 7
    %v1411 = vsub.s32 0, %v1410
    %v1412 = vrot.slane %v1407, %v1411
    %v1450 = vunpack.c.l.b16 %v219
    %v1451 = vunpack.c.h.b16 %v219
    %v1452 = vunpack.c.l.b16 %v220
    %v1453 = vunpack.c.h.b16 %v220
    %v1454 = vunpack.c.l.b16 %v221
    %v1455 = vunpack.c.h.b16 %v221
    %v1456 = vunpack.c.l.b16 %v222
    %v1457 = vunpack.c.h.b16 %v222
    %v1458 = vunpack.c.l.b16 %v223
    %v1459 = vunpack.c.h.b16 %v223
    %v1460 = vunpack.c.l.b16 %v224
    %v1461 = vunpack.c.h.b16 %v224
    %v1462 = vunpack.c.l.b16 %v225
    %v1463 = vunpack.c.h.b16 %v225
    %v1464 = vunpack.c.l.b16 %v226
    %v1465 = vunpack.c.h.b16 %v226
    %v1466 = vunpack.c.l.b16 %v227
    %v1467 = vunpack.c.h.b16 %v227
    %v1468 = vunpack.c.l.b16 %v228
    %v1469 = vunpack.c.h.b16 %v228
    %v1470 = vunpack.c.l.b16 %v229
    %v1471 = vunpack.c.h.b16 %v229
    %v1472 = vunpack.c.l.b16 %v230
    %v1473 = vunpack.c.h.b16 %v230
    %v1474 = vunpack.c.l.b16 %v231
    %v1475 = vunpack.c.h.b16 %v231
    %v1476 = vunpack.c.l.b16 %v232
    %v1477 = vunpack.c.h.b16 %v232
    %v1478 = vunpack.c.l.b16 %v233
    %v1479 = vunpack.c.h.b16 %v233
    %v1480 = vunpack.c.l.b16 %v234
    %v1481 = vunpack.c.h.b16 %v234
    %v1482 = vunpack.c.l.b16 %v235
    %v1483 = vunpack.c.h.b16 %v235
    %v1484 = vunpack.c.l.b16 %v236
    %v1485 = vunpack.c.h.b16 %v236
    %v1486 = vunpack.c.l.b16 %v237
    %v1487 = vunpack.c.h.b16 %v237
    %v1488 = vunpack.c.l.b16 %v238
    %v1489 = vunpack.c.h.b16 %v238
    %v1490 = vunpack.c.l.b16 %v239
    %v1491 = vunpack.c.h.b16 %v239
    %v1492 = vunpack.c.l.b16 %v240
    %v1493 = vunpack.c.h.b16 %v240
    %v1494 = vunpack.c.l.b16 %v241
    %v1495 = vunpack.c.h.b16 %v241
    %v1496 = vunpack.c.l.b16 %v242
    %v1497 = vunpack.c.h.b16 %v242
    %v1498 = vunpack.c.l.b16 %v243
    %v1499 = vunpack.c.h.b16 %v243
    %v1500 = vunpack.c.l.b16 %v244
    %v1501 = vunpack.c.h.b16 %v244
    %v1502 = vunpack.c.l.b16 %v245
    %v1503 = vunpack.c.h.b16 %v245
    %v1504 = vunpack.c.l.b16 %v246
    %v1505 = vunpack.c.h.b16 %v246
    %v1506 = vunpack.c.l.b16 %v247
    %v1507 = vunpack.c.h.b16 %v247
    %v1508 = vunpack.c.l.b16 %v248
    %v1509 = vunpack.c.h.b16 %v248
    %v1510 = vunpack.c.l.b16 %v249
    %v1511 = vunpack.c.h.b16 %v249
    %v1512 = vunpack.c.l.b16 %v250
    %v1513 = vunpack.c.h.b16 %v250
    %v1514 = vunpack.c.l.b16 %v251
    %v1515 = vunpack.c.h.b16 %v251
    %v1516 = vunpack.c.l.b16 %v252
    %v1517 = vunpack.c.h.b16 %v252
    %v1518 = vunpack.c.l.b16 %v253
    %v1519 = vunpack.c.h.b16 %v253
    %v1520 = vunpack.c.l.b16 %v254
    %v1521 = vunpack.c.h.b16 %v254
    %v1522 = vpack.c.b16 %v1450, %v1450
    %v1523 = vpack.c.b16 %v1451, %v1451
    %v1524 = vpack.c.b16 %v1452, %v1452
    %v1525 = vpack.c.b16 %v1453, %v1453
    %v1526 = vpack.c.b16 %v1454, %v1454
    %v1527 = vpack.c.b16 %v1455, %v1455
    %v1528 = vpack.c.b16 %v1456, %v1456
    %v1529 = vpack.c.b16 %v1457, %v1457
    %v1530 = vpack.c.b16 %v1458, %v1458
    %v1531 = vpack.c.b16 %v1459, %v1459
    %v1532 = vpack.c.b16 %v1460, %v1460
    %v1533 = vpack.c.b16 %v1461, %v1461
    %v1534 = vpack.c.b16 %v1462, %v1462
    %v1535 = vpack.c.b16 %v1463, %v1463
    %v1536 = vpack.c.b16 %v1464, %v1464
    %v1537 = vpack.c.b16 %v1465, %v1465
    %v1538 = vpack.c.b16 %v1466, %v1466
    %v1539 = vpack.c.b16 %v1467, %v1467
    %v1540 = vpack.c.b16 %v1468, %v1468
    %v1541 = vpack.c.b16 %v1469, %v1469
    %v1542 = vpack.c.b16 %v1470, %v1470
    %v1543 = vpack.c.b16 %v1471, %v1471
    %v1544 = vpack.c.b16 %v1472, %v1472
    %v1545 = vpack.c.b16 %v1473, %v1473
    %v1546 = vpack.c.b16 %v1474, %v1474
    %v1547 = vpack.c.b16 %v1475, %v1475
    %v1548 = vpack.c.b16 %v1476, %v1476
    %v1549 = vpack.c.b16 %v1477, %v1477
    %v1550 = vpack.c.b16 %v1478, %v1478
    %v1551 = vpack.c.b16 %v1479, %v1479
    %v1552 = vpack.c.b16 %v1480, %v1480
    %v1553 = vpack.c.b16 %v1481, %v1481
    %v1554 = vpack.c.b16 %v1482, %v1482
    %v1555 = vpack.c.b16 %v1483, %v1483
    %v1556 = vpack.c.b16 %v1484, %v1484
    %v1557 = vpack.c.b16 %v1485, %v1485
    %v1558 = vpack.c.b16 %v1486, %v1486
    %v1559 = vpack.c.b16 %v1487, %v1487
    %v1560 = vpack.c.b16 %v1488, %v1488
    %v1561 = vpack.c.b16 %v1489, %v1489
    %v1562 = vpack.c.b16 %v1490, %v1490
    %v1563 = vpack.c.b16 %v1491, %v1491
    %v1564 = vpack.c.b16 %v1492, %v1492
    %v1565 = vpack.c.b16 %v1493, %v1493
    %v1566 = vpack.c.b16 %v1494, %v1494
    %v1567 = vpack.c.b16 %v1495, %v1495
    %v1568 = vpack.c.b16 %v1496, %v1496
    %v1569 = vpack.c.b16 %v1497, %v1497
    %v1570 = vpack.c.b16 %v1498, %v1498
    %v1571 = vpack.c.b16 %v1499, %v1499
    %v1572 = vpack.c.b16 %v1500, %v1500
    %v1573 = vpack.c.b16 %v1501, %v1501
    %v1574 = vpack.c.b16 %v1502, %v1502
    %v1575 = vpack.c.b16 %v1503, %v1503
    %v1576 = vpack.c.b16 %v1504, %v1504
    %v1577 = vpack.c.b16 %v1505, %v1505
    %v1578 = vpack.c.b16 %v1506, %v1506
    %v1579 = vpack.c.b16 %v1507, %v1507
    %v1580 = vpack.c.b16 %v1508, %v1508
    %v1581 = vpack.c.b16 %v1509, %v1509
    %v1582 = vpack.c.b16 %v1510, %v1510
    %v1583 = vpack.c.b16 %v1511, %v1511
    %v1584 = vpack.c.b16 %v1512, %v1512
    %v1585 = vpack.c.b16 %v1513, %v1513
    %v1586 = vpack.c.b16 %v1514, %v1514
    %v1587 = vpack.c.b16 %v1515, %v1515
    %v1588 = vpack.c.b16 %v1516, %v1516
    %v1589 = vpack.c.b16 %v1517, %v1517
    %v1590 = vpack.c.b16 %v1518, %v1518
    %v1591 = vpack.c.b16 %v1519, %v1519
    %v1592 = vpack.c.b16 %v1520, %v1520
    %v1593 = vpack.c.b16 %v1521, %v1521
    %v2818 = vunpack.c.l.b16 %v255
    %v2819 = vunpack.c.l.b16 %v256
    %v2820 = vunpack.c.l.b16 %v257
    %v2821 = vunpack.c.l.b16 %v258
    %v2822 = vunpack.c.l.b16 %v259
    %v2823 = vunpack.c.l.b16 %v260
    %v2824 = vunpack.c.l.b16 %v261
    %v2825 = vunpack.c.l.b16 %v262
    %v2826 = vunpack.c.l.b16 %v263
    %v2827 = vunpack.c.l.b16 %v264
    %v2828 = vunpack.c.l.b16 %v265
    %v2829 = vunpack.c.l.b16 %v266
    %v2830 = vunpack.c.l.b16 %v267
    %v2831 = vunpack.c.l.b16 %v268
    %v2832 = vunpack.c.l.b16 %v269
    %v2833 = vunpack.c.l.b16 %v270
    %v2834 = vunpack.c.l.b16 %v271
    %v2835 = vunpack.c.l.b16 %v272
    %v2836 = vunpack.c.l.b16 %v273
    %v2837 = vunpack.c.l.b16 %v274
    %v2838 = vunpack.c.l.b16 %v275
    %v2839 = vunpack.c.l.b16 %v276
    %v2840 = vunpack.c.l.b16 %v277
    %v2841 = vunpack.c.l.b16 %v278
    %v2842 = vunpack.c.l.b16 %v279
    %v2843 = vunpack.c.l.b16 %v280
    %v2844 = vunpack.c.l.b16 %v281
    %v2845 = vunpack.c.l.b16 %v282
    %v2846 = vunpack.c.l.b16 %v283
    %v2847 = vunpack.c.l.b16 %v284
    %v2848 = vunpack.c.l.b16 %v285
    %v2849 = vunpack.c.l.b16 %v286
    %v2850 = vunpack.c.l.b16 %v287
    %v2851 = vunpack.c.l.b16 %v288
    %v2852 = vunpack.c.l.b16 %v289
    %v2853 = vunpack.c.l.b16 %v290
    %v2854 = vunpack.c.l.b16 %v291
    %v2855 = vunpack.c.l.b16 %v292
    %v2856 = vunpack.c.l.b16 %v293
    %v2857 = vunpack.c.l.b16 %v294
    %v2858 = vunpack.c.l.b16 %v295
    %v2859 = vunpack.c.l.b16 %v296
    %v2860 = vunpack.c.l.b16 %v297
    %v2861 = vunpack.c.l.b16 %v298
    %v2862 = vunpack.c.l.b16 %v299
    %v2863 = vunpack.c.l.b16 %v300
    %v2864 = vunpack.c.l.b16 %v301
    %v2865 = vunpack.c.l.b16 %v302
    %v2866 = vunpack.c.l.b16 %v303
    %v2867 = vunpack.c.l.b16 %v304
    %v2868 = vunpack.c.l.b16 %v305
    %v2869 = vunpack.c.l.b16 %v306
    %v2870 = vunpack.c.l.b16 %v307
    %v2871 = vunpack.c.l.b16 %v308
    %v2872 = vunpack.c.l.b16 %v309
    %v2873 = vunpack.c.l.b16 %v310
    %v2874 = vunpack.c.l.b16 %v311
    %v2875 = vunpack.c.l.b16 %v312
    %v2876 = vunpack.c.l.b16 %v313
    %v2877 = vunpack.c.l.b16 %v314
    %v2878 = vunpack.c.l.b16 %v315
    %v2879 = vunpack.c.l.b16 %v316
    %v2880 = vunpack.c.l.b16 %v317
    %v2881 = vunpack.c.l.b16 %v318
    %v2882 = vunpack.c.l.b16 %v319
    %v2883 = vunpack.c.l.b16 %v320
    %v2884 = vunpack.c.l.b16 %v321
    %v2885 = vunpack.c.l.b16 %v322
    %v2886 = vunpack.c.l.b16 %v323
    %v2887 = vunpack.c.l.b16 %v324
    %v2888 = vunpack.c.l.b16 %v325
    %v2889 = vunpack.c.l.b16 %v326
    %v2890 = vunpack.c.l.b16 %v327
    %v2891 = vunpack.c.l.b16 %v328
    %v2892 = vunpack.c.l.b16 %v329
    %v2893 = vunpack.c.l.b16 %v330
    %v2894 = vunpack.c.l.b16 %v331
    %v2895 = vunpack.c.l.b16 %v332
    %v2896 = vunpack.c.l.b16 %v333
    %v2897 = vunpack.c.l.b16 %v334
    %v2898 = vunpack.c.l.b16 %v335
    %v2899 = vunpack.c.l.b16 %v336
    %v2900 = vunpack.c.l.b16 %v337
    %v2901 = vunpack.c.l.b16 %v338
    %v2902 = vunpack.c.l.b16 %v339
    %v2903 = vunpack.c.l.b16 %v340
    %v2904 = vunpack.c.l.b16 %v341
    %v2905 = vunpack.c.l.b16 %v342
    %v2906 = vunpack.c.l.b16 %v343
    %v2907 = vunpack.c.l.b16 %v344
    %v2908 = vunpack.c.l.b16 %v345
    %v2909 = vunpack.c.l.b16 %v346
    %v2910 = vunpack.c.l.b16 %v347
    %v2911 = vunpack.c.l.b16 %v348
    %v2912 = vunpack.c.l.b16 %v349
    %v2913 = vunpack.c.l.b16 %v350
    %v2914 = vunpack.c.l.b16 %v351
    %v2915 = vunpack.c.l.b16 %v352
    %v2916 = vunpack.c.l.b16 %v353
    %v2917 = vunpack.c.l.b16 %v354
    %v2918 = vunpack.c.l.b16 %v355
    %v2919 = vunpack.c.l.b16 %v356
    %v2920 = vunpack.c.l.b16 %v357
    %v2921 = vunpack.c.l.b16 %v358
    %v2922 = vunpack.c.l.b16 %v359
    %v2923 = vunpack.c.l.b16 %v360
    %v2924 = vunpack.c.l.b16 %v361
    %v2925 = vunpack.c.l.b16 %v362
    %v2926 = vunpack.c.l.b16 %v363
    %v2927 = vunpack.c.l.b16 %v364
    %v2928 = vunpack.c.l.b16 %v365
    %v2929 = vunpack.c.l.b16 %v366
    %v2930 = vunpack.c.l.b16 %v367
    %v2931 = vunpack.c.l.b16 %v368
    %v2932 = vunpack.c.l.b16 %v369
    %v2933 = vunpack.c.l.b16 %v370
    %v2934 = vunpack.c.l.b16 %v371
    %v2935 = vunpack.c.l.b16 %v372
    %v2936 = vunpack.c.l.b16 %v373
    %v2937 = vunpack.c.l.b16 %v374
    %v2938 = vunpack.c.l.b16 %v375
    %v2939 = vunpack.c.l.b16 %v376
    %v2940 = vunpack.c.l.b16 %v377
    %v2941 = vunpack.c.l.b16 %v378
    %v2942 = vunpack.c.l.b16 %v379
    %v2943 = vunpack.c.l.b16 %v380
    %v2944 = vunpack.c.l.b16 %v381
    %v2945 = vunpack.c.l.b16 %v382
    %v2946 = vunpack.c.l.b16 %v383
    %v2947 = vunpack.c.l.b16 %v384
    %v2948 = vunpack.c.l.b16 %v385
    %v2949 = vunpack.c.l.b16 %v386
    %v2950 = vunpack.c.l.b16 %v387
    %v2951 = vunpack.c.l.b16 %v388
    %v2952 = vunpack.c.l.b16 %v389
    %v2953 = vunpack.c.l.b16 %v390
    %v2954 = vunpack.c.l.b16 %v391
    %v2955 = vunpack.c.l.b16 %v392
    %v2956 = vunpack.c.l.b16 %v393
    %v2957 = vunpack.c.l.b16 %v394
    %v2958 = vunpack.c.l.b16 %v395
    %v2959 = vunpack.c.l.b16 %v396
    %v2960 = vunpack.c.l.b16 %v397
    %v2961 = vunpack.c.l.b16 %v398
    %v2962 = vunpack.c.l.b16 %v399
    %v2963 = vunpack.c.l.b16 %v400
    %v2964 = vunpack.c.l.b16 %v401
    %v2965 = vunpack.c.l.b16 %v402
    %v2966 = vunpack.c.l.b16 %v403
    %v2967 = vunpack.c.l.b16 %v404
    %v2968 = vunpack.c.l.b16 %v405
    %v2969 = vunpack.c.l.b16 %v406
    %v2970 = vunpack.c.l.b16 %v407
    %v2971 = vunpack.c.l.b16 %v408
    %v2972 = vunpack.c.l.b16 %v409
    %v2973 = vunpack.c.l.b16 %v410
    %v2974 = vunpack.c.l.b16 %v411
    %v2975 = vunpack.c.l.b16 %v412
    %v2976 = vunpack.c.l.b16 %v413
    %v2977 = vunpack.c.l.b16 %v414
    %v2978 = vunpack.c.l.b16 %v415
    %v2979 = vunpack.c.l.b16 %v416
    %v2980 = vunpack.c.l.b16 %v417
    %v2981 = vunpack.c.l.b16 %v418
    %v2982 = vunpack.c.l.b16 %v419
    %v2983 = vunpack.c.l.b16 %v420
    %v2984 = vunpack.c.l.b16 %v421
    %v2985 = vunpack.c.l.b16 %v422
    %v2986 = vunpack.c.l.b16 %v423
    %v2987 = vunpack.c.l.b16 %v424
    %v2988 = vunpack.c.l.b16 %v425
    %v2989 = vunpack.c.l.b16 %v426
    %v2990 = vunpack.c.l.b16 %v427
    %v2991 = vunpack.c.l.b16 %v428
    %v2992 = vunpack.c.l.b16 %v429
    %v2993 = vunpack.c.l.b16 %v430
    %v2994 = vunpack.c.l.b16 %v431
    %v2995 = vunpack.c.l.b16 %v432
    %v2996 = vunpack.c.l.b16 %v433
    %v2997 = vunpack.c.l.b16 %v434
    %v2998 = vunpack.c.l.b16 %v435
    %v2999 = vunpack.c.l.b16 %v436
    %v3000 = vunpack.c.l.b16 %v437
    %v3001 = vunpack.c.l.b16 %v438
    %v3002 = vunpack.c.l.b16 %v439
    %v3003 = vunpack.c.l.b16 %v440
    %v3004 = vunpack.c.l.b16 %v441
    %v3005 = vunpack.c.l.b16 %v442
    %v3006 = vunpack.c.l.b16 %v443
    %v3007 = vunpack.c.l.b16 %v444
    %v3008 = vunpack.c.l.b16 %v445
    %v3009 = vunpack.c.l.b16 %v446
    %v3010 = vunpack.c.l.b16 %v447
    %v3011 = vunpack.c.l.b16 %v448
    %v3012 = vunpack.c.l.b16 %v449
    %v3013 = vunpack.c.l.b16 %v450
    %v3014 = vunpack.c.l.b16 %v451
    %v3015 = vunpack.c.l.b16 %v452
    %v3016 = vunpack.c.l.b16 %v453
    %v3017 = vunpack.c.l.b16 %v454
    %v3018 = vunpack.c.l.b16 %v455
    %v3019 = vunpack.c.l.b16 %v456
    %v3020 = vunpack.c.l.b16 %v457
    %v3021 = vunpack.c.l.b16 %v458
    %v3022 = vunpack.c.l.b16 %v459
    %v3023 = vunpack.c.l.b16 %v460
    %v3024 = vunpack.c.l.b16 %v461
    %v3025 = vunpack.c.l.b16 %v462
    %v3026 = vunpack.c.l.b16 %v463
    %v3027 = vunpack.c.l.b16 %v464
    %v3028 = vunpack.c.l.b16 %v465
    %v3029 = vunpack.c.l.b16 %v466
    %v3030 = vunpack.c.l.b16 %v467
    %v3031 = vunpack.c.l.b16 %v468
    %v3032 = vunpack.c.l.b16 %v469
    %v3033 = vunpack.c.l.b16 %v470
    %v3034 = vunpack.c.l.b16 %v471
    %v3035 = vunpack.c.l.b16 %v472
    %v3036 = vunpack.c.l.b16 %v473
    %v3037 = vunpack.c.l.b16 %v474
    %v3038 = vunpack.c.l.b16 %v475
    %v3039 = vunpack.c.l.b16 %v476
    %v3040 = vunpack.c.l.b16 %v477
    %v3041 = vunpack.c.l.b16 %v478
    %v3042 = vunpack.c.l.b16 %v479
    %v3043 = vunpack.c.l.b16 %v480
    %v3044 = vunpack.c.l.b16 %v481
    %v3045 = vunpack.c.l.b16 %v482
    %v3046 = vunpack.c.l.b16 %v483
    %v3047 = vunpack.c.l.b16 %v484
    %v3048 = vunpack.c.l.b16 %v485
    %v3049 = vunpack.c.l.b16 %v486
    %v3050 = vunpack.c.l.b16 %v487
    %v3051 = vunpack.c.l.b16 %v488
    %v3052 = vunpack.c.l.b16 %v489
    %v3053 = vunpack.c.l.b16 %v490
    %v3054 = vunpack.c.l.b16 %v491
    %v3055 = vunpack.c.l.b16 %v492
    %v3056 = vunpack.c.l.b16 %v493
    %v3057 = vunpack.c.l.b16 %v494
    %v3058 = vunpack.c.l.b16 %v495
    %v3059 = vunpack.c.l.b16 %v496
    %v3060 = vunpack.c.l.b16 %v497
    %v3061 = vunpack.c.l.b16 %v498
    %v3062 = vunpack.c.l.b16 %v499
    %v3063 = vunpack.c.l.b16 %v500
    %v3064 = vunpack.c.l.b16 %v501
    %v3065 = vunpack.c.l.b16 %v502
    %v3066 = vunpack.c.l.b16 %v503
    %v3067 = vunpack.c.l.b16 %v504
    %v3068 = vunpack.c.l.b16 %v505
    %v3069 = vunpack.c.l.b16 %v506
    %v3070 = vunpack.c.l.b16 %v507
    %v3071 = vunpack.c.l.b16 %v508
    %v3072 = vunpack.c.l.b16 %v509
    %v3073 = vunpack.c.l.b16 %v510
    %v3074 = vunpack.c.l.b16 %v511
    %v3075 = vunpack.c.l.b16 %v512
    %v3076 = vunpack.c.l.b16 %v513
    %v3077 = vunpack.c.l.b16 %v514
    %v3078 = vunpack.c.l.b16 %v515
    %v3079 = vunpack.c.l.b16 %v516
    %v3080 = vunpack.c.l.b16 %v517
    %v3081 = vunpack.c.l.b16 %v518
    %v3082 = vunpack.c.l.b16 %v519
    %v3083 = vunpack.c.l.b16 %v520
    %v3084 = vunpack.c.l.b16 %v521
    %v3085 = vunpack.c.l.b16 %v522
    %v3086 = vunpack.c.l.b16 %v523
    %v3087 = vunpack.c.l.b16 %v524
    %v3088 = vunpack.c.l.b16 %v525
    %v3089 = vunpack.c.l.b16 %v526
    %v3090 = vunpack.c.l.b16 %v527
    %v3091 = vunpack.c.l.b16 %v528
    %v3092 = vunpack.c.l.b16 %v529
    %v3093 = vunpack.c.l.b16 %v530
    %v3094 = vunpack.c.l.b16 %v531
    %v3095 = vunpack.c.l.b16 %v532
    %v3096 = vunpack.c.l.b16 %v533
    %v3097 = vunpack.c.l.b16 %v534
    %v3098 = vunpack.c.l.b16 %v535
    %v3099 = vunpack.c.l.b16 %v536
    %v3100 = vunpack.c.l.b16 %v537
    %v3101 = vunpack.c.l.b16 %v538
    %v3102 = vunpack.c.l.b16 %v539
    %v3103 = vunpack.c.l.b16 %v540
    %v3104 = vunpack.c.l.b16 %v541
    %v3105 = vunpack.c.l.b16 %v542
    %v3106 = vunpack.c.l.b16 %v543
    %v3107 = vunpack.c.l.b16 %v544
    %v3108 = vunpack.c.l.b16 %v545
    %v3109 = vunpack.c.l.b16 %v546
    %v3110 = vunpack.c.l.b16 %v547
    %v3111 = vunpack.c.l.b16 %v548
    %v3112 = vunpack.c.l.b16 %v549
    %v3113 = vunpack.c.l.b16 %v550
    %v3114 = vunpack.c.l.b16 %v551
    %v3115 = vunpack.c.l.b16 %v552
    %v3116 = vunpack.c.l.b16 %v553
    %v3117 = vunpack.c.l.b16 %v554
    %v3118 = vunpack.c.l.b16 %v555
    %v3119 = vunpack.c.l.b16 %v556
    %v3120 = vunpack.c.l.b16 %v557
    %v3121 = vunpack.c.l.b16 %v558
    %v3122 = vunpack.c.l.b16 %v559
    %v3123 = vunpack.c.l.b16 %v560
    %v3124 = vunpack.c.l.b16 %v561
    %v3125 = vunpack.c.l.b16 %v562
    %v3126 = vunpack.c.l.b16 %v563
    %v3127 = vunpack.c.l.b16 %v564
    %v3128 = vunpack.c.l.b16 %v565
    %v3129 = vunpack.c.l.b16 %v566
    %v3130 = vunpack.c.l.b16 %v567
    %v3131 = vunpack.c.l.b16 %v568
    %v3132 = vunpack.c.l.b16 %v569
    %v3133 = vunpack.c.l.b16 %v570
    %v3134 = vunpack.c.l.b16 %v571
    %v3135 = vunpack.c.l.b16 %v572
    %v3136 = vunpack.c.l.b16 %v573
    %v3137 = vunpack.c.l.b16 %v574
    %v3138 = vunpack.c.l.b16 %v575
    %v3139 = vunpack.c.l.b16 %v576
    %v3140 = vunpack.c.l.b16 %v577
    %v3141 = vunpack.c.l.b16 %v578
    %v3142 = vunpack.c.l.b16 %v579
    %v3143 = vunpack.c.l.b16 %v580
    %v3144 = vunpack.c.l.b16 %v581
    %v3145 = vunpack.c.l.b16 %v582
    %v3146 = vunpack.c.l.b16 %v583
    %v3147 = vunpack.c.l.b16 %v584
    %v3148 = vunpack.c.l.b16 %v585
    %v3149 = vunpack.c.l.b16 %v586
    %v3150 = vunpack.c.l.b16 %v587
    %v3151 = vunpack.c.l.b16 %v588
    %v3152 = vunpack.c.l.b16 %v589
    %v3153 = vunpack.c.l.b16 %v590
    %v3154 = vunpack.c.l.b16 %v591
    %v3155 = vunpack.c.l.b16 %v592
    %v3156 = vunpack.c.l.b16 %v593
    %v3157 = vunpack.c.l.b16 %v594
    %v3158 = vunpack.c.l.b16 %v595
    %v3159 = vunpack.c.l.b16 %v596
    %v3160 = vunpack.c.l.b16 %v597
    %v3161 = vunpack.c.l.b16 %v598
    %v3162 = vunpack.c.l.b16 %v599
    %v3163 = vunpack.c.l.b16 %v600
    %v3164 = vunpack.c.l.b16 %v601
    %v3165 = vunpack.c.l.b16 %v602
    %v3166 = vunpack.c.l.b16 %v603
    %v3167 = vunpack.c.l.b16 %v604
    %v3168 = vunpack.c.l.b16 %v605
    %v3169 = vunpack.c.l.b16 %v606
    %v3170 = vunpack.c.l.b16 %v607
    %v3171 = vunpack.c.l.b16 %v608
    %v3172 = vunpack.c.l.b16 %v609
    %v3173 = vunpack.c.l.b16 %v610
    %v3174 = vunpack.c.l.b16 %v611
    %v3175 = vunpack.c.l.b16 %v612
    %v3176 = vunpack.c.l.b16 %v613
    %v3177 = vunpack.c.l.b16 %v614
    %v3178 = vunpack.c.l.b16 %v615
    %v3179 = vunpack.c.l.b16 %v616
    %v3180 = vunpack.c.l.b16 %v617
    %v3181 = vunpack.c.l.b16 %v618
    %v3182 = vunpack.c.l.b16 %v619
    %v3183 = vunpack.c.l.b16 %v620
    %v3184 = vunpack.c.l.b16 %v621
    %v3185 = vunpack.c.l.b16 %v622
    %v3186 = vunpack.c.l.b16 %v623
    %v3187 = vunpack.c.l.b16 %v624
    %v3188 = vunpack.c.l.b16 %v625
    %v3189 = vunpack.c.l.b16 %v626
    %v3190 = vunpack.c.l.b16 %v627
    %v3191 = vunpack.c.l.b16 %v628
    %v3192 = vunpack.c.l.b16 %v629
    %v3193 = vunpack.c.l.b16 %v630
    %v3194 = vunpack.c.l.b16 %v631
    %v3195 = vunpack.c.l.b16 %v632
    %v3196 = vunpack.c.l.b16 %v633
    %v3197 = vunpack.c.l.b16 %v634
    %v3198 = vunpack.c.l.b16 %v635
    %v3199 = vunpack.c.l.b16 %v636
    %v3200 = vunpack.c.l.b16 %v637
    %v3201 = vunpack.c.l.b16 %v638
    %v3202 = vunpack.c.l.b16 %v639
    %v3203 = vunpack.c.l.b16 %v640
    %v3204 = vunpack.c.l.b16 %v641
    %v3205 = vunpack.c.l.b16 %v642
    %v3206 = vunpack.c.l.b16 %v643
    %v3207 = vunpack.c.l.b16 %v644
    %v3208 = vunpack.c.l.b16 %v645
    %v3209 = vunpack.c.l.b16 %v646
    %v3210 = vunpack.c.l.b16 %v647
    %v3211 = vunpack.c.l.b16 %v648
    %v3212 = vunpack.c.l.b16 %v649
    %v3213 = vunpack.c.l.b16 %v650
    %v3214 = vunpack.c.l.b16 %v651
    %v3215 = vunpack.c.l.b16 %v652
    %v3216 = vunpack.c.l.b16 %v653
    %v3217 = vunpack.c.l.b16 %v654
    %v3218 = vunpack.c.l.b16 %v655
    %v3219 = vunpack.c.l.b16 %v656
    %v3220 = vunpack.c.l.b16 %v657
    %v3221 = vunpack.c.l.b16 %v658
    %v3222 = vunpack.c.l.b16 %v659
    %v3223 = vunpack.c.l.b16 %v660
    %v3224 = vunpack.c.l.b16 %v661
    %v3225 = vunpack.c.l.b16 %v662
    %v3226 = vunpack.c.l.b16 %v663
    %v3227 = vunpack.c.l.b16 %v664
    %v3228 = vunpack.c.l.b16 %v665
    %v3229 = vunpack.c.l.b16 %v666
    %v3230 = vunpack.c.l.b16 %v667
    %v3231 = vunpack.c.l.b16 %v668
    %v3232 = vunpack.c.l.b16 %v669
    %v3233 = vunpack.c.l.b16 %v670
    %v3234 = vunpack.c.l.b16 %v671
    %v3235 = vunpack.c.l.b16 %v672
    %v3236 = vunpack.c.l.b16 %v673
    %v3237 = vunpack.c.l.b16 %v674
    %v3238 = vunpack.c.l.b16 %v675
    %v3239 = vunpack.c.l.b16 %v676
    %v3240 = vunpack.c.l.b16 %v677
    %v3241 = vunpack.c.l.b16 %v678
    %v3242 = vunpack.c.l.b16 %v679
    %v3243 = vunpack.c.l.b16 %v680
    %v3244 = vunpack.c.l.b16 %v681
    %v3245 = vunpack.c.l.b16 %v682
    %v3246 = vunpack.c.l.b16 %v683
    %v3247 = vunpack.c.l.b16 %v684
    %v3248 = vunpack.c.l.b16 %v685
    %v3249 = vunpack.c.l.b16 %v686
    %v3250 = vunpack.c.l.b16 %v687
    %v3251 = vunpack.c.l.b16 %v688
    %v3252 = vunpack.c.l.b16 %v689
    %v3253 = vunpack.c.l.b16 %v690
    %v3254 = vunpack.c.l.b16 %v691
    %v3255 = vunpack.c.l.b16 %v692
    %v3256 = vunpack.c.l.b16 %v693
    %v3257 = vunpack.c.l.b16 %v694
    %v3258 = vunpack.c.l.b16 %v695
    %v3259 = vunpack.c.l.b16 %v696
    %v3260 = vunpack.c.l.b16 %v697
    %v3261 = vunpack.c.l.b16 %v698
    %v3262 = vunpack.c.l.b16 %v699
    %v3263 = vunpack.c.l.b16 %v700
    %v3264 = vunpack.c.l.b16 %v701
    %v3265 = vunpack.c.l.b16 %v702
    %v3266 = vunpack.c.l.b16 %v703
    %v3267 = vunpack.c.l.b16 %v704
    %v3268 = vunpack.c.l.b16 %v705
    %v3269 = vunpack.c.l.b16 %v706
    %v3270 = vunpack.c.l.b16 %v707
    %v3271 = vunpack.c.l.b16 %v708
    %v3272 = vunpack.c.l.b16 %v709
    %v3273 = vunpack.c.l.b16 %v710
    %v3274 = vunpack.c.l.b16 %v711
    %v3275 = vunpack.c.l.b16 %v712
    %v3276 = vunpack.c.l.b16 %v713
    %v3277 = vunpack.c.l.b16 %v714
    %v3278 = vunpack.c.l.b16 %v715
    %v3279 = vunpack.c.l.b16 %v716
    %v3280 = vunpack.c.l.b16 %v717
    %v3281 = vunpack.c.l.b16 %v718
    %v3282 = vunpack.c.l.b16 %v719
    %v3283 = vunpack.c.l.b16 %v720
    %v3284 = vunpack.c.l.b16 %v721
    %v3285 = vunpack.c.l.b16 %v722
    %v3286 = vunpack.c.l.b16 %v723
    %v3287 = vunpack.c.l.b16 %v724
    %v3288 = vunpack.c.l.b16 %v725
    %v3289 = vunpack.c.l.b16 %v726
    %v3290 = vunpack.c.l.b16 %v727
    %v3291 = vunpack.c.l.b16 %v728
    %v3292 = vunpack.c.l.b16 %v729
    %v3293 = vunpack.c.l.b16 %v730
    %v3294 = vunpack.c.l.b16 %v731
    %v3295 = vunpack.c.l.b16 %v732
    %v3296 = vunpack.c.l.b16 %v733
    %v3297 = vunpack.c.l.b16 %v734
    %v3298 = vunpack.c.l.b16 %v735
    %v3299 = vunpack.c.l.b16 %v736
    %v3300 = vunpack.c.l.b16 %v737
    %v3301 = vunpack.c.l.b16 %v738
    %v3302 = vunpack.c.l.b16 %v739
    %v3303 = vunpack.c.l.b16 %v740
    %v3304 = vunpack.c.l.b16 %v741
    %v3305 = vunpack.c.l.b16 %v742
    %v3306 = vunpack.c.l.b16 %v743
    %v3307 = vunpack.c.l.b16 %v744
    %v3308 = vunpack.c.l.b16 %v745
    %v3309 = vunpack.c.l.b16 %v746
    %v3310 = vunpack.c.l.b16 %v747
    %v3311 = vunpack.c.l.b16 %v748
    %v3312 = vunpack.c.l.b16 %v749
    %v3313 = vunpack.c.l.b16 %v750
    %v3314 = vunpack.c.l.b16 %v751
    %v3315 = vunpack.c.l.b16 %v752
    %v3316 = vunpack.c.l.b16 %v753
    %v3317 = vunpack.c.l.b16 %v754
    %v3318 = vunpack.c.l.b16 %v755
    %v3319 = vunpack.c.l.b16 %v756
    %v3320 = vunpack.c.l.b16 %v757
    %v3321 = vunpack.c.l.b16 %v758
    %v3322 = vunpack.c.l.b16 %v759
    %v3323 = vunpack.c.l.b16 %v760
    %v3324 = vunpack.c.l.b16 %v761
    %v3325 = vunpack.c.l.b16 %v762
    %v3326 = vunpack.c.l.b16 %v763
    %v3327 = vunpack.c.l.b16 %v764
    %v3328 = vunpack.c.l.b16 %v765
    %v3329 = vunpack.c.l.b16 %v766
    %v3330 = vunpack.c.l.b16 %v767
    %v3331 = vunpack.c.l.b16 %v768
    %v3332 = vunpack.c.l.b16 %v769
    %v3333 = vunpack.c.l.b16 %v770
    %v3334 = vunpack.c.l.b16 %v771
    %v3335 = vunpack.c.l.b16 %v772
    %v3336 = vunpack.c.l.b16 %v773
    %v3337 = vunpack.c.l.b16 %v774
    %v3338 = vunpack.c.l.b16 %v775
    %v3339 = vunpack.c.l.b16 %v776
    %v3340 = vunpack.c.l.b16 %v777
    %v3341 = vunpack.c.l.b16 %v778
    %v3342 = vunpack.c.l.b16 %v779
    %v3343 = vunpack.c.l.b16 %v780
    %v3344 = vunpack.c.l.b16 %v781
    %v3345 = vunpack.c.l.b16 %v782
    %v3346 = vunpack.c.l.b16 %v783
    %v3347 = vunpack.c.l.b16 %v784
    %v3348 = vunpack.c.l.b16 %v785
    %v3349 = vunpack.c.l.b16 %v786
    %v3350 = vunpack.c.l.b16 %v787
    %v3351 = vunpack.c.l.b16 %v788
    %v3352 = vunpack.c.l.b16 %v789
    %v3353 = vunpack.c.l.b16 %v790
    %v3354 = vunpack.c.l.b16 %v791
    %v3355 = vunpack.c.l.b16 %v792
    %v3356 = vunpack.c.l.b16 %v793
    %v3357 = vunpack.c.l.b16 %v794
    %v3358 = vunpack.c.l.b16 %v795
    %v3359 = vunpack.c.l.b16 %v796
    %v3360 = vunpack.c.l.b16 %v797
    %v3361 = vunpack.c.l.b16 %v798
    %v3362 = vunpack.c.l.b16 %v799
    %v3363 = vunpack.c.l.b16 %v800
    %v3364 = vunpack.c.l.b16 %v801
    %v3365 = vunpack.c.l.b16 %v802
    %v3366 = vunpack.c.l.b16 %v803
    %v3367 = vunpack.c.l.b16 %v804
    %v3368 = vunpack.c.l.b16 %v805
    %v3369 = vunpack.c.l.b16 %v806
    %v3370 = vunpack.c.l.b16 %v807
    %v3371 = vunpack.c.l.b16 %v808
    %v3372 = vunpack.c.l.b16 %v809
    %v3373 = vunpack.c.l.b16 %v810
    %v3374 = vunpack.c.l.b16 %v811
    %v3375 = vunpack.c.l.b16 %v812
    %v3376 = vunpack.c.l.b16 %v813
    %v3377 = vunpack.c.l.b16 %v814
    %v3378 = vunpack.c.l.b16 %v815
    %v3379 = vunpack.c.l.b16 %v816
    %v3380 = vunpack.c.l.b16 %v817
    %v3381 = vunpack.c.l.b16 %v818
    %v3382 = vunpack.c.l.b16 %v819
    %v3383 = vunpack.c.l.b16 %v820
    %v3384 = vunpack.c.l.b16 %v821
    %v3385 = vunpack.c.l.b16 %v822
    %v3386 = vunpack.c.l.b16 %v823
    %v3387 = vunpack.c.l.b16 %v824
    %v3388 = vunpack.c.l.b16 %v825
    %v3389 = vunpack.c.l.b16 %v826
    %v3390 = vunpack.c.l.b16 %v827
    %v3391 = vunpack.c.l.b16 %v828
    %v3392 = vunpack.c.l.b16 %v829
    %v3393 = vunpack.c.l.b16 %v830
    %v3394 = vunpack.c.l.b16 %v831
    %v3395 = vunpack.c.l.b16 %v832
    %v3396 = vunpack.c.l.b16 %v833
    %v3397 = vunpack.c.l.b16 %v834
    %v3398 = vunpack.c.l.b16 %v835
    %v3399 = vunpack.c.l.b16 %v836
    %v3400 = vunpack.c.l.b16 %v837
    %v3401 = vunpack.c.l.b16 %v838
    %v3402 = vunpack.c.l.b16 %v839
    %v3403 = vunpack.c.l.b16 %v840
    %v3404 = vunpack.c.l.b16 %v841
    %v3405 = vunpack.c.l.b16 %v842
    %v3406 = vunpack.c.l.b16 %v843
    %v3407 = vunpack.c.l.b16 %v844
    %v3408 = vunpack.c.l.b16 %v845
    %v3409 = vunpack.c.l.b16 %v846
    %v3410 = vunpack.c.l.b16 %v847
    %v3411 = vunpack.c.l.b16 %v848
    %v3412 = vunpack.c.l.b16 %v849
    %v3413 = vunpack.c.l.b16 %v850
    %v3414 = vunpack.c.l.b16 %v851
    %v3415 = vunpack.c.l.b16 %v852
    %v3416 = vunpack.c.l.b16 %v853
    %v3417 = vunpack.c.l.b16 %v854
    %v3418 = vunpack.c.l.b16 %v855
    %v3419 = vunpack.c.l.b16 %v856
    %v3420 = vunpack.c.l.b16 %v857
    %v3421 = vunpack.c.l.b16 %v858
    %v3422 = vunpack.c.l.b16 %v859
    %v3423 = vunpack.c.l.b16 %v860
    %v3424 = vunpack.c.l.b16 %v861
    %v3425 = vunpack.c.l.b16 %v862
    %v3426 = vunpack.c.l.b16 %v863
    %v3427 = vunpack.c.l.b16 %v864
    %v3428 = vunpack.c.l.b16 %v865
    %v3429 = vunpack.c.l.b16 %v866
    %v3430 = vunpack.c.l.b16 %v867
    %v3431 = vunpack.c.l.b16 %v868
    %v3432 = vunpack.c.l.b16 %v869
    %v3433 = vunpack.c.l.b16 %v870
    %v3434 = vunpack.c.l.b16 %v871
    %v3435 = vunpack.c.l.b16 %v872
    %v3436 = vunpack.c.l.b16 %v873
    %v3437 = vunpack.c.l.b16 %v874
    %v3438 = vunpack.c.l.b16 %v875
    %v3439 = vunpack.c.l.b16 %v876
    %v3440 = vunpack.c.l.b16 %v877
    %v3441 = vunpack.c.l.b16 %v878
    %v3442 = vunpack.c.l.b16 %v879
    %v3443 = vunpack.c.l.b16 %v880
    %v3444 = vunpack.c.l.b16 %v881
    %v3445 = vunpack.c.l.b16 %v882
    %v3446 = vunpack.c.l.b16 %v883
    %v3447 = vunpack.c.l.b16 %v884
    %v3448 = vunpack.c.l.b16 %v885
    %v3449 = vunpack.c.l.b16 %v886
    %v3450 = vunpack.c.l.b16 %v887
    %v3451 = vunpack.c.l.b16 %v888
    %v3452 = vunpack.c.l.b16 %v889
    %v3453 = vunpack.c.l.b16 %v890
    %v3454 = vunpack.c.l.b16 %v891
    %v3455 = vunpack.c.l.b16 %v892
    %v3456 = vunpack.c.l.b16 %v893
    %v3457 = vunpack.c.l.b16 %v894
    %v3458 = vunpack.c.l.b16 %v895
    %v3459 = vunpack.c.l.b16 %v896
    %v3460 = vunpack.c.l.b16 %v897
    %v3461 = vunpack.c.l.b16 %v898
    %v3462 = vunpack.c.l.b16 %v899
    %v3463 = vunpack.c.l.b16 %v900
    %v3464 = vunpack.c.l.b16 %v901
    %v3465 = vunpack.c.l.b16 %v902
    %v3466 = vunpack.c.l.b16 %v903
    %v3467 = vunpack.c.l.b16 %v904
    %v3468 = vunpack.c.l.b16 %v905
    %v3469 = vunpack.c.l.b16 %v906
    %v3470 = vunpack.c.l.b16 %v907
    %v3471 = vunpack.c.l.b16 %v908
    %v3472 = vunpack.c.l.b16 %v909
    %v3473 = vunpack.c.l.b16 %v910
    %v3474 = vunpack.c.l.b16 %v911
    %v3475 = vunpack.c.l.b16 %v912
    %v3476 = vunpack.c.l.b16 %v913
    %v3477 = vunpack.c.l.b16 %v914
    %v3478 = vunpack.c.l.b16 %v915
    %v3479 = vunpack.c.l.b16 %v916
    %v3480 = vunpack.c.l.b16 %v917
    %v3481 = vunpack.c.l.b16 %v918
    %v3482 = vunpack.c.l.b16 %v919
    %v3483 = vunpack.c.l.b16 %v920
    %v3484 = vunpack.c.l.b16 %v921
    %v3485 = vunpack.c.l.b16 %v922
    %v3486 = vunpack.c.l.b16 %v923
    %v3487 = vunpack.c.l.b16 %v924
    %v3488 = vunpack.c.l.b16 %v925
    %v3489 = vunpack.c.l.b16 %v926
    %v3490 = vunpack.c.l.b16 %v927
    %v3491 = vunpack.c.l.b16 %v928
    %v3492 = vunpack.c.l.b16 %v929
    %v3493 = vunpack.c.l.b16 %v930
    %v3494 = vunpack.c.l.b16 %v931
    %v3495 = vunpack.c.l.b16 %v932
    %v3496 = vunpack.c.l.b16 %v933
    %v3497 = vunpack.c.l.b16 %v934
    %v3498 = vunpack.c.l.b16 %v935
    %v3499 = vunpack.c.l.b16 %v936
    %v3500 = vunpack.c.l.b16 %v937
    %v3501 = vunpack.c.l.b16 %v938
    %v3502 = vunpack.c.l.b16 %v939
    %v3503 = vunpack.c.l.b16 %v940
    %v3504 = vunpack.c.l.b16 %v941
    %v3505 = vunpack.c.l.b16 %v942
    %v3506 = vunpack.c.l.b16 %v943
    %v3507 = vunpack.c.l.b16 %v944
    %v3508 = vunpack.c.l.b16 %v945
    %v3509 = vunpack.c.l.b16 %v946
    %v3510 = vunpack.c.l.b16 %v947
    %v3511 = vunpack.c.l.b16 %v948
    %v3512 = vunpack.c.l.b16 %v949
    %v3513 = vunpack.c.l.b16 %v950
    %v3514 = vunpack.c.l.b16 %v951
    %v3515 = vunpack.c.l.b16 %v952
    %v3516 = vunpack.c.l.b16 %v953
    %v3517 = vunpack.c.l.b16 %v954
    %v3518 = vunpack.c.l.b16 %v955
    %v3519 = vunpack.c.l.b16 %v956
    %v3520 = vunpack.c.l.b16 %v957
    %v3521 = vunpack.c.l.b16 %v958
    %v3522 = vunpack.c.l.b16 %v959
    %v3523 = vunpack.c.l.b16 %v960
    %v3524 = vunpack.c.l.b16 %v961
    %v3525 = vunpack.c.l.b16 %v962
    %v3526 = vunpack.c.l.b16 %v963
    %v3527 = vunpack.c.l.b16 %v964
    %v3528 = vunpack.c.l.b16 %v965
    %v3529 = vunpack.c.l.b16 %v966
    %v3530 = vunpack.c.l.b16 %v967
    %v3531 = vunpack.c.l.b16 %v968
    %v3532 = vunpack.c.l.b16 %v969
    %v3533 = vunpack.c.l.b16 %v970
    %v3534 = vunpack.c.l.b16 %v971
    %v3535 = vunpack.c.l.b16 %v972
    %v3536 = vunpack.c.l.b16 %v973
    %v3537 = vunpack.c.l.b16 %v974
    %v3538 = vunpack.c.l.b16 %v975
    %v3539 = vunpack.c.l.b16 %v976
    %v3540 = vunpack.c.l.b16 %v977
    %v3541 = vunpack.c.l.b16 %v978
    %v3542 = vunpack.c.l.b16 %v979
    %v3543 = vunpack.c.l.b16 %v980
    %v3544 = vunpack.c.l.b16 %v981
    %v3545 = vunpack.c.l.b16 %v982
    %v3546 = vunpack.c.l.b16 %v983
    %v3547 = vunpack.c.l.b16 %v984
    %v3548 = vunpack.c.l.b16 %v985
    %v3549 = vunpack.c.l.b16 %v986
    %v3550 = vunpack.c.l.b16 %v987
    %v3551 = vunpack.c.l.b16 %v988
    %v3552 = vunpack.c.l.b16 %v989
    %v3553 = vunpack.c.l.b16 %v990
    %v3554 = vunpack.c.l.b16 %v991
    %v3555 = vunpack.c.l.b16 %v992
    %v3556 = vunpack.c.l.b16 %v993
    %v3557 = vunpack.c.l.b16 %v994
    %v3558 = vunpack.c.l.b16 %v995
    %v3559 = vunpack.c.l.b16 %v996
    %v3560 = vunpack.c.l.b16 %v997
    %v3561 = vunpack.c.l.b16 %v998
    %v3562 = vunpack.c.l.b16 %v999
    %v3563 = vunpack.c.l.b16 %v1000
    %v3564 = vunpack.c.l.b16 %v1001
    %v3565 = vunpack.c.l.b16 %v1002
    %v3566 = vunpack.c.l.b16 %v1003
    %v3567 = vunpack.c.l.b16 %v1004
    %v3568 = vunpack.c.l.b16 %v1005
    %v3569 = vunpack.c.l.b16 %v1006
    %v3570 = vunpack.c.l.b16 %v1007
    %v3571 = vunpack.c.l.b16 %v1008
    %v3572 = vunpack.c.l.b16 %v1009
    %v3573 = vunpack.c.l.b16 %v1010
    %v3574 = vunpack.c.l.b16 %v1011
    %v3575 = vunpack.c.l.b16 %v1012
    %v3576 = vunpack.c.l.b16 %v1013
    %v3577 = vunpack.c.l.b16 %v1014
    %v3578 = vunpack.c.l.b16 %v1015
    %v3579 = vunpack.c.l.b16 %v1016
    %v3580 = vunpack.c.l.b16 %v1017
    %v3581 = vunpack.c.l.b16 %v1018
    %v3582 = vunpack.c.l.b16 %v1019
    %v3583 = vunpack.c.l.b16 %v1020
    %v3584 = vunpack.c.l.b16 %v1021
    %v3585 = vunpack.c.l.b16 %v1022
    %v3586 = vunpack.c.l.b16 %v1023
    %v3587 = vunpack.c.l.b16 %v1024
    %v3588 = vunpack.c.l.b16 %v1025
    %v3589 = vunpack.c.l.b16 %v1026
    %v3590 = vunpack.c.l.b16 %v1027
    %v3591 = vunpack.c.l.b16 %v1028
    %v3592 = vunpack.c.l.b16 %v1029
    %v3593 = vunpack.c.l.b16 %v1030
    %v3594 = vunpack.c.l.b16 %v1031
    %v3595 = vunpack.c.l.b16 %v1032
    %v3596 = vunpack.c.l.b16 %v1033
    %v3597 = vunpack.c.l.b16 %v1034
    %v3598 = vunpack.c.l.b16 %v1035
    %v3599 = vunpack.c.l.b16 %v1036
    %v3600 = vunpack.c.l.b16 %v1037
    %v3601 = vunpack.c.l.b16 %v1038
    %v3602 = vunpack.c.l.b16 %v1039
    %v3603 = vunpack.c.l.b16 %v1040
    %v3604 = vunpack.c.l.b16 %v1041
    %v3605 = vunpack.c.l.b16 %v1042
    %v3606 = vunpack.c.l.b16 %v1043
    %v3607 = vunpack.c.l.b16 %v1044
    %v3608 = vunpack.c.l.b16 %v1045
    %v3609 = vunpack.c.l.b16 %v1046
    %v3610 = vunpack.c.l.b16 %v1047
    %v3611 = vunpack.c.l.b16 %v1048
    %v3612 = vunpack.c.l.b16 %v1049
    %v3613 = vunpack.c.l.b16 %v1050
    %v3614 = vunpack.c.l.b16 %v1051
    %v3615 = vunpack.c.l.b16 %v1052
    %v3616 = vunpack.c.l.b16 %v1053
    %v3617 = vunpack.c.l.b16 %v1054
    %v3618 = vunpack.c.l.b16 %v1055
    %v3619 = vunpack.c.l.b16 %v1056
    %v3620 = vunpack.c.l.b16 %v1057
    %v3621 = vunpack.c.l.b16 %v1058
    %v3622 = vunpack.c.l.b16 %v1059
    %v3623 = vunpack.c.l.b16 %v1060
    %v3624 = vunpack.c.l.b16 %v1061
    %v3625 = vunpack.c.l.b16 %v1062
    %v3626 = vunpack.c.l.b16 %v1063
    %v3627 = vunpack.c.l.b16 %v1064
    %v3628 = vunpack.c.l.b16 %v1065
    %v3629 = vunpack.c.l.b16 %v1066
    %v3630 = vunpack.c.l.b16 %v1067
    %v3631 = vunpack.c.l.b16 %v1068
    %v3632 = vunpack.c.l.b16 %v1069
    %v3633 = vunpack.c.l.b16 %v1070
    %v3634 = vunpack.c.l.b16 %v1071
    %v3635 = vunpack.c.l.b16 %v1072
    %v3636 = vunpack.c.l.b16 %v1073
    %v3637 = vunpack.c.l.b16 %v1074
    %v3638 = vunpack.c.l.b16 %v1075
    %v3639 = vunpack.c.l.b16 %v1076
    %v3640 = vunpack.c.l.b16 %v1077
    %v3641 = vunpack.c.l.b16 %v1078
    %v3642 = vunpack.c.l.b16 %v1079
    %v3643 = vunpack.c.l.b16 %v1080
    %v3644 = vunpack.c.l.b16 %v1081
    %v3645 = vunpack.c.l.b16 %v1082
    %v3646 = vunpack.c.l.b16 %v1083
    %v3647 = vunpack.c.l.b16 %v1084
    %v3648 = vunpack.c.l.b16 %v1085
    %v3649 = vunpack.c.l.b16 %v1086
    %v3650 = vunpack.c.l.b16 %v1087
    %v3651 = vunpack.c.l.b16 %v1088
    %v3652 = vunpack.c.l.b16 %v1089
    %v3653 = vunpack.c.l.b16 %v1090
    %v3654 = vunpack.c.l.b16 %v1091
    %v3655 = vunpack.c.l.b16 %v1092
    %v3656 = vunpack.c.l.b16 %v1093
    %v3657 = vunpack.c.l.b16 %v1094
    %v3658 = vunpack.c.l.b16 %v1095
    %v3659 = vunpack.c.l.b16 %v1096
    %v3660 = vunpack.c.l.b16 %v1097
    %v3661 = vunpack.c.l.b16 %v1098
    %v3662 = vunpack.c.l.b16 %v1099
    %v3663 = vunpack.c.l.b16 %v1100
    %v3664 = vunpack.c.l.b16 %v1101
    %v3665 = vunpack.c.l.b16 %v1102
    %v3666 = vunpack.c.l.b16 %v1103
    %v3667 = vunpack.c.l.b16 %v1104
    %v3668 = vunpack.c.l.b16 %v1105
    %v3669 = vunpack.c.l.b16 %v1106
    %v3670 = vunpack.c.l.b16 %v1107
    %v3671 = vunpack.c.l.b16 %v1108
    %v3672 = vunpack.c.l.b16 %v1109
    %v3673 = vunpack.c.l.b16 %v1110
    %v3674 = vunpack.c.l.b16 %v1111
    %v3675 = vunpack.c.l.b16 %v1112
    %v3676 = vunpack.c.l.b16 %v1113
    %v3677 = vunpack.c.l.b16 %v1114
    %v3678 = vunpack.c.l.b16 %v1115
    %v3679 = vunpack.c.l.b16 %v1116
    %v3680 = vunpack.c.l.b16 %v1117
    %v3681 = vunpack.c.l.b16 %v1118
    %v3682 = vunpack.c.l.b16 %v1119
    %v3683 = vunpack.c.l.b16 %v1120
    %v3684 = vunpack.c.l.b16 %v1121
    %v3685 = vunpack.c.l.b16 %v1122
    %v3686 = vunpack.c.l.b16 %v1123
    %v3687 = vunpack.c.l.b16 %v1124
    %v3688 = vunpack.c.l.b16 %v1125
    %v3689 = vunpack.c.l.b16 %v1126
    %v3690 = vunpack.c.l.b16 %v1127
    %v3691 = vunpack.c.l.b16 %v1128
    %v3692 = vunpack.c.l.b16 %v1129
    %v3693 = vunpack.c.l.b16 %v1130
    %v3694 = vunpack.c.l.b16 %v1131
    %v3695 = vunpack.c.l.b16 %v1132
    %v3696 = vunpack.c.l.b16 %v1133
    %v3697 = vunpack.c.l.b16 %v1134
    %v3698 = vunpack.c.l.b16 %v1135
    %v3699 = vunpack.c.l.b16 %v1136
    %v3700 = vunpack.c.l.b16 %v1137
    %v3701 = vunpack.c.l.b16 %v1138
    %v3702 = vunpack.c.l.b16 %v1139
    %v3703 = vunpack.c.l.b16 %v1140
    %v3704 = vunpack.c.l.b16 %v1141
    %v3705 = vunpack.c.l.b16 %v1142
    %v3706 = vunpack.c.l.b16 %v1143
    %v3707 = vunpack.c.l.b16 %v1144
    %v3708 = vunpack.c.l.b16 %v1145
    %v3709 = vunpack.c.l.b16 %v1146
    %v3710 = vunpack.c.l.b16 %v1147
    %v3711 = vunpack.c.l.b16 %v1148
    %v3712 = vunpack.c.l.b16 %v1149
    %v3713 = vunpack.c.l.b16 %v1150
    %v3714 = vunpack.c.l.b16 %v1151
    %v3715 = vunpack.c.l.b16 %v1152
    %v3716 = vunpack.c.l.b16 %v1153
    %v3717 = vunpack.c.l.b16 %v1154
    %v3718 = vunpack.c.l.b16 %v1155
    %v3719 = vunpack.c.l.b16 %v1156
    %v3720 = vunpack.c.l.b16 %v1157
    %v3721 = vunpack.c.l.b16 %v1158
    %v3722 = vunpack.c.l.b16 %v1159
    %v3723 = vunpack.c.l.b16 %v1160
    %v3724 = vunpack.c.l.b16 %v1161
    %v3725 = vunpack.c.l.b16 %v1162
    %v3726 = vunpack.c.l.b16 %v1163
    %v3727 = vunpack.c.l.b16 %v1164
    %v3728 = vunpack.c.l.b16 %v1165
    %v3729 = vunpack.c.l.b16 %v1166
    %v3730 = vunpack.c.l.b16 %v1167
    %v3731 = vunpack.c.l.b16 %v1168
    %v3732 = vunpack.c.l.b16 %v1169
    %v3733 = vunpack.c.l.b16 %v1170
    %v3734 = vunpack.c.l.b16 %v1171
    %v3735 = vunpack.c.l.b16 %v1172
    %v3736 = vunpack.c.l.b16 %v1173
    %v3737 = vunpack.c.l.b16 %v1174
    %v3738 = vunpack.c.l.b16 %v1175
    %v3739 = vunpack.c.l.b16 %v1176
    %v3740 = vunpack.c.l.b16 %v1177
    %v3741 = vunpack.c.l.b16 %v1178
    %v3742 = vunpack.c.l.b16 %v1179
    %v3743 = vunpack.c.l.b16 %v1180
    %v3744 = vunpack.c.l.b16 %v1181
    %v3745 = vunpack.c.l.b16 %v1182
    %v3746 = vunpack.c.l.b16 %v1183
    %v3747 = vunpack.c.l.b16 %v1184
    %v3748 = vunpack.c.l.b16 %v1185
    %v3749 = vunpack.c.l.b16 %v1186
    %v3750 = vunpack.c.l.b16 %v1187
    %v3751 = vunpack.c.l.b16 %v1188
    %v3752 = vunpack.c.l.b16 %v1189
    %v3753 = vunpack.c.l.b16 %v1190
    %v3754 = vunpack.c.l.b16 %v1191
    %v3755 = vunpack.c.l.b16 %v1192
    %v3756 = vunpack.c.l.b16 %v1193
    %v3757 = vunpack.c.l.b16 %v1194
    %v3758 = vunpack.c.l.b16 %v1195
    %v3759 = vunpack.c.l.b16 %v1196
    %v3760 = vunpack.c.l.b16 %v1197
    %v3761 = vunpack.c.l.b16 %v1198
    %v3762 = vunpack.c.l.b16 %v1199
    %v3763 = vunpack.c.l.b16 %v1200
    %v3764 = vunpack.c.l.b16 %v1201
    %v3765 = vunpack.c.l.b16 %v1202
    %v3766 = vunpack.c.l.b16 %v1203
    %v3767 = vunpack.c.l.b16 %v1204
    %v3768 = vunpack.c.l.b16 %v1205
    %v3769 = vunpack.c.l.b16 %v1206
    %v3770 = vunpack.c.l.b16 %v1207
    %v3771 = vunpack.c.l.b16 %v1208
    %v3772 = vunpack.c.l.b16 %v1209
    %v3773 = vunpack.c.l.b16 %v1210
    %v3774 = vunpack.c.l.b16 %v1211
    %v3775 = vunpack.c.l.b16 %v1212
    %v3776 = vunpack.c.l.b16 %v1213
    %v3777 = vunpack.c.l.b16 %v1214
    %v3778 = vunpack.c.l.b16 %v1215
    %v3779 = vunpack.c.l.b16 %v1216
    %v3780 = vunpack.c.l.b16 %v1217
    %v3781 = vunpack.c.l.b16 %v1218
    %v3782 = vunpack.c.l.b16 %v1219
    %v3783 = vunpack.c.l.b16 %v1220
    %v3784 = vunpack.c.l.b16 %v1221
    %v3785 = vunpack.c.l.b16 %v1222
    %v3786 = vunpack.c.l.b16 %v1223
    %v3787 = vunpack.c.l.b16 %v1224
    %v3788 = vunpack.c.l.b16 %v1225
    %v3789 = vunpack.c.l.b16 %v1226
    %v3790 = vunpack.c.l.b16 %v1227
    %v3791 = vunpack.c.l.b16 %v1228
    %v3792 = vunpack.c.l.b16 %v1229
    %v3793 = vunpack.c.l.b16 %v1230
    %v3794 = vunpack.c.l.b16 %v1231
    %v3795 = vunpack.c.l.b16 %v1232
    %v3796 = vunpack.c.l.b16 %v1233
    %v3797 = vunpack.c.l.b16 %v1234
    %v3798 = vunpack.c.l.b16 %v1235
    %v3799 = vunpack.c.l.b16 %v1236
    %v3800 = vunpack.c.l.b16 %v1237
    %v3801 = vunpack.c.l.b16 %v1238
    %v3802 = vunpack.c.l.b16 %v1239
    %v3803 = vunpack.c.l.b16 %v1240
    %v3804 = vunpack.c.l.b16 %v1241
    %v3805 = vunpack.c.l.b16 %v1242
    %v3806 = vunpack.c.l.b16 %v1243
    %v3807 = vunpack.c.l.b16 %v1244
    %v3808 = vunpack.c.l.b16 %v1245
    %v3809 = vunpack.c.l.b16 %v1246
    %v3810 = vunpack.c.l.b16 %v1247
    %v3811 = vunpack.c.l.b16 %v1248
    %v3812 = vunpack.c.l.b16 %v1249
    %v3813 = vunpack.c.l.b16 %v1250
    %v3814 = vunpack.c.l.b16 %v1251
    %v3815 = vunpack.c.l.b16 %v1252
    %v3816 = vunpack.c.l.b16 %v1253
    %v3817 = vunpack.c.l.b16 %v1254
    %v3818 = vunpack.c.l.b16 %v1255
    %v3819 = vunpack.c.l.b16 %v1256
    %v3820 = vunpack.c.l.b16 %v1257
    %v3821 = vunpack.c.l.b16 %v1258
    %v3822 = vunpack.c.l.b16 %v1259
    %v3823 = vunpack.c.l.b16 %v1260
    %v3824 = vunpack.c.l.b16 %v1261
    %v3825 = vunpack.c.l.b16 %v1262
    %v3826 = vunpack.c.l.b16 %v1263
    %v3827 = vunpack.c.l.b16 %v1264
    %v3828 = vunpack.c.l.b16 %v1265
    %v3829 = vunpack.c.l.b16 %v1266
    %v3830 = vunpack.c.l.b16 %v1267
    %v3831 = vunpack.c.l.b16 %v1268
    %v3832 = vunpack.c.l.b16 %v1269
    %v3833 = vunpack.c.l.b16 %v1270
    %v3834 = vunpack.c.l.b16 %v1271
    %v3835 = vunpack.c.l.b16 %v1272
    %v3836 = vunpack.c.l.b16 %v1273
    %v3837 = vunpack.c.l.b16 %v1274
    %v3838 = vunpack.c.l.b16 %v1275
    %v3839 = vunpack.c.l.b16 %v1276
    %v3840 = vunpack.c.l.b16 %v1277
    %v3841 = vunpack.c.l.b16 %v1278
    %v3842 = vunpack.c.l.b16 %v1279
    %v3843 = vunpack.c.l.b16 %v1280
    %v3844 = vunpack.c.l.b16 %v1281
    %v3845 = vunpack.c.l.b16 %v1282
    %v3846 = vunpack.c.l.b16 %v1283
    %v3847 = vunpack.c.l.b16 %v1284
    %v3848 = vunpack.c.l.b16 %v1285
    %v3849 = vunpack.c.l.b16 %v1286
    %v3850 = vunpack.c.l.b16 %v1287
    %v3851 = vunpack.c.l.b16 %v1288
    %v3852 = vunpack.c.l.b16 %v1289
    %v3853 = vunpack.c.l.b16 %v1290
    %v3854 = vunpack.c.l.b16 %v1291
    %v3855 = vunpack.c.l.b16 %v1292
    %v3856 = vunpack.c.l.b16 %v1293
    %v3857 = vunpack.c.l.b16 %v1294
    %v3858 = vunpack.c.l.b16 %v1295
    %v3859 = vunpack.c.l.b16 %v1296
    %v3860 = vunpack.c.l.b16 %v1297
    %v3861 = vunpack.c.l.b16 %v1298
    %v3862 = vunpack.c.l.b16 %v1299
    %v3863 = vunpack.c.l.b16 %v1300
    %v3864 = vunpack.c.l.b16 %v1301
    %v3865 = vunpack.c.l.b16 %v1302
    %v3866 = vunpack.c.l.b16 %v1303
    %v3867 = vunpack.c.l.b16 %v1304
    %v3868 = vunpack.c.l.b16 %v1305
    %v3869 = vunpack.c.l.b16 %v1306
    %v3870 = vunpack.c.l.b16 %v1307
    %v3871 = vunpack.c.l.b16 %v1308
    %v3872 = vunpack.c.l.b16 %v1309
    %v3873 = vunpack.c.l.b16 %v1310
    %v3874 = vunpack.c.l.b16 %v1311
    %v3875 = vunpack.c.l.b16 %v1312
    %v3876 = vunpack.c.l.b16 %v1313
    %v3877 = vunpack.c.l.b16 %v1314
    %v3878 = vunpack.c.l.b16 %v1315
    %v3879 = vunpack.c.l.b16 %v1316
    %v3880 = vunpack.c.l.b16 %v1317
    %v3881 = vunpack.c.l.b16 %v1318
    %v3882 = vunpack.c.l.b16 %v1319
    %v3883 = vunpack.c.l.b16 %v1320
    %v3884 = vunpack.c.l.b16 %v1321
    %v3885 = vunpack.c.l.b16 %v1322
    %v3886 = vunpack.c.l.b16 %v1323
    %v3887 = vunpack.c.l.b16 %v1324
    %v3888 = vunpack.c.l.b16 %v1325
    %v3889 = vunpack.c.l.b16 %v1326
    %v3890 = vunpack.c.l.b16 %v1327
    %v3891 = vunpack.c.l.b16 %v1328
    %v3892 = vunpack.c.l.b16 %v1329
    %v3893 = vunpack.c.l.b16 %v1330
    %v3894 = vunpack.c.l.b16 %v1331
    %v3895 = vunpack.c.l.b16 %v1332
    %v3896 = vunpack.c.l.b16 %v1333
    %v3897 = vunpack.c.l.b16 %v1334
    %v3898 = vunpack.c.l.b16 %v1335
    %v3899 = vunpack.c.l.b16 %v1336
    %v3900 = vunpack.c.l.b16 %v1337
    %v3901 = vunpack.c.l.b16 %v1338
    %v3902 = vunpack.c.l.b16 %v1339
    %v3903 = vunpack.c.l.b16 %v1340
    %v3904 = vunpack.c.l.b16 %v1341
    %v3905 = vunpack.c.l.b16 %v1342
    %v3906 = vunpack.c.l.b16 %v1343
    %v3907 = vunpack.c.l.b16 %v1344
    %v3908 = vunpack.c.l.b16 %v1345
    %v3909 = vunpack.c.l.b16 %v1346
    %v3910 = vunpack.c.l.b16 %v1347
    %v3911 = vunpack.c.l.b16 %v1348
    %v3912 = vunpack.c.l.b16 %v1349
    %v3913 = vunpack.c.l.b16 %v1350
    %v3914 = vunpack.c.l.b16 %v1351
    %v3915 = vunpack.c.l.b16 %v1352
    %v3916 = vunpack.c.l.b16 %v1353
    %v3917 = vunpack.c.l.b16 %v1354
    %v3918 = vunpack.c.l.b16 %v1355
    %v3919 = vunpack.c.l.b16 %v1356
    %v3920 = vunpack.c.l.b16 %v1357
    %v3921 = vunpack.c.l.b16 %v1358
    %v3922 = vunpack.c.l.b16 %v1359
    %v3923 = vunpack.c.l.b16 %v1360
    %v3924 = vunpack.c.l.b16 %v1361
    %v3925 = vunpack.c.l.b16 %v1362
    %v3926 = vunpack.c.l.b16 %v1363
    %v3927 = vunpack.c.l.b16 %v1364
    %v3928 = vunpack.c.l.b16 %v1365
    %v3929 = vunpack.c.l.b16 %v1366
    %v3930 = vunpack.c.l.b16 %v1367
    %v3931 = vunpack.c.l.b16 %v1368
    %v3932 = vunpack.c.l.b16 %v1369
    %v3933 = vunpack.c.l.b16 %v1370
    %v3934 = vunpack.c.l.b16 %v1371
    %v3935 = vunpack.c.l.b16 %v1372
    %v3936 = vunpack.c.l.b16 %v1373
    %v3937 = vunpack.c.l.b16 %v1374
    %v3938 = vunpack.c.l.b16 %v1375
    %v3939 = vunpack.c.l.b16 %v1376
    %v3940 = vunpack.c.l.b16 %v1377
    %v3941 = vunpack.c.l.b16 %v1378
    %v3942 = vunpack.c.l.b16 %v1379
    %v3943 = vunpack.c.l.b16 %v1380
    %v3944 = vunpack.c.l.b16 %v1381
    %v3945 = vunpack.c.l.b16 %v1382
    %v3946 = vunpack.c.l.b16 %v1383
    %v3947 = vunpack.c.l.b16 %v1384
    %v3948 = vunpack.c.l.b16 %v1385
    %v3949 = vunpack.c.l.b16 %v1386
    %v3950 = vunpack.c.l.b16 %v1387
    %v3951 = vunpack.c.l.b16 %v1388
    %v3952 = vunpack.c.l.b16 %v1389
    %v3953 = vunpack.c.l.b16 %v1390
    %v3954 = vunpack.c.l.b16 %v1391
    %v3955 = vunpack.c.l.b16 %v1392
    %v3956 = vunpack.c.l.b16 %v1393
    %v3957 = vunpack.c.l.b16 %v1394
    %v3958 = vunpack.c.l.b16 %v1395
    %v3959 = vunpack.c.l.b16 %v1396
    %v3960 = vunpack.c.l.b16 %v1397
    %v3961 = vunpack.c.l.b16 %v1398
    %v3962 = vunpack.c.l.b16 %v1399
    %v3963 = vunpack.c.l.b16 %v1400
    %v3964 = vunpack.c.l.b16 %v1401
    %v3965 = vunpack.c.l.b16 %v1402
    %v3966 = vunpack.c.l.b16 %v1403
    %v3967 = vunpack.c.l.b16 %v1404
    %v3968 = vunpack.c.l.b16 %v1405
    %v3969 = vunpack.c.l.b16 %v1406
    %v3970 = vpack.c.b16 %v2819, %v2818
    %v3971 = vpack.c.b16 %v2821, %v2820
    %v3972 = vpack.c.b16 %v2823, %v2822
    %v3973 = vpack.c.b16 %v2825, %v2824
    %v3974 = vpack.c.b16 %v2827, %v2826
    %v3975 = vpack.c.b16 %v2829, %v2828
    %v3976 = vpack.c.b16 %v2831, %v2830
    %v3977 = vpack.c.b16 %v2833, %v2832
    %v3978 = vpack.c.b16 %v2835, %v2834
    %v3979 = vpack.c.b16 %v2837, %v2836
    %v3980 = vpack.c.b16 %v2839, %v2838
    %v3981 = vpack.c.b16 %v2841, %v2840
    %v3982 = vpack.c.b16 %v2843, %v2842
    %v3983 = vpack.c.b16 %v2845, %v2844
    %v3984 = vpack.c.b16 %v2847, %v2846
    %v3985 = vpack.c.b16 %v2849, %v2848
    %v3986 = vpack.c.b16 %v2851, %v2850
    %v3987 = vpack.c.b16 %v2853, %v2852
    %v3988 = vpack.c.b16 %v2855, %v2854
    %v3989 = vpack.c.b16 %v2857, %v2856
    %v3990 = vpack.c.b16 %v2859, %v2858
    %v3991 = vpack.c.b16 %v2861, %v2860
    %v3992 = vpack.c.b16 %v2863, %v2862
    %v3993 = vpack.c.b16 %v2865, %v2864
    %v3994 = vpack.c.b16 %v2867, %v2866
    %v3995 = vpack.c.b16 %v2869, %v2868
    %v3996 = vpack.c.b16 %v2871, %v2870
    %v3997 = vpack.c.b16 %v2873, %v2872
    %v3998 = vpack.c.b16 %v2875, %v2874
    %v3999 = vpack.c.b16 %v2877, %v2876
    %v4000 = vpack.c.b16 %v2879, %v2878
    %v4001 = vpack.c.b16 %v2881, %v2880
    %v4002 = vpack.c.b16 %v2883, %v2882
    %v4003 = vpack.c.b16 %v2885, %v2884
    %v4004 = vpack.c.b16 %v2887, %v2886
    %v4005 = vpack.c.b16 %v2889, %v2888
    %v4006 = vpack.c.b16 %v2891, %v2890
    %v4007 = vpack.c.b16 %v2893, %v2892
    %v4008 = vpack.c.b16 %v2895, %v2894
    %v4009 = vpack.c.b16 %v2897, %v2896
    %v4010 = vpack.c.b16 %v2899, %v2898
    %v4011 = vpack.c.b16 %v2901, %v2900
    %v4012 = vpack.c.b16 %v2903, %v2902
    %v4013 = vpack.c.b16 %v2905, %v2904
    %v4014 = vpack.c.b16 %v2907, %v2906
    %v4015 = vpack.c.b16 %v2909, %v2908
    %v4016 = vpack.c.b16 %v2911, %v2910
    %v4017 = vpack.c.b16 %v2913, %v2912
    %v4018 = vpack.c.b16 %v2915, %v2914
    %v4019 = vpack.c.b16 %v2917, %v2916
    %v4020 = vpack.c.b16 %v2919, %v2918
    %v4021 = vpack.c.b16 %v2921, %v2920
    %v4022 = vpack.c.b16 %v2923, %v2922
    %v4023 = vpack.c.b16 %v2925, %v2924
    %v4024 = vpack.c.b16 %v2927, %v2926
    %v4025 = vpack.c.b16 %v2929, %v2928
    %v4026 = vpack.c.b16 %v2931, %v2930
    %v4027 = vpack.c.b16 %v2933, %v2932
    %v4028 = vpack.c.b16 %v2935, %v2934
    %v4029 = vpack.c.b16 %v2937, %v2936
    %v4030 = vpack.c.b16 %v2939, %v2938
    %v4031 = vpack.c.b16 %v2941, %v2940
    %v4032 = vpack.c.b16 %v2943, %v2942
    %v4033 = vpack.c.b16 %v2945, %v2944
    %v4034 = vpack.c.b16 %v2947, %v2946
    %v4035 = vpack.c.b16 %v2949, %v2948
    %v4036 = vpack.c.b16 %v2951, %v2950
    %v4037 = vpack.c.b16 %v2953, %v2952
    %v4038 = vpack.c.b16 %v2955, %v2954
    %v4039 = vpack.c.b16 %v2957, %v2956
    %v4040 = vpack.c.b16 %v2959, %v2958
    %v4041 = vpack.c.b16 %v2961, %v2960
    %v4042 = vpack.c.b16 %v2963, %v2962
    %v4043 = vpack.c.b16 %v2965, %v2964
    %v4044 = vpack.c.b16 %v2967, %v2966
    %v4045 = vpack.c.b16 %v2969, %v2968
    %v4046 = vpack.c.b16 %v2971, %v2970
    %v4047 = vpack.c.b16 %v2973, %v2972
    %v4048 = vpack.c.b16 %v2975, %v2974
    %v4049 = vpack.c.b16 %v2977, %v2976
    %v4050 = vpack.c.b16 %v2979, %v2978
    %v4051 = vpack.c.b16 %v2981, %v2980
    %v4052 = vpack.c.b16 %v2983, %v2982
    %v4053 = vpack.c.b16 %v2985, %v2984
    %v4054 = vpack.c.b16 %v2987, %v2986
    %v4055 = vpack.c.b16 %v2989, %v2988
    %v4056 = vpack.c.b16 %v2991, %v2990
    %v4057 = vpack.c.b16 %v2993, %v2992
    %v4058 = vpack.c.b16 %v2995, %v2994
    %v4059 = vpack.c.b16 %v2997, %v2996
    %v4060 = vpack.c.b16 %v2999, %v2998
    %v4061 = vpack.c.b16 %v3001, %v3000
    %v4062 = vpack.c.b16 %v3003, %v3002
    %v4063 = vpack.c.b16 %v3005, %v3004
    %v4064 = vpack.c.b16 %v3007, %v3006
    %v4065 = vpack.c.b16 %v3009, %v3008
    %v4066 = vpack.c.b16 %v3011, %v3010
    %v4067 = vpack.c.b16 %v3013, %v3012
    %v4068 = vpack.c.b16 %v3015, %v3014
    %v4069 = vpack.c.b16 %v3017, %v3016
    %v4070 = vpack.c.b16 %v3019, %v3018
    %v4071 = vpack.c.b16 %v3021, %v3020
    %v4072 = vpack.c.b16 %v3023, %v3022
    %v4073 = vpack.c.b16 %v3025, %v3024
    %v4074 = vpack.c.b16 %v3027, %v3026
    %v4075 = vpack.c.b16 %v3029, %v3028
    %v4076 = vpack.c.b16 %v3031, %v3030
    %v4077 = vpack.c.b16 %v3033, %v3032
    %v4078 = vpack.c.b16 %v3035, %v3034
    %v4079 = vpack.c.b16 %v3037, %v3036
    %v4080 = vpack.c.b16 %v3039, %v3038
    %v4081 = vpack.c.b16 %v3041, %v3040
    %v4082 = vpack.c.b16 %v3043, %v3042
    %v4083 = vpack.c.b16 %v3045, %v3044
    %v4084 = vpack.c.b16 %v3047, %v3046
    %v4085 = vpack.c.b16 %v3049, %v3048
    %v4086 = vpack.c.b16 %v3051, %v3050
    %v4087 = vpack.c.b16 %v3053, %v3052
    %v4088 = vpack.c.b16 %v3055, %v3054
    %v4089 = vpack.c.b16 %v3057, %v3056
    %v4090 = vpack.c.b16 %v3059, %v3058
    %v4091 = vpack.c.b16 %v3061, %v3060
    %v4092 = vpack.c.b16 %v3063, %v3062
    %v4093 = vpack.c.b16 %v3065, %v3064
    %v4094 = vpack.c.b16 %v3067, %v3066
    %v4095 = vpack.c.b16 %v3069, %v3068
    %v4096 = vpack.c.b16 %v3071, %v3070
    %v4097 = vpack.c.b16 %v3073, %v3072
    %v4098 = vpack.c.b16 %v3075, %v3074
    %v4099 = vpack.c.b16 %v3077, %v3076
    %v4100 = vpack.c.b16 %v3079, %v3078
    %v4101 = vpack.c.b16 %v3081, %v3080
    %v4102 = vpack.c.b16 %v3083, %v3082
    %v4103 = vpack.c.b16 %v3085, %v3084
    %v4104 = vpack.c.b16 %v3087, %v3086
    %v4105 = vpack.c.b16 %v3089, %v3088
    %v4106 = vpack.c.b16 %v3091, %v3090
    %v4107 = vpack.c.b16 %v3093, %v3092
    %v4108 = vpack.c.b16 %v3095, %v3094
    %v4109 = vpack.c.b16 %v3097, %v3096
    %v4110 = vpack.c.b16 %v3099, %v3098
    %v4111 = vpack.c.b16 %v3101, %v3100
    %v4112 = vpack.c.b16 %v3103, %v3102
    %v4113 = vpack.c.b16 %v3105, %v3104
    %v4114 = vpack.c.b16 %v3107, %v3106
    %v4115 = vpack.c.b16 %v3109, %v3108
    %v4116 = vpack.c.b16 %v3111, %v3110
    %v4117 = vpack.c.b16 %v3113, %v3112
    %v4118 = vpack.c.b16 %v3115, %v3114
    %v4119 = vpack.c.b16 %v3117, %v3116
    %v4120 = vpack.c.b16 %v3119, %v3118
    %v4121 = vpack.c.b16 %v3121, %v3120
    %v4122 = vpack.c.b16 %v3123, %v3122
    %v4123 = vpack.c.b16 %v3125, %v3124
    %v4124 = vpack.c.b16 %v3127, %v3126
    %v4125 = vpack.c.b16 %v3129, %v3128
    %v4126 = vpack.c.b16 %v3131, %v3130
    %v4127 = vpack.c.b16 %v3133, %v3132
    %v4128 = vpack.c.b16 %v3135, %v3134
    %v4129 = vpack.c.b16 %v3137, %v3136
    %v4130 = vpack.c.b16 %v3139, %v3138
    %v4131 = vpack.c.b16 %v3141, %v3140
    %v4132 = vpack.c.b16 %v3143, %v3142
    %v4133 = vpack.c.b16 %v3145, %v3144
    %v4134 = vpack.c.b16 %v3147, %v3146
    %v4135 = vpack.c.b16 %v3149, %v3148
    %v4136 = vpack.c.b16 %v3151, %v3150
    %v4137 = vpack.c.b16 %v3153, %v3152
    %v4138 = vpack.c.b16 %v3155, %v3154
    %v4139 = vpack.c.b16 %v3157, %v3156
    %v4140 = vpack.c.b16 %v3159, %v3158
    %v4141 = vpack.c.b16 %v3161, %v3160
    %v4142 = vpack.c.b16 %v3163, %v3162
    %v4143 = vpack.c.b16 %v3165, %v3164
    %v4144 = vpack.c.b16 %v3167, %v3166
    %v4145 = vpack.c.b16 %v3169, %v3168
    %v4146 = vpack.c.b16 %v3171, %v3170
    %v4147 = vpack.c.b16 %v3173, %v3172
    %v4148 = vpack.c.b16 %v3175, %v3174
    %v4149 = vpack.c.b16 %v3177, %v3176
    %v4150 = vpack.c.b16 %v3179, %v3178
    %v4151 = vpack.c.b16 %v3181, %v3180
    %v4152 = vpack.c.b16 %v3183, %v3182
    %v4153 = vpack.c.b16 %v3185, %v3184
    %v4154 = vpack.c.b16 %v3187, %v3186
    %v4155 = vpack.c.b16 %v3189, %v3188
    %v4156 = vpack.c.b16 %v3191, %v3190
    %v4157 = vpack.c.b16 %v3193, %v3192
    %v4158 = vpack.c.b16 %v3195, %v3194
    %v4159 = vpack.c.b16 %v3197, %v3196
    %v4160 = vpack.c.b16 %v3199, %v3198
    %v4161 = vpack.c.b16 %v3201, %v3200
    %v4162 = vpack.c.b16 %v3203, %v3202
    %v4163 = vpack.c.b16 %v3205, %v3204
    %v4164 = vpack.c.b16 %v3207, %v3206
    %v4165 = vpack.c.b16 %v3209, %v3208
    %v4166 = vpack.c.b16 %v3211, %v3210
    %v4167 = vpack.c.b16 %v3213, %v3212
    %v4168 = vpack.c.b16 %v3215, %v3214
    %v4169 = vpack.c.b16 %v3217, %v3216
    %v4170 = vpack.c.b16 %v3219, %v3218
    %v4171 = vpack.c.b16 %v3221, %v3220
    %v4172 = vpack.c.b16 %v3223, %v3222
    %v4173 = vpack.c.b16 %v3225, %v3224
    %v4174 = vpack.c.b16 %v3227, %v3226
    %v4175 = vpack.c.b16 %v3229, %v3228
    %v4176 = vpack.c.b16 %v3231, %v3230
    %v4177 = vpack.c.b16 %v3233, %v3232
    %v4178 = vpack.c.b16 %v3235, %v3234
    %v4179 = vpack.c.b16 %v3237, %v3236
    %v4180 = vpack.c.b16 %v3239, %v3238
    %v4181 = vpack.c.b16 %v3241, %v3240
    %v4182 = vpack.c.b16 %v3243, %v3242
    %v4183 = vpack.c.b16 %v3245, %v3244
    %v4184 = vpack.c.b16 %v3247, %v3246
    %v4185 = vpack.c.b16 %v3249, %v3248
    %v4186 = vpack.c.b16 %v3251, %v3250
    %v4187 = vpack.c.b16 %v3253, %v3252
    %v4188 = vpack.c.b16 %v3255, %v3254
    %v4189 = vpack.c.b16 %v3257, %v3256
    %v4190 = vpack.c.b16 %v3259, %v3258
    %v4191 = vpack.c.b16 %v3261, %v3260
    %v4192 = vpack.c.b16 %v3263, %v3262
    %v4193 = vpack.c.b16 %v3265, %v3264
    %v4194 = vpack.c.b16 %v3267, %v3266
    %v4195 = vpack.c.b16 %v3269, %v3268
    %v4196 = vpack.c.b16 %v3271, %v3270
    %v4197 = vpack.c.b16 %v3273, %v3272
    %v4198 = vpack.c.b16 %v3275, %v3274
    %v4199 = vpack.c.b16 %v3277, %v3276
    %v4200 = vpack.c.b16 %v3279, %v3278
    %v4201 = vpack.c.b16 %v3281, %v3280
    %v4202 = vpack.c.b16 %v3283, %v3282
    %v4203 = vpack.c.b16 %v3285, %v3284
    %v4204 = vpack.c.b16 %v3287, %v3286
    %v4205 = vpack.c.b16 %v3289, %v3288
    %v4206 = vpack.c.b16 %v3291, %v3290
    %v4207 = vpack.c.b16 %v3293, %v3292
    %v4208 = vpack.c.b16 %v3295, %v3294
    %v4209 = vpack.c.b16 %v3297, %v3296
    %v4210 = vpack.c.b16 %v3299, %v3298
    %v4211 = vpack.c.b16 %v3301, %v3300
    %v4212 = vpack.c.b16 %v3303, %v3302
    %v4213 = vpack.c.b16 %v3305, %v3304
    %v4214 = vpack.c.b16 %v3307, %v3306
    %v4215 = vpack.c.b16 %v3309, %v3308
    %v4216 = vpack.c.b16 %v3311, %v3310
    %v4217 = vpack.c.b16 %v3313, %v3312
    %v4218 = vpack.c.b16 %v3315, %v3314
    %v4219 = vpack.c.b16 %v3317, %v3316
    %v4220 = vpack.c.b16 %v3319, %v3318
    %v4221 = vpack.c.b16 %v3321, %v3320
    %v4222 = vpack.c.b16 %v3323, %v3322
    %v4223 = vpack.c.b16 %v3325, %v3324
    %v4224 = vpack.c.b16 %v3327, %v3326
    %v4225 = vpack.c.b16 %v3329, %v3328
    %v4226 = vpack.c.b16 %v3331, %v3330
    %v4227 = vpack.c.b16 %v3333, %v3332
    %v4228 = vpack.c.b16 %v3335, %v3334
    %v4229 = vpack.c.b16 %v3337, %v3336
    %v4230 = vpack.c.b16 %v3339, %v3338
    %v4231 = vpack.c.b16 %v3341, %v3340
    %v4232 = vpack.c.b16 %v3343, %v3342
    %v4233 = vpack.c.b16 %v3345, %v3344
    %v4234 = vpack.c.b16 %v3347, %v3346
    %v4235 = vpack.c.b16 %v3349, %v3348
    %v4236 = vpack.c.b16 %v3351, %v3350
    %v4237 = vpack.c.b16 %v3353, %v3352
    %v4238 = vpack.c.b16 %v3355, %v3354
    %v4239 = vpack.c.b16 %v3357, %v3356
    %v4240 = vpack.c.b16 %v3359, %v3358
    %v4241 = vpack.c.b16 %v3361, %v3360
    %v4242 = vpack.c.b16 %v3363, %v3362
    %v4243 = vpack.c.b16 %v3365, %v3364
    %v4244 = vpack.c.b16 %v3367, %v3366
    %v4245 = vpack.c.b16 %v3369, %v3368
    %v4246 = vpack.c.b16 %v3371, %v3370
    %v4247 = vpack.c.b16 %v3373, %v3372
    %v4248 = vpack.c.b16 %v3375, %v3374
    %v4249 = vpack.c.b16 %v3377, %v3376
    %v4250 = vpack.c.b16 %v3379, %v3378
    %v4251 = vpack.c.b16 %v3381, %v3380
    %v4252 = vpack.c.b16 %v3383, %v3382
    %v4253 = vpack.c.b16 %v3385, %v3384
    %v4254 = vpack.c.b16 %v3387, %v3386
    %v4255 = vpack.c.b16 %v3389, %v3388
    %v4256 = vpack.c.b16 %v3391, %v3390
    %v4257 = vpack.c.b16 %v3393, %v3392
    %v4258 = vpack.c.b16 %v3395, %v3394
    %v4259 = vpack.c.b16 %v3397, %v3396
    %v4260 = vpack.c.b16 %v3399, %v3398
    %v4261 = vpack.c.b16 %v3401, %v3400
    %v4262 = vpack.c.b16 %v3403, %v3402
    %v4263 = vpack.c.b16 %v3405, %v3404
    %v4264 = vpack.c.b16 %v3407, %v3406
    %v4265 = vpack.c.b16 %v3409, %v3408
    %v4266 = vpack.c.b16 %v3411, %v3410
    %v4267 = vpack.c.b16 %v3413, %v3412
    %v4268 = vpack.c.b16 %v3415, %v3414
    %v4269 = vpack.c.b16 %v3417, %v3416
    %v4270 = vpack.c.b16 %v3419, %v3418
    %v4271 = vpack.c.b16 %v3421, %v3420
    %v4272 = vpack.c.b16 %v3423, %v3422
    %v4273 = vpack.c.b16 %v3425, %v3424
    %v4274 = vpack.c.b16 %v3427, %v3426
    %v4275 = vpack.c.b16 %v3429, %v3428
    %v4276 = vpack.c.b16 %v3431, %v3430
    %v4277 = vpack.c.b16 %v3433, %v3432
    %v4278 = vpack.c.b16 %v3435, %v3434
    %v4279 = vpack.c.b16 %v3437, %v3436
    %v4280 = vpack.c.b16 %v3439, %v3438
    %v4281 = vpack.c.b16 %v3441, %v3440
    %v4282 = vpack.c.b16 %v3443, %v3442
    %v4283 = vpack.c.b16 %v3445, %v3444
    %v4284 = vpack.c.b16 %v3447, %v3446
    %v4285 = vpack.c.b16 %v3449, %v3448
    %v4286 = vpack.c.b16 %v3451, %v3450
    %v4287 = vpack.c.b16 %v3453, %v3452
    %v4288 = vpack.c.b16 %v3455, %v3454
    %v4289 = vpack.c.b16 %v3457, %v3456
    %v4290 = vpack.c.b16 %v3459, %v3458
    %v4291 = vpack.c.b16 %v3461, %v3460
    %v4292 = vpack.c.b16 %v3463, %v3462
    %v4293 = vpack.c.b16 %v3465, %v3464
    %v4294 = vpack.c.b16 %v3467, %v3466
    %v4295 = vpack.c.b16 %v3469, %v3468
    %v4296 = vpack.c.b16 %v3471, %v3470
    %v4297 = vpack.c.b16 %v3473, %v3472
    %v4298 = vpack.c.b16 %v3475, %v3474
    %v4299 = vpack.c.b16 %v3477, %v3476
    %v4300 = vpack.c.b16 %v3479, %v3478
    %v4301 = vpack.c.b16 %v3481, %v3480
    %v4302 = vpack.c.b16 %v3483, %v3482
    %v4303 = vpack.c.b16 %v3485, %v3484
    %v4304 = vpack.c.b16 %v3487, %v3486
    %v4305 = vpack.c.b16 %v3489, %v3488
    %v4306 = vpack.c.b16 %v3491, %v3490
    %v4307 = vpack.c.b16 %v3493, %v3492
    %v4308 = vpack.c.b16 %v3495, %v3494
    %v4309 = vpack.c.b16 %v3497, %v3496
    %v4310 = vpack.c.b16 %v3499, %v3498
    %v4311 = vpack.c.b16 %v3501, %v3500
    %v4312 = vpack.c.b16 %v3503, %v3502
    %v4313 = vpack.c.b16 %v3505, %v3504
    %v4314 = vpack.c.b16 %v3507, %v3506
    %v4315 = vpack.c.b16 %v3509, %v3508
    %v4316 = vpack.c.b16 %v3511, %v3510
    %v4317 = vpack.c.b16 %v3513, %v3512
    %v4318 = vpack.c.b16 %v3515, %v3514
    %v4319 = vpack.c.b16 %v3517, %v3516
    %v4320 = vpack.c.b16 %v3519, %v3518
    %v4321 = vpack.c.b16 %v3521, %v3520
    %v4322 = vpack.c.b16 %v3523, %v3522
    %v4323 = vpack.c.b16 %v3525, %v3524
    %v4324 = vpack.c.b16 %v3527, %v3526
    %v4325 = vpack.c.b16 %v3529, %v3528
    %v4326 = vpack.c.b16 %v3531, %v3530
    %v4327 = vpack.c.b16 %v3533, %v3532
    %v4328 = vpack.c.b16 %v3535, %v3534
    %v4329 = vpack.c.b16 %v3537, %v3536
    %v4330 = vpack.c.b16 %v3539, %v3538
    %v4331 = vpack.c.b16 %v3541, %v3540
    %v4332 = vpack.c.b16 %v3543, %v3542
    %v4333 = vpack.c.b16 %v3545, %v3544
    %v4334 = vpack.c.b16 %v3547, %v3546
    %v4335 = vpack.c.b16 %v3549, %v3548
    %v4336 = vpack.c.b16 %v3551, %v3550
    %v4337 = vpack.c.b16 %v3553, %v3552
    %v4338 = vpack.c.b16 %v3555, %v3554
    %v4339 = vpack.c.b16 %v3557, %v3556
    %v4340 = vpack.c.b16 %v3559, %v3558
    %v4341 = vpack.c.b16 %v3561, %v3560
    %v4342 = vpack.c.b16 %v3563, %v3562
    %v4343 = vpack.c.b16 %v3565, %v3564
    %v4344 = vpack.c.b16 %v3567, %v3566
    %v4345 = vpack.c.b16 %v3569, %v3568
    %v4346 = vpack.c.b16 %v3571, %v3570
    %v4347 = vpack.c.b16 %v3573, %v3572
    %v4348 = vpack.c.b16 %v3575, %v3574
    %v4349 = vpack.c.b16 %v3577, %v3576
    %v4350 = vpack.c.b16 %v3579, %v3578
    %v4351 = vpack.c.b16 %v3581, %v3580
    %v4352 = vpack.c.b16 %v3583, %v3582
    %v4353 = vpack.c.b16 %v3585, %v3584
    %v4354 = vpack.c.b16 %v3587, %v3586
    %v4355 = vpack.c.b16 %v3589, %v3588
    %v4356 = vpack.c.b16 %v3591, %v3590
    %v4357 = vpack.c.b16 %v3593, %v3592
    %v4358 = vpack.c.b16 %v3595, %v3594
    %v4359 = vpack.c.b16 %v3597, %v3596
    %v4360 = vpack.c.b16 %v3599, %v3598
    %v4361 = vpack.c.b16 %v3601, %v3600
    %v4362 = vpack.c.b16 %v3603, %v3602
    %v4363 = vpack.c.b16 %v3605, %v3604
    %v4364 = vpack.c.b16 %v3607, %v3606
    %v4365 = vpack.c.b16 %v3609, %v3608
    %v4366 = vpack.c.b16 %v3611, %v3610
    %v4367 = vpack.c.b16 %v3613, %v3612
    %v4368 = vpack.c.b16 %v3615, %v3614
    %v4369 = vpack.c.b16 %v3617, %v3616
    %v4370 = vpack.c.b16 %v3619, %v3618
    %v4371 = vpack.c.b16 %v3621, %v3620
    %v4372 = vpack.c.b16 %v3623, %v3622
    %v4373 = vpack.c.b16 %v3625, %v3624
    %v4374 = vpack.c.b16 %v3627, %v3626
    %v4375 = vpack.c.b16 %v3629, %v3628
    %v4376 = vpack.c.b16 %v3631, %v3630
    %v4377 = vpack.c.b16 %v3633, %v3632
    %v4378 = vpack.c.b16 %v3635, %v3634
    %v4379 = vpack.c.b16 %v3637, %v3636
    %v4380 = vpack.c.b16 %v3639, %v3638
    %v4381 = vpack.c.b16 %v3641, %v3640
    %v4382 = vpack.c.b16 %v3643, %v3642
    %v4383 = vpack.c.b16 %v3645, %v3644
    %v4384 = vpack.c.b16 %v3647, %v3646
    %v4385 = vpack.c.b16 %v3649, %v3648
    %v4386 = vpack.c.b16 %v3651, %v3650
    %v4387 = vpack.c.b16 %v3653, %v3652
    %v4388 = vpack.c.b16 %v3655, %v3654
    %v4389 = vpack.c.b16 %v3657, %v3656
    %v4390 = vpack.c.b16 %v3659, %v3658
    %v4391 = vpack.c.b16 %v3661, %v3660
    %v4392 = vpack.c.b16 %v3663, %v3662
    %v4393 = vpack.c.b16 %v3665, %v3664
    %v4394 = vpack.c.b16 %v3667, %v3666
    %v4395 = vpack.c.b16 %v3669, %v3668
    %v4396 = vpack.c.b16 %v3671, %v3670
    %v4397 = vpack.c.b16 %v3673, %v3672
    %v4398 = vpack.c.b16 %v3675, %v3674
    %v4399 = vpack.c.b16 %v3677, %v3676
    %v4400 = vpack.c.b16 %v3679, %v3678
    %v4401 = vpack.c.b16 %v3681, %v3680
    %v4402 = vpack.c.b16 %v3683, %v3682
    %v4403 = vpack.c.b16 %v3685, %v3684
    %v4404 = vpack.c.b16 %v3687, %v3686
    %v4405 = vpack.c.b16 %v3689, %v3688
    %v4406 = vpack.c.b16 %v3691, %v3690
    %v4407 = vpack.c.b16 %v3693, %v3692
    %v4408 = vpack.c.b16 %v3695, %v3694
    %v4409 = vpack.c.b16 %v3697, %v3696
    %v4410 = vpack.c.b16 %v3699, %v3698
    %v4411 = vpack.c.b16 %v3701, %v3700
    %v4412 = vpack.c.b16 %v3703, %v3702
    %v4413 = vpack.c.b16 %v3705, %v3704
    %v4414 = vpack.c.b16 %v3707, %v3706
    %v4415 = vpack.c.b16 %v3709, %v3708
    %v4416 = vpack.c.b16 %v3711, %v3710
    %v4417 = vpack.c.b16 %v3713, %v3712
    %v4418 = vpack.c.b16 %v3715, %v3714
    %v4419 = vpack.c.b16 %v3717, %v3716
    %v4420 = vpack.c.b16 %v3719, %v3718
    %v4421 = vpack.c.b16 %v3721, %v3720
    %v4422 = vpack.c.b16 %v3723, %v3722
    %v4423 = vpack.c.b16 %v3725, %v3724
    %v4424 = vpack.c.b16 %v3727, %v3726
    %v4425 = vpack.c.b16 %v3729, %v3728
    %v4426 = vpack.c.b16 %v3731, %v3730
    %v4427 = vpack.c.b16 %v3733, %v3732
    %v4428 = vpack.c.b16 %v3735, %v3734
    %v4429 = vpack.c.b16 %v3737, %v3736
    %v4430 = vpack.c.b16 %v3739, %v3738
    %v4431 = vpack.c.b16 %v3741, %v3740
    %v4432 = vpack.c.b16 %v3743, %v3742
    %v4433 = vpack.c.b16 %v3745, %v3744
    %v4434 = vpack.c.b16 %v3747, %v3746
    %v4435 = vpack.c.b16 %v3749, %v3748
    %v4436 = vpack.c.b16 %v3751, %v3750
    %v4437 = vpack.c.b16 %v3753, %v3752
    %v4438 = vpack.c.b16 %v3755, %v3754
    %v4439 = vpack.c.b16 %v3757, %v3756
    %v4440 = vpack.c.b16 %v3759, %v3758
    %v4441 = vpack.c.b16 %v3761, %v3760
    %v4442 = vpack.c.b16 %v3763, %v3762
    %v4443 = vpack.c.b16 %v3765, %v3764
    %v4444 = vpack.c.b16 %v3767, %v3766
    %v4445 = vpack.c.b16 %v3769, %v3768
    %v4446 = vpack.c.b16 %v3771, %v3770
    %v4447 = vpack.c.b16 %v3773, %v3772
    %v4448 = vpack.c.b16 %v3775, %v3774
    %v4449 = vpack.c.b16 %v3777, %v3776
    %v4450 = vpack.c.b16 %v3779, %v3778
    %v4451 = vpack.c.b16 %v3781, %v3780
    %v4452 = vpack.c.b16 %v3783, %v3782
    %v4453 = vpack.c.b16 %v3785, %v3784
    %v4454 = vpack.c.b16 %v3787, %v3786
    %v4455 = vpack.c.b16 %v3789, %v3788
    %v4456 = vpack.c.b16 %v3791, %v3790
    %v4457 = vpack.c.b16 %v3793, %v3792
    %v4458 = vpack.c.b16 %v3795, %v3794
    %v4459 = vpack.c.b16 %v3797, %v3796
    %v4460 = vpack.c.b16 %v3799, %v3798
    %v4461 = vpack.c.b16 %v3801, %v3800
    %v4462 = vpack.c.b16 %v3803, %v3802
    %v4463 = vpack.c.b16 %v3805, %v3804
    %v4464 = vpack.c.b16 %v3807, %v3806
    %v4465 = vpack.c.b16 %v3809, %v3808
    %v4466 = vpack.c.b16 %v3811, %v3810
    %v4467 = vpack.c.b16 %v3813, %v3812
    %v4468 = vpack.c.b16 %v3815, %v3814
    %v4469 = vpack.c.b16 %v3817, %v3816
    %v4470 = vpack.c.b16 %v3819, %v3818
    %v4471 = vpack.c.b16 %v3821, %v3820
    %v4472 = vpack.c.b16 %v3823, %v3822
    %v4473 = vpack.c.b16 %v3825, %v3824
    %v4474 = vpack.c.b16 %v3827, %v3826
    %v4475 = vpack.c.b16 %v3829, %v3828
    %v4476 = vpack.c.b16 %v3831, %v3830
    %v4477 = vpack.c.b16 %v3833, %v3832
    %v4478 = vpack.c.b16 %v3835, %v3834
    %v4479 = vpack.c.b16 %v3837, %v3836
    %v4480 = vpack.c.b16 %v3839, %v3838
    %v4481 = vpack.c.b16 %v3841, %v3840
    %v4482 = vpack.c.b16 %v3843, %v3842
    %v4483 = vpack.c.b16 %v3845, %v3844
    %v4484 = vpack.c.b16 %v3847, %v3846
    %v4485 = vpack.c.b16 %v3849, %v3848
    %v4486 = vpack.c.b16 %v3851, %v3850
    %v4487 = vpack.c.b16 %v3853, %v3852
    %v4488 = vpack.c.b16 %v3855, %v3854
    %v4489 = vpack.c.b16 %v3857, %v3856
    %v4490 = vpack.c.b16 %v3859, %v3858
    %v4491 = vpack.c.b16 %v3861, %v3860
    %v4492 = vpack.c.b16 %v3863, %v3862
    %v4493 = vpack.c.b16 %v3865, %v3864
    %v4494 = vpack.c.b16 %v3867, %v3866
    %v4495 = vpack.c.b16 %v3869, %v3868
    %v4496 = vpack.c.b16 %v3871, %v3870
    %v4497 = vpack.c.b16 %v3873, %v3872
    %v4498 = vpack.c.b16 %v3875, %v3874
    %v4499 = vpack.c.b16 %v3877, %v3876
    %v4500 = vpack.c.b16 %v3879, %v3878
    %v4501 = vpack.c.b16 %v3881, %v3880
    %v4502 = vpack.c.b16 %v3883, %v3882
    %v4503 = vpack.c.b16 %v3885, %v3884
    %v4504 = vpack.c.b16 %v3887, %v3886
    %v4505 = vpack.c.b16 %v3889, %v3888
    %v4506 = vpack.c.b16 %v3891, %v3890
    %v4507 = vpack.c.b16 %v3893, %v3892
    %v4508 = vpack.c.b16 %v3895, %v3894
    %v4509 = vpack.c.b16 %v3897, %v3896
    %v4510 = vpack.c.b16 %v3899, %v3898
    %v4511 = vpack.c.b16 %v3901, %v3900
    %v4512 = vpack.c.b16 %v3903, %v3902
    %v4513 = vpack.c.b16 %v3905, %v3904
    %v4514 = vpack.c.b16 %v3907, %v3906
    %v4515 = vpack.c.b16 %v3909, %v3908
    %v4516 = vpack.c.b16 %v3911, %v3910
    %v4517 = vpack.c.b16 %v3913, %v3912
    %v4518 = vpack.c.b16 %v3915, %v3914
    %v4519 = vpack.c.b16 %v3917, %v3916
    %v4520 = vpack.c.b16 %v3919, %v3918
    %v4521 = vpack.c.b16 %v3921, %v3920
    %v4522 = vpack.c.b16 %v3923, %v3922
    %v4523 = vpack.c.b16 %v3925, %v3924
    %v4524 = vpack.c.b16 %v3927, %v3926
    %v4525 = vpack.c.b16 %v3929, %v3928
    %v4526 = vpack.c.b16 %v3931, %v3930
    %v4527 = vpack.c.b16 %v3933, %v3932
    %v4528 = vpack.c.b16 %v3935, %v3934
    %v4529 = vpack.c.b16 %v3937, %v3936
    %v4530 = vpack.c.b16 %v3939, %v3938
    %v4531 = vpack.c.b16 %v3941, %v3940
    %v4532 = vpack.c.b16 %v3943, %v3942
    %v4533 = vpack.c.b16 %v3945, %v3944
    %v4534 = vpack.c.b16 %v3947, %v3946
    %v4535 = vpack.c.b16 %v3949, %v3948
    %v4536 = vpack.c.b16 %v3951, %v3950
    %v4537 = vpack.c.b16 %v3953, %v3952
    %v4538 = vpack.c.b16 %v3955, %v3954
    %v4539 = vpack.c.b16 %v3957, %v3956
    %v4540 = vpack.c.b16 %v3959, %v3958
    %v4541 = vpack.c.b16 %v3961, %v3960
    %v4542 = vpack.c.b16 %v3963, %v3962
    %v4543 = vpack.c.b16 %v3965, %v3964
    %v4544 = vpack.c.b16 %v3967, %v3966
    %v4545 = vpack.c.b16 %v3969, %v3968
    %5122 = vmatprep.subr.bf16.mxu0 0
    %5123 = vmatpush1.bf16.msra.mxu0 %v3970
    %5124 = vmatprep.subr.bf16.mxu0 0
    %5125 = vmatpush1.bf16.msra.mxu0 %v3971
    %5126 = vmatprep.subr.bf16.mxu0 0
    %5127 = vmatpush1.bf16.msra.mxu0 %v3972
    %5128 = vmatprep.subr.bf16.mxu0 0
    %5129 = vmatpush1.bf16.msra.mxu0 %v3973
    %5130 = vmatprep.subr.bf16.mxu0 0
    %5131 = vmatpush1.bf16.msra.mxu0 %v3974
    %5132 = vmatprep.subr.bf16.mxu0 0
    %5133 = vmatpush1.bf16.msra.mxu0 %v3975
    %5134 = vmatprep.subr.bf16.mxu0 0
    %5135 = vmatpush1.bf16.msra.mxu0 %v3976
    %5136 = vmatprep.subr.bf16.mxu0 0
    %5137 = vmatpush1.bf16.msra.mxu0 %v3977
    %5138 = vmatprep.subr.bf16.mxu0 0
    %5139 = vmatpush1.bf16.msra.mxu0 %v3978
    %5140 = vmatprep.subr.bf16.mxu0 0
    %5141 = vmatpush1.bf16.msra.mxu0 %v3979
    %5142 = vmatprep.subr.bf16.mxu0 0
    %5143 = vmatpush1.bf16.msra.mxu0 %v3980
    %5144 = vmatprep.subr.bf16.mxu0 0
    %5145 = vmatpush1.bf16.msra.mxu0 %v3981
    %5146 = vmatprep.subr.bf16.mxu0 0
    %5147 = vmatpush1.bf16.msra.mxu0 %v3982
    %5148 = vmatprep.subr.bf16.mxu0 0
    %5149 = vmatpush1.bf16.msra.mxu0 %v3983
    %5150 = vmatprep.subr.bf16.mxu0 0
    %5151 = vmatpush1.bf16.msra.mxu0 %v3984
    %5152 = vmatprep.subr.bf16.mxu0 0
    %5153 = vmatpush1.bf16.msra.mxu0 %v3985
    %5154 = vmatprep.mubr.bf16.mxu0 %v1523
    %5155 = vmatmul.mubr.bf16.gmra.mrb[0].mxu0 %v1522
    %v5156 = vpop.f32.mrb[0].mxu0
    %v5157 = vadd.f32 %v1412, %v5156
    %v5158 = vpop.f32.mrb[0].mxu0
    %v5159 = vpop.f32.mrb[0].mxu0
    %v5160 = vpop.f32.mrb[0].mxu0
    %5161 = vdwg.mxu0
    %5162 = vmatprep.subr.bf16.mxu0 0
    %5163 = vmatpush1.bf16.msra.mxu0 %v3986
    %5164 = vmatprep.subr.bf16.mxu0 0
    %5165 = vmatpush1.bf16.msra.mxu0 %v3987
    %5166 = vmatprep.subr.bf16.mxu0 0
    %5167 = vmatpush1.bf16.msra.mxu0 %v3988
    %5168 = vmatprep.subr.bf16.mxu0 0
    %5169 = vmatpush1.bf16.msra.mxu0 %v3989
    %5170 = vmatprep.subr.bf16.mxu0 0
    %5171 = vmatpush1.bf16.msra.mxu0 %v3990
    %5172 = vmatprep.subr.bf16.mxu0 0
    %5173 = vmatpush1.bf16.msra.mxu0 %v3991
    %5174 = vmatprep.subr.bf16.mxu0 0
    %5175 = vmatpush1.bf16.msra.mxu0 %v3992
    %5176 = vmatprep.subr.bf16.mxu0 0
    %5177 = vmatpush1.bf16.msra.mxu0 %v3993
    %5178 = vmatprep.subr.bf16.mxu0 0
    %5179 = vmatpush1.bf16.msra.mxu0 %v3994
    %5180 = vmatprep.subr.bf16.mxu0 0
    %5181 = vmatpush1.bf16.msra.mxu0 %v3995
    %5182 = vmatprep.subr.bf16.mxu0 0
    %5183 = vmatpush1.bf16.msra.mxu0 %v3996
    %5184 = vmatprep.subr.bf16.mxu0 0
    %5185 = vmatpush1.bf16.msra.mxu0 %v3997
    %5186 = vmatprep.subr.bf16.mxu0 0
    %5187 = vmatpush1.bf16.msra.mxu0 %v3998
    %5188 = vmatprep.subr.bf16.mxu0 0
    %5189 = vmatpush1.bf16.msra.mxu0 %v3999
    %5190 = vmatprep.subr.bf16.mxu0 0
    %5191 = vmatpush1.bf16.msra.mxu0 %v4000
    %5192 = vmatprep.subr.bf16.mxu0 0
    %5193 = vmatpush1.bf16.msra.mxu0 %v4001
    %5194 = vmatprep.mubr.bf16.mxu0 %v1525
    %5195 = vmatmul.mubr.bf16.gmra.mrb[0].mxu0 %v1524
    %v5196 = vpop.f32.mrb[0].mxu0
    %v5197 = vadd.f32 %v5157, %v5196
    %v5198 = vpop.f32.mrb[0].mxu0
    %v5199 = vpop.f32.mrb[0].mxu0
    %v5200 = vpop.f32.mrb[0].mxu0
    %5201 = vdwg.mxu0
    %5202 = vmatprep.subr.bf16.mxu0 0
    %5203 = vmatpush1.bf16.msra.mxu0 %v4002
    %5204 = vmatprep.subr.bf16.mxu0 0
    %5205 = vmatpush1.bf16.msra.mxu0 %v4003
    %5206 = vmatprep.subr.bf16.mxu0 0
    %5207 = vmatpush1.bf16.msra.mxu0 %v4004
    %5208 = vmatprep.subr.bf16.mxu0 0
    %5209 = vmatpush1.bf16.msra.mxu0 %v4005
    %5210 = vmatprep.subr.bf16.mxu0 0
    %5211 = vmatpush1.bf16.msra.mxu0 %v4006
    %5212 = vmatprep.subr.bf16.mxu0 0
    %5213 = vmatpush1.bf16.msra.mxu0 %v4007
    %5214 = vmatprep.subr.bf16.mxu0 0
    %5215 = vmatpush1.bf16.msra.mxu0 %v4008
    %5216 = vmatprep.subr.bf16.mxu0 0
    %5217 = vmatpush1.bf16.msra.mxu0 %v4009
    %5218 = vmatprep.subr.bf16.mxu0 0
    %5219 = vmatpush1.bf16.msra.mxu0 %v4010
    %5220 = vmatprep.subr.bf16.mxu0 0
    %5221 = vmatpush1.bf16.msra.mxu0 %v4011
    %5222 = vmatprep.subr.bf16.mxu0 0
    %5223 = vmatpush1.bf16.msra.mxu0 %v4012
    %5224 = vmatprep.subr.bf16.mxu0 0
    %5225 = vmatpush1.bf16.msra.mxu0 %v4013
    %5226 = vmatprep.subr.bf16.mxu0 0
    %5227 = vmatpush1.bf16.msra.mxu0 %v4014
    %5228 = vmatprep.subr.bf16.mxu0 0
    %5229 = vmatpush1.bf16.msra.mxu0 %v4015
    %5230 = vmatprep.subr.bf16.mxu0 0
    %5231 = vmatpush1.bf16.msra.mxu0 %v4016
    %5232 = vmatprep.subr.bf16.mxu0 0
    %5233 = vmatpush1.bf16.msra.mxu0 %v4017
    %5234 = vmatprep.mubr.bf16.mxu0 %v1527
    %5235 = vmatmul.mubr.bf16.gmra.mrb[0].mxu0 %v1526
    %v5236 = vpop.f32.mrb[0].mxu0
    %v5237 = vadd.f32 %v5197, %v5236
    %v5238 = vpop.f32.mrb[0].mxu0
    %v5239 = vpop.f32.mrb[0].mxu0
    %v5240 = vpop.f32.mrb[0].mxu0
    %5241 = vdwg.mxu0
    %5242 = vmatprep.subr.bf16.mxu0 0
    %5243 = vmatpush1.bf16.msra.mxu0 %v4018
    %5244 = vmatprep.subr.bf16.mxu0 0
    %5245 = vmatpush1.bf16.msra.mxu0 %v4019
    %5246 = vmatprep.subr.bf16.mxu0 0
    %5247 = vmatpush1.bf16.msra.mxu0 %v4020
    %5248 = vmatprep.subr.bf16.mxu0 0
    %5249 = vmatpush1.bf16.msra.mxu0 %v4021
    %5250 = vmatprep.subr.bf16.mxu0 0
    %5251 = vmatpush1.bf16.msra.mxu0 %v4022
    %5252 = vmatprep.subr.bf16.mxu0 0
    %5253 = vmatpush1.bf16.msra.mxu0 %v4023
    %5254 = vmatprep.subr.bf16.mxu0 0
    %5255 = vmatpush1.bf16.msra.mxu0 %v4024
    %5256 = vmatprep.subr.bf16.mxu0 0
    %5257 = vmatpush1.bf16.msra.mxu0 %v4025
    %5258 = vmatprep.subr.bf16.mxu0 0
    %5259 = vmatpush1.bf16.msra.mxu0 %v4026
    %5260 = vmatprep.subr.bf16.mxu0 0
    %5261 = vmatpush1.bf16.msra.mxu0 %v4027
    %5262 = vmatprep.subr.bf16.mxu0 0
    %5263 = vmatpush1.bf16.msra.mxu0 %v4028
    %5264 = vmatprep.subr.bf16.mxu0 0
    %5265 = vmatpush1.bf16.msra.mxu0 %v4029
    %5266 = vmatprep.subr.bf16.mxu0 0
    %5267 = vmatpush1.bf16.msra.mxu0 %v4030
    %5268 = vmatprep.subr.bf16.mxu0 0
    %5269 = vmatpush1.bf16.msra.mxu0 %v4031
    %5270 = vmatprep.subr.bf16.mxu0 0
    %5271 = vmatpush1.bf16.msra.mxu0 %v4032
    %5272 = vmatprep.subr.bf16.mxu0 0
    %5273 = vmatpush1.bf16.msra.mxu0 %v4033
    %5274 = vmatprep.mubr.bf16.mxu0 %v1529
    %5275 = vmatmul.mubr.bf16.gmra.mrb[0].mxu0 %v1528
    %v5276 = vpop.f32.mrb[0].mxu0
    %v5277 = vadd.f32 %v5237, %v5276
    %v5278 = vpop.f32.mrb[0].mxu0
    %v5279 = vpop.f32.mrb[0].mxu0
    %v5280 = vpop.f32.mrb[0].mxu0
    %5281 = vdwg.mxu0
    %5282 = vmatprep.subr.bf16.mxu0 0
    %5283 = vmatpush1.bf16.msra.mxu0 %v4034
    %5284 = vmatprep.subr.bf16.mxu0 0
    %5285 = vmatpush1.bf16.msra.mxu0 %v4035
    %5286 = vmatprep.subr.bf16.mxu0 0
    %5287 = vmatpush1.bf16.msra.mxu0 %v4036
    %5288 = vmatprep.subr.bf16.mxu0 0
    %5289 = vmatpush1.bf16.msra.mxu0 %v4037
    %5290 = vmatprep.subr.bf16.mxu0 0
    %5291 = vmatpush1.bf16.msra.mxu0 %v4038
    %5292 = vmatprep.subr.bf16.mxu0 0
    %5293 = vmatpush1.bf16.msra.mxu0 %v4039
    %5294 = vmatprep.subr.bf16.mxu0 0
    %5295 = vmatpush1.bf16.msra.mxu0 %v4040
    %5296 = vmatprep.subr.bf16.mxu0 0
    %5297 = vmatpush1.bf16.msra.mxu0 %v4041
    %5298 = vmatprep.subr.bf16.mxu0 0
    %5299 = vmatpush1.bf16.msra.mxu0 %v4042
    %5300 = vmatprep.subr.bf16.mxu0 0
    %5301 = vmatpush1.bf16.msra.mxu0 %v4043
    %5302 = vmatprep.subr.bf16.mxu0 0
    %5303 = vmatpush1.bf16.msra.mxu0 %v4044
    %5304 = vmatprep.subr.bf16.mxu0 0
    %5305 = vmatpush1.bf16.msra.mxu0 %v4045
    %5306 = vmatprep.subr.bf16.mxu0 0
    %5307 = vmatpush1.bf16.msra.mxu0 %v4046
    %5308 = vmatprep.subr.bf16.mxu0 0
    %5309 = vmatpush1.bf16.msra.mxu0 %v4047
    %5310 = vmatprep.subr.bf16.mxu0 0
    %5311 = vmatpush1.bf16.msra.mxu0 %v4048
    %5312 = vmatprep.subr.bf16.mxu0 0
    %5313 = vmatpush1.bf16.msra.mxu0 %v4049
    %5314 = vmatprep.mubr.bf16.mxu0 %v1531
    %5315 = vmatmul.mubr.bf16.gmra.mrb[0].mxu0 %v1530
    %v5316 = vpop.f32.mrb[0].mxu0
    %v5317 = vadd.f32 %v5277, %v5316
    %v5318 = vpop.f32.mrb[0].mxu0
    %v5319 = vpop.f32.mrb[0].mxu0
    %v5320 = vpop.f32.mrb[0].mxu0
    %5321 = vdwg.mxu0
    %5322 = vmatprep.subr.bf16.mxu0 0
    %5323 = vmatpush1.bf16.msra.mxu0 %v4050
    %5324 = vmatprep.subr.bf16.mxu0 0
    %5325 = vmatpush1.bf16.msra.mxu0 %v4051
    %5326 = vmatprep.subr.bf16.mxu0 0
    %5327 = vmatpush1.bf16.msra.mxu0 %v4052
    %5328 = vmatprep.subr.bf16.mxu0 0
    %5329 = vmatpush1.bf16.msra.mxu0 %v4053
    %5330 = vmatprep.subr.bf16.mxu0 0
    %5331 = vmatpush1.bf16.msra.mxu0 %v4054
    %5332 = vmatprep.subr.bf16.mxu0 0
    %5333 = vmatpush1.bf16.msra.mxu0 %v4055
    %5334 = vmatprep.subr.bf16.mxu0 0
    %5335 = vmatpush1.bf16.msra.mxu0 %v4056
    %5336 = vmatprep.subr.bf16.mxu0 0
    %5337 = vmatpush1.bf16.msra.mxu0 %v4057
    %5338 = vmatprep.subr.bf16.mxu0 0
    %5339 = vmatpush1.bf16.msra.mxu0 %v4058
    %5340 = vmatprep.subr.bf16.mxu0 0
    %5341 = vmatpush1.bf16.msra.mxu0 %v4059
    %5342 = vmatprep.subr.bf16.mxu0 0
    %5343 = vmatpush1.bf16.msra.mxu0 %v4060
    %5344 = vmatprep.subr.bf16.mxu0 0
    %5345 = vmatpush1.bf16.msra.mxu0 %v4061
    %5346 = vmatprep.subr.bf16.mxu0 0
    %5347 = vmatpush1.bf16.msra.mxu0 %v4062
    %5348 = vmatprep.subr.bf16.mxu0 0
    %5349 = vmatpush1.bf16.msra.mxu0 %v4063
    %5350 = vmatprep.subr.bf16.mxu0 0
    %5351 = vmatpush1.bf16.msra.mxu0 %v4064
    %5352 = vmatprep.subr.bf16.mxu0 0
    %5353 = vmatpush1.bf16.msra.mxu0 %v4065
    %5354 = vmatprep.mubr.bf16.mxu0 %v1533
    %5355 = vmatmul.mubr.bf16.gmra.mrb[0].mxu0 %v1532
    %v5356 = vpop.f32.mrb[0].mxu0
    %v5357 = vadd.f32 %v5317, %v5356
    %v5358 = vpop.f32.mrb[0].mxu0
    %v5359 = vpop.f32.mrb[0].mxu0
    %v5360 = vpop.f32.mrb[0].mxu0
    %5361 = vdwg.mxu0
    %5362 = vmatprep.subr.bf16.mxu0 0
    %5363 = vmatpush1.bf16.msra.mxu0 %v4066
    %5364 = vmatprep.subr.bf16.mxu0 0
    %5365 = vmatpush1.bf16.msra.mxu0 %v4067
    %5366 = vmatprep.subr.bf16.mxu0 0
    %5367 = vmatpush1.bf16.msra.mxu0 %v4068
    %5368 = vmatprep.subr.bf16.mxu0 0
    %5369 = vmatpush1.bf16.msra.mxu0 %v4069
    %5370 = vmatprep.subr.bf16.mxu0 0
    %5371 = vmatpush1.bf16.msra.mxu0 %v4070
    %5372 = vmatprep.subr.bf16.mxu0 0
    %5373 = vmatpush1.bf16.msra.mxu0 %v4071
    %5374 = vmatprep.subr.bf16.mxu0 0
    %5375 = vmatpush1.bf16.msra.mxu0 %v4072
    %5376 = vmatprep.subr.bf16.mxu0 0
    %5377 = vmatpush1.bf16.msra.mxu0 %v4073
    %5378 = vmatprep.subr.bf16.mxu0 0
    %5379 = vmatpush1.bf16.msra.mxu0 %v4074
    %5380 = vmatprep.subr.bf16.mxu0 0
    %5381 = vmatpush1.bf16.msra.mxu0 %v4075
    %5382 = vmatprep.subr.bf16.mxu0 0
    %5383 = vmatpush1.bf16.msra.mxu0 %v4076
    %5384 = vmatprep.subr.bf16.mxu0 0
    %5385 = vmatpush1.bf16.msra.mxu0 %v4077
    %5386 = vmatprep.subr.bf16.mxu0 0
    %5387 = vmatpush1.bf16.msra.mxu0 %v4078
    %5388 = vmatprep.subr.bf16.mxu0 0
    %5389 = vmatpush1.bf16.msra.mxu0 %v4079
    %5390 = vmatprep.subr.bf16.mxu0 0
    %5391 = vmatpush1.bf16.msra.mxu0 %v4080
    %5392 = vmatprep.subr.bf16.mxu0 0
    %5393 = vmatpush1.bf16.msra.mxu0 %v4081
    %5394 = vmatprep.mubr.bf16.mxu0 %v1535
    %5395 = vmatmul.mubr.bf16.gmra.mrb[0].mxu0 %v1534
    %v5396 = vpop.f32.mrb[0].mxu0
    %v5397 = vadd.f32 %v5357, %v5396
    %v5398 = vpop.f32.mrb[0].mxu0
    %v5399 = vpop.f32.mrb[0].mxu0
    %v5400 = vpop.f32.mrb[0].mxu0
    %5401 = vdwg.mxu0
    %5402 = vmatprep.subr.bf16.mxu0 0
    %5403 = vmatpush1.bf16.msra.mxu0 %v4082
    %5404 = vmatprep.subr.bf16.mxu0 0
    %5405 = vmatpush1.bf16.msra.mxu0 %v4083
    %5406 = vmatprep.subr.bf16.mxu0 0
    %5407 = vmatpush1.bf16.msra.mxu0 %v4084
    %5408 = vmatprep.subr.bf16.mxu0 0
    %5409 = vmatpush1.bf16.msra.mxu0 %v4085
    %5410 = vmatprep.subr.bf16.mxu0 0
    %5411 = vmatpush1.bf16.msra.mxu0 %v4086
    %5412 = vmatprep.subr.bf16.mxu0 0
    %5413 = vmatpush1.bf16.msra.mxu0 %v4087
    %5414 = vmatprep.subr.bf16.mxu0 0
    %5415 = vmatpush1.bf16.msra.mxu0 %v4088
    %5416 = vmatprep.subr.bf16.mxu0 0
    %5417 = vmatpush1.bf16.msra.mxu0 %v4089
    %5418 = vmatprep.subr.bf16.mxu0 0
    %5419 = vmatpush1.bf16.msra.mxu0 %v4090
    %5420 = vmatprep.subr.bf16.mxu0 0
    %5421 = vmatpush1.bf16.msra.mxu0 %v4091
    %5422 = vmatprep.subr.bf16.mxu0 0
    %5423 = vmatpush1.bf16.msra.mxu0 %v4092
    %5424 = vmatprep.subr.bf16.mxu0 0
    %5425 = vmatpush1.bf16.msra.mxu0 %v4093
    %5426 = vmatprep.subr.bf16.mxu0 0
    %5427 = vmatpush1.bf16.msra.mxu0 %v4094
    %5428 = vmatprep.subr.bf16.mxu0 0
    %5429 = vmatpush1.bf16.msra.mxu0 %v4095
    %5430 = vmatprep.subr.bf16.mxu0 0
    %5431 = vmatpush1.bf16.msra.mxu0 %v4096
    %5432 = vmatprep.subr.bf16.mxu0 0
    %5433 = vmatpush1.bf16.msra.mxu0 %v4097
    %5434 = vmatprep.mubr.bf16.mxu0 %v1537
    %5435 = vmatmul.mubr.bf16.gmra.mrb[0].mxu0 %v1536
    %v5436 = vpop.f32.mrb[0].mxu0
    %v5437 = vadd.f32 %v5397, %v5436
    %v5438 = vpop.f32.mrb[0].mxu0
    %v5439 = vpop.f32.mrb[0].mxu0
    %v5440 = vpop.f32.mrb[0].mxu0
    %5441 = vdwg.mxu0
    %5442 = vmatprep.subr.bf16.mxu0 0
    %5443 = vmatpush1.bf16.msra.mxu0 %v4098
    %5444 = vmatprep.subr.bf16.mxu0 0
    %5445 = vmatpush1.bf16.msra.mxu0 %v4099
    %5446 = vmatprep.subr.bf16.mxu0 0
    %5447 = vmatpush1.bf16.msra.mxu0 %v4100
    %5448 = vmatprep.subr.bf16.mxu0 0
    %5449 = vmatpush1.bf16.msra.mxu0 %v4101
    %5450 = vmatprep.subr.bf16.mxu0 0
    %5451 = vmatpush1.bf16.msra.mxu0 %v4102
    %5452 = vmatprep.subr.bf16.mxu0 0
    %5453 = vmatpush1.bf16.msra.mxu0 %v4103
    %5454 = vmatprep.subr.bf16.mxu0 0
    %5455 = vmatpush1.bf16.msra.mxu0 %v4104
    %5456 = vmatprep.subr.bf16.mxu0 0
    %5457 = vmatpush1.bf16.msra.mxu0 %v4105
    %5458 = vmatprep.subr.bf16.mxu0 0
    %5459 = vmatpush1.bf16.msra.mxu0 %v4106
    %5460 = vmatprep.subr.bf16.mxu0 0
    %5461 = vmatpush1.bf16.msra.mxu0 %v4107
    %5462 = vmatprep.subr.bf16.mxu0 0
    %5463 = vmatpush1.bf16.msra.mxu0 %v4108
    %5464 = vmatprep.subr.bf16.mxu0 0
    %5465 = vmatpush1.bf16.msra.mxu0 %v4109
    %5466 = vmatprep.subr.bf16.mxu0 0
    %5467 = vmatpush1.bf16.msra.mxu0 %v4110
    %5468 = vmatprep.subr.bf16.mxu0 0
    %5469 = vmatpush1.bf16.msra.mxu0 %v4111
    %5470 = vmatprep.subr.bf16.mxu0 0
    %5471 = vmatpush1.bf16.msra.mxu0 %v4112
    %5472 = vmatprep.subr.bf16.mxu0 0
    %5473 = vmatpush1.bf16.msra.mxu0 %v4113
    %5474 = vmatprep.mubr.bf16.mxu0 %v1539
    %5475 = vmatmul.mubr.bf16.gmra.mrb[0].mxu0 %v1538
    %v5476 = vpop.f32.mrb[0].mxu0
    %v5477 = vadd.f32 %v5437, %v5476
    %v5478 = vpop.f32.mrb[0].mxu0
    %v5479 = vpop.f32.mrb[0].mxu0
    %v5480 = vpop.f32.mrb[0].mxu0
    %5481 = vdwg.mxu0
    %5482 = vmatprep.subr.bf16.mxu0 0
    %5483 = vmatpush1.bf16.msra.mxu0 %v4114
    %5484 = vmatprep.subr.bf16.mxu0 0
    %5485 = vmatpush1.bf16.msra.mxu0 %v4115
    %5486 = vmatprep.subr.bf16.mxu0 0
    %5487 = vmatpush1.bf16.msra.mxu0 %v4116
    %5488 = vmatprep.subr.bf16.mxu0 0
    %5489 = vmatpush1.bf16.msra.mxu0 %v4117
    %5490 = vmatprep.subr.bf16.mxu0 0
    %5491 = vmatpush1.bf16.msra.mxu0 %v4118
    %5492 = vmatprep.subr.bf16.mxu0 0
    %5493 = vmatpush1.bf16.msra.mxu0 %v4119
    %5494 = vmatprep.subr.bf16.mxu0 0
    %5495 = vmatpush1.bf16.msra.mxu0 %v4120
    %5496 = vmatprep.subr.bf16.mxu0 0
    %5497 = vmatpush1.bf16.msra.mxu0 %v4121
    %5498 = vmatprep.subr.bf16.mxu0 0
    %5499 = vmatpush1.bf16.msra.mxu0 %v4122
    %5500 = vmatprep.subr.bf16.mxu0 0
    %5501 = vmatpush1.bf16.msra.mxu0 %v4123
    %5502 = vmatprep.subr.bf16.mxu0 0
    %5503 = vmatpush1.bf16.msra.mxu0 %v4124
    %5504 = vmatprep.subr.bf16.mxu0 0
    %5505 = vmatpush1.bf16.msra.mxu0 %v4125
    %5506 = vmatprep.subr.bf16.mxu0 0
    %5507 = vmatpush1.bf16.msra.mxu0 %v4126
    %5508 = vmatprep.subr.bf16.mxu0 0
    %5509 = vmatpush1.bf16.msra.mxu0 %v4127
    %5510 = vmatprep.subr.bf16.mxu0 0
    %5511 = vmatpush1.bf16.msra.mxu0 %v4128
    %5512 = vmatprep.subr.bf16.mxu0 0
    %5513 = vmatpush1.bf16.msra.mxu0 %v4129
    %5514 = vmatprep.mubr.bf16.mxu0 %v1541
    %5515 = vmatmul.mubr.bf16.gmra.mrb[0].mxu0 %v1540
    %v5516 = vpop.f32.mrb[0].mxu0
    %v5517 = vadd.f32 %v5477, %v5516
    %v5518 = vpop.f32.mrb[0].mxu0
    %v5519 = vpop.f32.mrb[0].mxu0
    %v5520 = vpop.f32.mrb[0].mxu0
    %5521 = vdwg.mxu0
    %5522 = vmatprep.subr.bf16.mxu0 0
    %5523 = vmatpush1.bf16.msra.mxu0 %v4130
    %5524 = vmatprep.subr.bf16.mxu0 0
    %5525 = vmatpush1.bf16.msra.mxu0 %v4131
    %5526 = vmatprep.subr.bf16.mxu0 0
    %5527 = vmatpush1.bf16.msra.mxu0 %v4132
    %5528 = vmatprep.subr.bf16.mxu0 0
    %5529 = vmatpush1.bf16.msra.mxu0 %v4133
    %5530 = vmatprep.subr.bf16.mxu0 0
    %5531 = vmatpush1.bf16.msra.mxu0 %v4134
    %5532 = vmatprep.subr.bf16.mxu0 0
    %5533 = vmatpush1.bf16.msra.mxu0 %v4135
    %5534 = vmatprep.subr.bf16.mxu0 0
    %5535 = vmatpush1.bf16.msra.mxu0 %v4136
    %5536 = vmatprep.subr.bf16.mxu0 0
    %5537 = vmatpush1.bf16.msra.mxu0 %v4137
    %5538 = vmatprep.subr.bf16.mxu0 0
    %5539 = vmatpush1.bf16.msra.mxu0 %v4138
    %5540 = vmatprep.subr.bf16.mxu0 0
    %5541 = vmatpush1.bf16.msra.mxu0 %v4139
    %5542 = vmatprep.subr.bf16.mxu0 0
    %5543 = vmatpush1.bf16.msra.mxu0 %v4140
    %5544 = vmatprep.subr.bf16.mxu0 0
    %5545 = vmatpush1.bf16.msra.mxu0 %v4141
    %5546 = vmatprep.subr.bf16.mxu0 0
    %5547 = vmatpush1.bf16.msra.mxu0 %v4142
    %5548 = vmatprep.subr.bf16.mxu0 0
    %5549 = vmatpush1.bf16.msra.mxu0 %v4143
    %5550 = vmatprep.subr.bf16.mxu0 0
    %5551 = vmatpush1.bf16.msra.mxu0 %v4144
    %5552 = vmatprep.subr.bf16.mxu0 0
    %5553 = vmatpush1.bf16.msra.mxu0 %v4145
    %5554 = vmatprep.mubr.bf16.mxu0 %v1543
    %5555 = vmatmul.mubr.bf16.gmra.mrb[0].mxu0 %v1542
    %v5556 = vpop.f32.mrb[0].mxu0
    %v5557 = vadd.f32 %v5517, %v5556
    %v5558 = vpop.f32.mrb[0].mxu0
    %v5559 = vpop.f32.mrb[0].mxu0
    %v5560 = vpop.f32.mrb[0].mxu0
    %5561 = vdwg.mxu0
    %5562 = vmatprep.subr.bf16.mxu0 0
    %5563 = vmatpush1.bf16.msra.mxu0 %v4146
    %5564 = vmatprep.subr.bf16.mxu0 0
    %5565 = vmatpush1.bf16.msra.mxu0 %v4147
    %5566 = vmatprep.subr.bf16.mxu0 0
    %5567 = vmatpush1.bf16.msra.mxu0 %v4148
    %5568 = vmatprep.subr.bf16.mxu0 0
    %5569 = vmatpush1.bf16.msra.mxu0 %v4149
    %5570 = vmatprep.subr.bf16.mxu0 0
    %5571 = vmatpush1.bf16.msra.mxu0 %v4150
    %5572 = vmatprep.subr.bf16.mxu0 0
    %5573 = vmatpush1.bf16.msra.mxu0 %v4151
    %5574 = vmatprep.subr.bf16.mxu0 0
    %5575 = vmatpush1.bf16.msra.mxu0 %v4152
    %5576 = vmatprep.subr.bf16.mxu0 0
    %5577 = vmatpush1.bf16.msra.mxu0 %v4153
    %5578 = vmatprep.subr.bf16.mxu0 0
    %5579 = vmatpush1.bf16.msra.mxu0 %v4154
    %5580 = vmatprep.subr.bf16.mxu0 0
    %5581 = vmatpush1.bf16.msra.mxu0 %v4155
    %5582 = vmatprep.subr.bf16.mxu0 0
    %5583 = vmatpush1.bf16.msra.mxu0 %v4156
    %5584 = vmatprep.subr.bf16.mxu0 0
    %5585 = vmatpush1.bf16.msra.mxu0 %v4157
    %5586 = vmatprep.subr.bf16.mxu0 0
    %5587 = vmatpush1.bf16.msra.mxu0 %v4158
    %5588 = vmatprep.subr.bf16.mxu0 0
    %5589 = vmatpush1.bf16.msra.mxu0 %v4159
    %5590 = vmatprep.subr.bf16.mxu0 0
    %5591 = vmatpush1.bf16.msra.mxu0 %v4160
    %5592 = vmatprep.subr.bf16.mxu0 0
    %5593 = vmatpush1.bf16.msra.mxu0 %v4161
    %5594 = vmatprep.mubr.bf16.mxu0 %v1545
    %5595 = vmatmul.mubr.bf16.gmra.mrb[0].mxu0 %v1544
    %v5596 = vpop.f32.mrb[0].mxu0
    %v5597 = vadd.f32 %v5557, %v5596
    %v5598 = vpop.f32.mrb[0].mxu0
    %v5599 = vpop.f32.mrb[0].mxu0
    %v5600 = vpop.f32.mrb[0].mxu0
    %5601 = vdwg.mxu0
    %5602 = vmatprep.subr.bf16.mxu0 0
    %5603 = vmatpush1.bf16.msra.mxu0 %v4162
    %5604 = vmatprep.subr.bf16.mxu0 0
    %5605 = vmatpush1.bf16.msra.mxu0 %v4163
    %5606 = vmatprep.subr.bf16.mxu0 0
    %5607 = vmatpush1.bf16.msra.mxu0 %v4164
    %5608 = vmatprep.subr.bf16.mxu0 0
    %5609 = vmatpush1.bf16.msra.mxu0 %v4165
    %5610 = vmatprep.subr.bf16.mxu0 0
    %5611 = vmatpush1.bf16.msra.mxu0 %v4166
    %5612 = vmatprep.subr.bf16.mxu0 0
    %5613 = vmatpush1.bf16.msra.mxu0 %v4167
    %5614 = vmatprep.subr.bf16.mxu0 0
    %5615 = vmatpush1.bf16.msra.mxu0 %v4168
    %5616 = vmatprep.subr.bf16.mxu0 0
    %5617 = vmatpush1.bf16.msra.mxu0 %v4169
    %5618 = vmatprep.subr.bf16.mxu0 0
    %5619 = vmatpush1.bf16.msra.mxu0 %v4170
    %5620 = vmatprep.subr.bf16.mxu0 0
    %5621 = vmatpush1.bf16.msra.mxu0 %v4171
    %5622 = vmatprep.subr.bf16.mxu0 0
    %5623 = vmatpush1.bf16.msra.mxu0 %v4172
    %5624 = vmatprep.subr.bf16.mxu0 0
    %5625 = vmatpush1.bf16.msra.mxu0 %v4173
    %5626 = vmatprep.subr.bf16.mxu0 0
    %5627 = vmatpush1.bf16.msra.mxu0 %v4174
    %5628 = vmatprep.subr.bf16.mxu0 0
    %5629 = vmatpush1.bf16.msra.mxu0 %v4175
    %5630 = vmatprep.subr.bf16.mxu0 0
    %5631 = vmatpush1.bf16.msra.mxu0 %v4176
    %5632 = vmatprep.subr.bf16.mxu0 0
    %5633 = vmatpush1.bf16.msra.mxu0 %v4177
    %5634 = vmatprep.mubr.bf16.mxu0 %v1547
    %5635 = vmatmul.mubr.bf16.gmra.mrb[0].mxu0 %v1546
    %v5636 = vpop.f32.mrb[0].mxu0
    %v5637 = vadd.f32 %v5597, %v5636
    %v5638 = vpop.f32.mrb[0].mxu0
    %v5639 = vpop.f32.mrb[0].mxu0
    %v5640 = vpop.f32.mrb[0].mxu0
    %5641 = vdwg.mxu0
    %5642 = vmatprep.subr.bf16.mxu0 0
    %5643 = vmatpush1.bf16.msra.mxu0 %v4178
    %5644 = vmatprep.subr.bf16.mxu0 0
    %5645 = vmatpush1.bf16.msra.mxu0 %v4179
    %5646 = vmatprep.subr.bf16.mxu0 0
    %5647 = vmatpush1.bf16.msra.mxu0 %v4180
    %5648 = vmatprep.subr.bf16.mxu0 0
    %5649 = vmatpush1.bf16.msra.mxu0 %v4181
    %5650 = vmatprep.subr.bf16.mxu0 0
    %5651 = vmatpush1.bf16.msra.mxu0 %v4182
    %5652 = vmatprep.subr.bf16.mxu0 0
    %5653 = vmatpush1.bf16.msra.mxu0 %v4183
    %5654 = vmatprep.subr.bf16.mxu0 0
    %5655 = vmatpush1.bf16.msra.mxu0 %v4184
    %5656 = vmatprep.subr.bf16.mxu0 0
    %5657 = vmatpush1.bf16.msra.mxu0 %v4185
    %5658 = vmatprep.subr.bf16.mxu0 0
    %5659 = vmatpush1.bf16.msra.mxu0 %v4186
    %5660 = vmatprep.subr.bf16.mxu0 0
    %5661 = vmatpush1.bf16.msra.mxu0 %v4187
    %5662 = vmatprep.subr.bf16.mxu0 0
    %5663 = vmatpush1.bf16.msra.mxu0 %v4188
    %5664 = vmatprep.subr.bf16.mxu0 0
    %5665 = vmatpush1.bf16.msra.mxu0 %v4189
    %5666 = vmatprep.subr.bf16.mxu0 0
    %5667 = vmatpush1.bf16.msra.mxu0 %v4190
    %5668 = vmatprep.subr.bf16.mxu0 0
    %5669 = vmatpush1.bf16.msra.mxu0 %v4191
    %5670 = vmatprep.subr.bf16.mxu0 0
    %5671 = vmatpush1.bf16.msra.mxu0 %v4192
    %5672 = vmatprep.subr.bf16.mxu0 0
    %5673 = vmatpush1.bf16.msra.mxu0 %v4193
    %5674 = vmatprep.mubr.bf16.mxu0 %v1549
    %5675 = vmatmul.mubr.bf16.gmra.mrb[0].mxu0 %v1548
    %v5676 = vpop.f32.mrb[0].mxu0
    %v5677 = vadd.f32 %v5637, %v5676
    %v5678 = vpop.f32.mrb[0].mxu0
    %v5679 = vpop.f32.mrb[0].mxu0
    %v5680 = vpop.f32.mrb[0].mxu0
    %5681 = vdwg.mxu0
    %5682 = vmatprep.subr.bf16.mxu0 0
    %5683 = vmatpush1.bf16.msra.mxu0 %v4194
    %5684 = vmatprep.subr.bf16.mxu0 0
    %5685 = vmatpush1.bf16.msra.mxu0 %v4195
    %5686 = vmatprep.subr.bf16.mxu0 0
    %5687 = vmatpush1.bf16.msra.mxu0 %v4196
    %5688 = vmatprep.subr.bf16.mxu0 0
    %5689 = vmatpush1.bf16.msra.mxu0 %v4197
    %5690 = vmatprep.subr.bf16.mxu0 0
    %5691 = vmatpush1.bf16.msra.mxu0 %v4198
    %5692 = vmatprep.subr.bf16.mxu0 0
    %5693 = vmatpush1.bf16.msra.mxu0 %v4199
    %5694 = vmatprep.subr.bf16.mxu0 0
    %5695 = vmatpush1.bf16.msra.mxu0 %v4200
    %5696 = vmatprep.subr.bf16.mxu0 0
    %5697 = vmatpush1.bf16.msra.mxu0 %v4201
    %5698 = vmatprep.subr.bf16.mxu0 0
    %5699 = vmatpush1.bf16.msra.mxu0 %v4202
    %5700 = vmatprep.subr.bf16.mxu0 0
    %5701 = vmatpush1.bf16.msra.mxu0 %v4203
    %5702 = vmatprep.subr.bf16.mxu0 0
    %5703 = vmatpush1.bf16.msra.mxu0 %v4204
    %5704 = vmatprep.subr.bf16.mxu0 0
    %5705 = vmatpush1.bf16.msra.mxu0 %v4205
    %5706 = vmatprep.subr.bf16.mxu0 0
    %5707 = vmatpush1.bf16.msra.mxu0 %v4206
    %5708 = vmatprep.subr.bf16.mxu0 0
    %5709 = vmatpush1.bf16.msra.mxu0 %v4207
    %5710 = vmatprep.subr.bf16.mxu0 0
    %5711 = vmatpush1.bf16.msra.mxu0 %v4208
    %5712 = vmatprep.subr.bf16.mxu0 0
    %5713 = vmatpush1.bf16.msra.mxu0 %v4209
    %5714 = vmatprep.mubr.bf16.mxu0 %v1551
    %5715 = vmatmul.mubr.bf16.gmra.mrb[0].mxu0 %v1550
    %v5716 = vpop.f32.mrb[0].mxu0
    %v5717 = vadd.f32 %v5677, %v5716
    %v5718 = vpop.f32.mrb[0].mxu0
    %v5719 = vpop.f32.mrb[0].mxu0
    %v5720 = vpop.f32.mrb[0].mxu0
    %5721 = vdwg.mxu0
    %5722 = vmatprep.subr.bf16.mxu0 0
    %5723 = vmatpush1.bf16.msra.mxu0 %v4210
    %5724 = vmatprep.subr.bf16.mxu0 0
    %5725 = vmatpush1.bf16.msra.mxu0 %v4211
    %5726 = vmatprep.subr.bf16.mxu0 0
    %5727 = vmatpush1.bf16.msra.mxu0 %v4212
    %5728 = vmatprep.subr.bf16.mxu0 0
    %5729 = vmatpush1.bf16.msra.mxu0 %v4213
    %5730 = vmatprep.subr.bf16.mxu0 0
    %5731 = vmatpush1.bf16.msra.mxu0 %v4214
    %5732 = vmatprep.subr.bf16.mxu0 0
    %5733 = vmatpush1.bf16.msra.mxu0 %v4215
    %5734 = vmatprep.subr.bf16.mxu0 0
    %5735 = vmatpush1.bf16.msra.mxu0 %v4216
    %5736 = vmatprep.subr.bf16.mxu0 0
    %5737 = vmatpush1.bf16.msra.mxu0 %v4217
    %5738 = vmatprep.subr.bf16.mxu0 0
    %5739 = vmatpush1.bf16.msra.mxu0 %v4218
    %5740 = vmatprep.subr.bf16.mxu0 0
    %5741 = vmatpush1.bf16.msra.mxu0 %v4219
    %5742 = vmatprep.subr.bf16.mxu0 0
    %5743 = vmatpush1.bf16.msra.mxu0 %v4220
    %5744 = vmatprep.subr.bf16.mxu0 0
    %5745 = vmatpush1.bf16.msra.mxu0 %v4221
    %5746 = vmatprep.subr.bf16.mxu0 0
    %5747 = vmatpush1.bf16.msra.mxu0 %v4222
    %5748 = vmatprep.subr.bf16.mxu0 0
    %5749 = vmatpush1.bf16.msra.mxu0 %v4223
    %5750 = vmatprep.subr.bf16.mxu0 0
    %5751 = vmatpush1.bf16.msra.mxu0 %v4224
    %5752 = vmatprep.subr.bf16.mxu0 0
    %5753 = vmatpush1.bf16.msra.mxu0 %v4225
    %5754 = vmatprep.mubr.bf16.mxu0 %v1553
    %5755 = vmatmul.mubr.bf16.gmra.mrb[0].mxu0 %v1552
    %v5756 = vpop.f32.mrb[0].mxu0
    %v5757 = vadd.f32 %v5717, %v5756
    %v5758 = vpop.f32.mrb[0].mxu0
    %v5759 = vpop.f32.mrb[0].mxu0
    %v5760 = vpop.f32.mrb[0].mxu0
    %5761 = vdwg.mxu0
    %5762 = vmatprep.subr.bf16.mxu0 0
    %5763 = vmatpush1.bf16.msra.mxu0 %v4226
    %5764 = vmatprep.subr.bf16.mxu0 0
    %5765 = vmatpush1.bf16.msra.mxu0 %v4227
    %5766 = vmatprep.subr.bf16.mxu0 0
    %5767 = vmatpush1.bf16.msra.mxu0 %v4228
    %5768 = vmatprep.subr.bf16.mxu0 0
    %5769 = vmatpush1.bf16.msra.mxu0 %v4229
    %5770 = vmatprep.subr.bf16.mxu0 0
    %5771 = vmatpush1.bf16.msra.mxu0 %v4230
    %5772 = vmatprep.subr.bf16.mxu0 0
    %5773 = vmatpush1.bf16.msra.mxu0 %v4231
    %5774 = vmatprep.subr.bf16.mxu0 0
    %5775 = vmatpush1.bf16.msra.mxu0 %v4232
    %5776 = vmatprep.subr.bf16.mxu0 0
    %5777 = vmatpush1.bf16.msra.mxu0 %v4233
    %5778 = vmatprep.subr.bf16.mxu0 0
    %5779 = vmatpush1.bf16.msra.mxu0 %v4234
    %5780 = vmatprep.subr.bf16.mxu0 0
    %5781 = vmatpush1.bf16.msra.mxu0 %v4235
    %5782 = vmatprep.subr.bf16.mxu0 0
    %5783 = vmatpush1.bf16.msra.mxu0 %v4236
    %5784 = vmatprep.subr.bf16.mxu0 0
    %5785 = vmatpush1.bf16.msra.mxu0 %v4237
    %5786 = vmatprep.subr.bf16.mxu0 0
    %5787 = vmatpush1.bf16.msra.mxu0 %v4238
    %5788 = vmatprep.subr.bf16.mxu0 0
    %5789 = vmatpush1.bf16.msra.mxu0 %v4239
    %5790 = vmatprep.subr.bf16.mxu0 0
    %5791 = vmatpush1.bf16.msra.mxu0 %v4240
    %5792 = vmatprep.subr.bf16.mxu0 0
    %5793 = vmatpush1.bf16.msra.mxu0 %v4241
    %5794 = vmatprep.mubr.bf16.mxu0 %v1555
    %5795 = vmatmul.mubr.bf16.gmra.mrb[0].mxu0 %v1554
    %v5796 = vpop.f32.mrb[0].mxu0
    %v5797 = vadd.f32 %v5757, %v5796
    %v5798 = vpop.f32.mrb[0].mxu0
    %v5799 = vpop.f32.mrb[0].mxu0
    %v5800 = vpop.f32.mrb[0].mxu0
    %5801 = vdwg.mxu0
    %5802 = vmatprep.subr.bf16.mxu0 0
    %5803 = vmatpush1.bf16.msra.mxu0 %v4242
    %5804 = vmatprep.subr.bf16.mxu0 0
    %5805 = vmatpush1.bf16.msra.mxu0 %v4243
    %5806 = vmatprep.subr.bf16.mxu0 0
    %5807 = vmatpush1.bf16.msra.mxu0 %v4244
    %5808 = vmatprep.subr.bf16.mxu0 0
    %5809 = vmatpush1.bf16.msra.mxu0 %v4245
    %5810 = vmatprep.subr.bf16.mxu0 0
    %5811 = vmatpush1.bf16.msra.mxu0 %v4246
    %5812 = vmatprep.subr.bf16.mxu0 0
    %5813 = vmatpush1.bf16.msra.mxu0 %v4247
    %5814 = vmatprep.subr.bf16.mxu0 0
    %5815 = vmatpush1.bf16.msra.mxu0 %v4248
    %5816 = vmatprep.subr.bf16.mxu0 0
    %5817 = vmatpush1.bf16.msra.mxu0 %v4249
    %5818 = vmatprep.subr.bf16.mxu0 0
    %5819 = vmatpush1.bf16.msra.mxu0 %v4250
    %5820 = vmatprep.subr.bf16.mxu0 0
    %5821 = vmatpush1.bf16.msra.mxu0 %v4251
    %5822 = vmatprep.subr.bf16.mxu0 0
    %5823 = vmatpush1.bf16.msra.mxu0 %v4252
    %5824 = vmatprep.subr.bf16.mxu0 0
    %5825 = vmatpush1.bf16.msra.mxu0 %v4253
    %5826 = vmatprep.subr.bf16.mxu0 0
    %5827 = vmatpush1.bf16.msra.mxu0 %v4254
    %5828 = vmatprep.subr.bf16.mxu0 0
    %5829 = vmatpush1.bf16.msra.mxu0 %v4255
    %5830 = vmatprep.subr.bf16.mxu0 0
    %5831 = vmatpush1.bf16.msra.mxu0 %v4256
    %5832 = vmatprep.subr.bf16.mxu0 0
    %5833 = vmatpush1.bf16.msra.mxu0 %v4257
    %5834 = vmatprep.mubr.bf16.mxu0 %v1557
    %5835 = vmatmul.mubr.bf16.gmra.mrb[0].mxu0 %v1556
    %v5836 = vpop.f32.mrb[0].mxu0
    %v5837 = vadd.f32 %v5797, %v5836
    %v5838 = vpop.f32.mrb[0].mxu0
    %v5839 = vpop.f32.mrb[0].mxu0
    %v5840 = vpop.f32.mrb[0].mxu0
    %5841 = vdwg.mxu0
    %5842 = vmatprep.subr.bf16.mxu0 0
    %5843 = vmatpush1.bf16.msra.mxu0 %v4258
    %5844 = vmatprep.subr.bf16.mxu0 0
    %5845 = vmatpush1.bf16.msra.mxu0 %v4259
    %5846 = vmatprep.subr.bf16.mxu0 0
    %5847 = vmatpush1.bf16.msra.mxu0 %v4260
    %5848 = vmatprep.subr.bf16.mxu0 0
    %5849 = vmatpush1.bf16.msra.mxu0 %v4261
    %5850 = vmatprep.subr.bf16.mxu0 0
    %5851 = vmatpush1.bf16.msra.mxu0 %v4262
    %5852 = vmatprep.subr.bf16.mxu0 0
    %5853 = vmatpush1.bf16.msra.mxu0 %v4263
    %5854 = vmatprep.subr.bf16.mxu0 0
    %5855 = vmatpush1.bf16.msra.mxu0 %v4264
    %5856 = vmatprep.subr.bf16.mxu0 0
    %5857 = vmatpush1.bf16.msra.mxu0 %v4265
    %5858 = vmatprep.subr.bf16.mxu0 0
    %5859 = vmatpush1.bf16.msra.mxu0 %v4266
    %5860 = vmatprep.subr.bf16.mxu0 0
    %5861 = vmatpush1.bf16.msra.mxu0 %v4267
    %5862 = vmatprep.subr.bf16.mxu0 0
    %5863 = vmatpush1.bf16.msra.mxu0 %v4268
    %5864 = vmatprep.subr.bf16.mxu0 0
    %5865 = vmatpush1.bf16.msra.mxu0 %v4269
    %5866 = vmatprep.subr.bf16.mxu0 0
    %5867 = vmatpush1.bf16.msra.mxu0 %v4270
    %5868 = vmatprep.subr.bf16.mxu0 0
    %5869 = vmatpush1.bf16.msra.mxu0 %v4271
    %5870 = vmatprep.subr.bf16.mxu0 0
    %5871 = vmatpush1.bf16.msra.mxu0 %v4272
    %5872 = vmatprep.subr.bf16.mxu0 0
    %5873 = vmatpush1.bf16.msra.mxu0 %v4273
    %5874 = vmatprep.mubr.bf16.mxu0 %v1559
    %5875 = vmatmul.mubr.bf16.gmra.mrb[0].mxu0 %v1558
    %v5876 = vpop.f32.mrb[0].mxu0
    %v5877 = vadd.f32 %v5837, %v5876
    %v5878 = vpop.f32.mrb[0].mxu0
    %v5879 = vpop.f32.mrb[0].mxu0
    %v5880 = vpop.f32.mrb[0].mxu0
    %5881 = vdwg.mxu0
    %5882 = vmatprep.subr.bf16.mxu0 0
    %5883 = vmatpush1.bf16.msra.mxu0 %v4274
    %5884 = vmatprep.subr.bf16.mxu0 0
    %5885 = vmatpush1.bf16.msra.mxu0 %v4275
    %5886 = vmatprep.subr.bf16.mxu0 0
    %5887 = vmatpush1.bf16.msra.mxu0 %v4276
    %5888 = vmatprep.subr.bf16.mxu0 0
    %5889 = vmatpush1.bf16.msra.mxu0 %v4277
    %5890 = vmatprep.subr.bf16.mxu0 0
    %5891 = vmatpush1.bf16.msra.mxu0 %v4278
    %5892 = vmatprep.subr.bf16.mxu0 0
    %5893 = vmatpush1.bf16.msra.mxu0 %v4279
    %5894 = vmatprep.subr.bf16.mxu0 0
    %5895 = vmatpush1.bf16.msra.mxu0 %v4280
    %5896 = vmatprep.subr.bf16.mxu0 0
    %5897 = vmatpush1.bf16.msra.mxu0 %v4281
    %5898 = vmatprep.subr.bf16.mxu0 0
    %5899 = vmatpush1.bf16.msra.mxu0 %v4282
    %5900 = vmatprep.subr.bf16.mxu0 0
    %5901 = vmatpush1.bf16.msra.mxu0 %v4283
    %5902 = vmatprep.subr.bf16.mxu0 0
    %5903 = vmatpush1.bf16.msra.mxu0 %v4284
    %5904 = vmatprep.subr.bf16.mxu0 0
    %5905 = vmatpush1.bf16.msra.mxu0 %v4285
    %5906 = vmatprep.subr.bf16.mxu0 0
    %5907 = vmatpush1.bf16.msra.mxu0 %v4286
    %5908 = vmatprep.subr.bf16.mxu0 0
    %5909 = vmatpush1.bf16.msra.mxu0 %v4287
    %5910 = vmatprep.subr.bf16.mxu0 0
    %5911 = vmatpush1.bf16.msra.mxu0 %v4288
    %5912 = vmatprep.subr.bf16.mxu0 0
    %5913 = vmatpush1.bf16.msra.mxu0 %v4289
    %5914 = vmatprep.mubr.bf16.mxu0 %v1561
    %5915 = vmatmul.mubr.bf16.gmra.mrb[0].mxu0 %v1560
    %v5916 = vpop.f32.mrb[0].mxu0
    %v5917 = vadd.f32 %v5877, %v5916
    %v5918 = vpop.f32.mrb[0].mxu0
    %v5919 = vpop.f32.mrb[0].mxu0
    %v5920 = vpop.f32.mrb[0].mxu0
    %5921 = vdwg.mxu0
    %5922 = vmatprep.subr.bf16.mxu0 0
    %5923 = vmatpush1.bf16.msra.mxu0 %v4290
    %5924 = vmatprep.subr.bf16.mxu0 0
    %5925 = vmatpush1.bf16.msra.mxu0 %v4291
    %5926 = vmatprep.subr.bf16.mxu0 0
    %5927 = vmatpush1.bf16.msra.mxu0 %v4292
    %5928 = vmatprep.subr.bf16.mxu0 0
    %5929 = vmatpush1.bf16.msra.mxu0 %v4293
    %5930 = vmatprep.subr.bf16.mxu0 0
    %5931 = vmatpush1.bf16.msra.mxu0 %v4294
    %5932 = vmatprep.subr.bf16.mxu0 0
    %5933 = vmatpush1.bf16.msra.mxu0 %v4295
    %5934 = vmatprep.subr.bf16.mxu0 0
    %5935 = vmatpush1.bf16.msra.mxu0 %v4296
    %5936 = vmatprep.subr.bf16.mxu0 0
    %5937 = vmatpush1.bf16.msra.mxu0 %v4297
    %5938 = vmatprep.subr.bf16.mxu0 0
    %5939 = vmatpush1.bf16.msra.mxu0 %v4298
    %5940 = vmatprep.subr.bf16.mxu0 0
    %5941 = vmatpush1.bf16.msra.mxu0 %v4299
    %5942 = vmatprep.subr.bf16.mxu0 0
    %5943 = vmatpush1.bf16.msra.mxu0 %v4300
    %5944 = vmatprep.subr.bf16.mxu0 0
    %5945 = vmatpush1.bf16.msra.mxu0 %v4301
    %5946 = vmatprep.subr.bf16.mxu0 0
    %5947 = vmatpush1.bf16.msra.mxu0 %v4302
    %5948 = vmatprep.subr.bf16.mxu0 0
    %5949 = vmatpush1.bf16.msra.mxu0 %v4303
    %5950 = vmatprep.subr.bf16.mxu0 0
    %5951 = vmatpush1.bf16.msra.mxu0 %v4304
    %5952 = vmatprep.subr.bf16.mxu0 0
    %5953 = vmatpush1.bf16.msra.mxu0 %v4305
    %5954 = vmatprep.mubr.bf16.mxu0 %v1563
    %5955 = vmatmul.mubr.bf16.gmra.mrb[0].mxu0 %v1562
    %v5956 = vpop.f32.mrb[0].mxu0
    %v5957 = vadd.f32 %v5917, %v5956
    %v5958 = vpop.f32.mrb[0].mxu0
    %v5959 = vpop.f32.mrb[0].mxu0
    %v5960 = vpop.f32.mrb[0].mxu0
    %5961 = vdwg.mxu0
    %5962 = vmatprep.subr.bf16.mxu0 0
    %5963 = vmatpush1.bf16.msra.mxu0 %v4306
    %5964 = vmatprep.subr.bf16.mxu0 0
    %5965 = vmatpush1.bf16.msra.mxu0 %v4307
    %5966 = vmatprep.subr.bf16.mxu0 0
    %5967 = vmatpush1.bf16.msra.mxu0 %v4308
    %5968 = vmatprep.subr.bf16.mxu0 0
    %5969 = vmatpush1.bf16.msra.mxu0 %v4309
    %5970 = vmatprep.subr.bf16.mxu0 0
    %5971 = vmatpush1.bf16.msra.mxu0 %v4310
    %5972 = vmatprep.subr.bf16.mxu0 0
    %5973 = vmatpush1.bf16.msra.mxu0 %v4311
    %5974 = vmatprep.subr.bf16.mxu0 0
    %5975 = vmatpush1.bf16.msra.mxu0 %v4312
    %5976 = vmatprep.subr.bf16.mxu0 0
    %5977 = vmatpush1.bf16.msra.mxu0 %v4313
    %5978 = vmatprep.subr.bf16.mxu0 0
    %5979 = vmatpush1.bf16.msra.mxu0 %v4314
    %5980 = vmatprep.subr.bf16.mxu0 0
    %5981 = vmatpush1.bf16.msra.mxu0 %v4315
    %5982 = vmatprep.subr.bf16.mxu0 0
    %5983 = vmatpush1.bf16.msra.mxu0 %v4316
    %5984 = vmatprep.subr.bf16.mxu0 0
    %5985 = vmatpush1.bf16.msra.mxu0 %v4317
    %5986 = vmatprep.subr.bf16.mxu0 0
    %5987 = vmatpush1.bf16.msra.mxu0 %v4318
    %5988 = vmatprep.subr.bf16.mxu0 0
    %5989 = vmatpush1.bf16.msra.mxu0 %v4319
    %5990 = vmatprep.subr.bf16.mxu0 0
    %5991 = vmatpush1.bf16.msra.mxu0 %v4320
    %5992 = vmatprep.subr.bf16.mxu0 0
    %5993 = vmatpush1.bf16.msra.mxu0 %v4321
    %5994 = vmatprep.mubr.bf16.mxu0 %v1565
    %5995 = vmatmul.mubr.bf16.gmra.mrb[0].mxu0 %v1564
    %v5996 = vpop.f32.mrb[0].mxu0
    %v5997 = vadd.f32 %v5957, %v5996
    %v5998 = vpop.f32.mrb[0].mxu0
    %v5999 = vpop.f32.mrb[0].mxu0
    %v6000 = vpop.f32.mrb[0].mxu0
    %6001 = vdwg.mxu0
    %6002 = vmatprep.subr.bf16.mxu0 0
    %6003 = vmatpush1.bf16.msra.mxu0 %v4322
    %6004 = vmatprep.subr.bf16.mxu0 0
    %6005 = vmatpush1.bf16.msra.mxu0 %v4323
    %6006 = vmatprep.subr.bf16.mxu0 0
    %6007 = vmatpush1.bf16.msra.mxu0 %v4324
    %6008 = vmatprep.subr.bf16.mxu0 0
    %6009 = vmatpush1.bf16.msra.mxu0 %v4325
    %6010 = vmatprep.subr.bf16.mxu0 0
    %6011 = vmatpush1.bf16.msra.mxu0 %v4326
    %6012 = vmatprep.subr.bf16.mxu0 0
    %6013 = vmatpush1.bf16.msra.mxu0 %v4327
    %6014 = vmatprep.subr.bf16.mxu0 0
    %6015 = vmatpush1.bf16.msra.mxu0 %v4328
    %6016 = vmatprep.subr.bf16.mxu0 0
    %6017 = vmatpush1.bf16.msra.mxu0 %v4329
    %6018 = vmatprep.subr.bf16.mxu0 0
    %6019 = vmatpush1.bf16.msra.mxu0 %v4330
    %6020 = vmatprep.subr.bf16.mxu0 0
    %6021 = vmatpush1.bf16.msra.mxu0 %v4331
    %6022 = vmatprep.subr.bf16.mxu0 0
    %6023 = vmatpush1.bf16.msra.mxu0 %v4332
    %6024 = vmatprep.subr.bf16.mxu0 0
    %6025 = vmatpush1.bf16.msra.mxu0 %v4333
    %6026 = vmatprep.subr.bf16.mxu0 0
    %6027 = vmatpush1.bf16.msra.mxu0 %v4334
    %6028 = vmatprep.subr.bf16.mxu0 0
    %6029 = vmatpush1.bf16.msra.mxu0 %v4335
    %6030 = vmatprep.subr.bf16.mxu0 0
    %6031 = vmatpush1.bf16.msra.mxu0 %v4336
    %6032 = vmatprep.subr.bf16.mxu0 0
    %6033 = vmatpush1.bf16.msra.mxu0 %v4337
    %6034 = vmatprep.mubr.bf16.mxu0 %v1567
    %6035 = vmatmul.mubr.bf16.gmra.mrb[0].mxu0 %v1566
    %v6036 = vpop.f32.mrb[0].mxu0
    %v6037 = vadd.f32 %v5997, %v6036
    %v6038 = vpop.f32.mrb[0].mxu0
    %v6039 = vpop.f32.mrb[0].mxu0
    %v6040 = vpop.f32.mrb[0].mxu0
    %6041 = vdwg.mxu0
    %6042 = vmatprep.subr.bf16.mxu0 0
    %6043 = vmatpush1.bf16.msra.mxu0 %v4338
    %6044 = vmatprep.subr.bf16.mxu0 0
    %6045 = vmatpush1.bf16.msra.mxu0 %v4339
    %6046 = vmatprep.subr.bf16.mxu0 0
    %6047 = vmatpush1.bf16.msra.mxu0 %v4340
    %6048 = vmatprep.subr.bf16.mxu0 0
    %6049 = vmatpush1.bf16.msra.mxu0 %v4341
    %6050 = vmatprep.subr.bf16.mxu0 0
    %6051 = vmatpush1.bf16.msra.mxu0 %v4342
    %6052 = vmatprep.subr.bf16.mxu0 0
    %6053 = vmatpush1.bf16.msra.mxu0 %v4343
    %6054 = vmatprep.subr.bf16.mxu0 0
    %6055 = vmatpush1.bf16.msra.mxu0 %v4344
    %6056 = vmatprep.subr.bf16.mxu0 0
    %6057 = vmatpush1.bf16.msra.mxu0 %v4345
    %6058 = vmatprep.subr.bf16.mxu0 0
    %6059 = vmatpush1.bf16.msra.mxu0 %v4346
    %6060 = vmatprep.subr.bf16.mxu0 0
    %6061 = vmatpush1.bf16.msra.mxu0 %v4347
    %6062 = vmatprep.subr.bf16.mxu0 0
    %6063 = vmatpush1.bf16.msra.mxu0 %v4348
    %6064 = vmatprep.subr.bf16.mxu0 0
    %6065 = vmatpush1.bf16.msra.mxu0 %v4349
    %6066 = vmatprep.subr.bf16.mxu0 0
    %6067 = vmatpush1.bf16.msra.mxu0 %v4350
    %6068 = vmatprep.subr.bf16.mxu0 0
    %6069 = vmatpush1.bf16.msra.mxu0 %v4351
    %6070 = vmatprep.subr.bf16.mxu0 0
    %6071 = vmatpush1.bf16.msra.mxu0 %v4352
    %6072 = vmatprep.subr.bf16.mxu0 0
    %6073 = vmatpush1.bf16.msra.mxu0 %v4353
    %6074 = vmatprep.mubr.bf16.mxu0 %v1569
    %6075 = vmatmul.mubr.bf16.gmra.mrb[0].mxu0 %v1568
    %v6076 = vpop.f32.mrb[0].mxu0
    %v6077 = vadd.f32 %v6037, %v6076
    %v6078 = vpop.f32.mrb[0].mxu0
    %v6079 = vpop.f32.mrb[0].mxu0
    %v6080 = vpop.f32.mrb[0].mxu0
    %6081 = vdwg.mxu0
    %6082 = vmatprep.subr.bf16.mxu0 0
    %6083 = vmatpush1.bf16.msra.mxu0 %v4354
    %6084 = vmatprep.subr.bf16.mxu0 0
    %6085 = vmatpush1.bf16.msra.mxu0 %v4355
    %6086 = vmatprep.subr.bf16.mxu0 0
    %6087 = vmatpush1.bf16.msra.mxu0 %v4356
    %6088 = vmatprep.subr.bf16.mxu0 0
    %6089 = vmatpush1.bf16.msra.mxu0 %v4357
    %6090 = vmatprep.subr.bf16.mxu0 0
    %6091 = vmatpush1.bf16.msra.mxu0 %v4358
    %6092 = vmatprep.subr.bf16.mxu0 0
    %6093 = vmatpush1.bf16.msra.mxu0 %v4359
    %6094 = vmatprep.subr.bf16.mxu0 0
    %6095 = vmatpush1.bf16.msra.mxu0 %v4360
    %6096 = vmatprep.subr.bf16.mxu0 0
    %6097 = vmatpush1.bf16.msra.mxu0 %v4361
    %6098 = vmatprep.subr.bf16.mxu0 0
    %6099 = vmatpush1.bf16.msra.mxu0 %v4362
    %6100 = vmatprep.subr.bf16.mxu0 0
    %6101 = vmatpush1.bf16.msra.mxu0 %v4363
    %6102 = vmatprep.subr.bf16.mxu0 0
    %6103 = vmatpush1.bf16.msra.mxu0 %v4364
    %6104 = vmatprep.subr.bf16.mxu0 0
    %6105 = vmatpush1.bf16.msra.mxu0 %v4365
    %6106 = vmatprep.subr.bf16.mxu0 0
    %6107 = vmatpush1.bf16.msra.mxu0 %v4366
    %6108 = vmatprep.subr.bf16.mxu0 0
    %6109 = vmatpush1.bf16.msra.mxu0 %v4367
    %6110 = vmatprep.subr.bf16.mxu0 0
    %6111 = vmatpush1.bf16.msra.mxu0 %v4368
    %6112 = vmatprep.subr.bf16.mxu0 0
    %6113 = vmatpush1.bf16.msra.mxu0 %v4369
    %6114 = vmatprep.mubr.bf16.mxu0 %v1571
    %6115 = vmatmul.mubr.bf16.gmra.mrb[0].mxu0 %v1570
    %v6116 = vpop.f32.mrb[0].mxu0
    %v6117 = vadd.f32 %v6077, %v6116
    %v6118 = vpop.f32.mrb[0].mxu0
    %v6119 = vpop.f32.mrb[0].mxu0
    %v6120 = vpop.f32.mrb[0].mxu0
    %6121 = vdwg.mxu0
    %6122 = vmatprep.subr.bf16.mxu0 0
    %6123 = vmatpush1.bf16.msra.mxu0 %v4370
    %6124 = vmatprep.subr.bf16.mxu0 0
    %6125 = vmatpush1.bf16.msra.mxu0 %v4371
    %6126 = vmatprep.subr.bf16.mxu0 0
    %6127 = vmatpush1.bf16.msra.mxu0 %v4372
    %6128 = vmatprep.subr.bf16.mxu0 0
    %6129 = vmatpush1.bf16.msra.mxu0 %v4373
    %6130 = vmatprep.subr.bf16.mxu0 0
    %6131 = vmatpush1.bf16.msra.mxu0 %v4374
    %6132 = vmatprep.subr.bf16.mxu0 0
    %6133 = vmatpush1.bf16.msra.mxu0 %v4375
    %6134 = vmatprep.subr.bf16.mxu0 0
    %6135 = vmatpush1.bf16.msra.mxu0 %v4376
    %6136 = vmatprep.subr.bf16.mxu0 0
    %6137 = vmatpush1.bf16.msra.mxu0 %v4377
    %6138 = vmatprep.subr.bf16.mxu0 0
    %6139 = vmatpush1.bf16.msra.mxu0 %v4378
    %6140 = vmatprep.subr.bf16.mxu0 0
    %6141 = vmatpush1.bf16.msra.mxu0 %v4379
    %6142 = vmatprep.subr.bf16.mxu0 0
    %6143 = vmatpush1.bf16.msra.mxu0 %v4380
    %6144 = vmatprep.subr.bf16.mxu0 0
    %6145 = vmatpush1.bf16.msra.mxu0 %v4381
    %6146 = vmatprep.subr.bf16.mxu0 0
    %6147 = vmatpush1.bf16.msra.mxu0 %v4382
    %6148 = vmatprep.subr.bf16.mxu0 0
    %6149 = vmatpush1.bf16.msra.mxu0 %v4383
    %6150 = vmatprep.subr.bf16.mxu0 0
    %6151 = vmatpush1.bf16.msra.mxu0 %v4384
    %6152 = vmatprep.subr.bf16.mxu0 0
    %6153 = vmatpush1.bf16.msra.mxu0 %v4385
    %6154 = vmatprep.mubr.bf16.mxu0 %v1573
    %6155 = vmatmul.mubr.bf16.gmra.mrb[0].mxu0 %v1572
    %v6156 = vpop.f32.mrb[0].mxu0
    %v6157 = vadd.f32 %v6117, %v6156
    %v6158 = vpop.f32.mrb[0].mxu0
    %v6159 = vpop.f32.mrb[0].mxu0
    %v6160 = vpop.f32.mrb[0].mxu0
    %6161 = vdwg.mxu0
    %6162 = vmatprep.subr.bf16.mxu0 0
    %6163 = vmatpush1.bf16.msra.mxu0 %v4386
    %6164 = vmatprep.subr.bf16.mxu0 0
    %6165 = vmatpush1.bf16.msra.mxu0 %v4387
    %6166 = vmatprep.subr.bf16.mxu0 0
    %6167 = vmatpush1.bf16.msra.mxu0 %v4388
    %6168 = vmatprep.subr.bf16.mxu0 0
    %6169 = vmatpush1.bf16.msra.mxu0 %v4389
    %6170 = vmatprep.subr.bf16.mxu0 0
    %6171 = vmatpush1.bf16.msra.mxu0 %v4390
    %6172 = vmatprep.subr.bf16.mxu0 0
    %6173 = vmatpush1.bf16.msra.mxu0 %v4391
    %6174 = vmatprep.subr.bf16.mxu0 0
    %6175 = vmatpush1.bf16.msra.mxu0 %v4392
    %6176 = vmatprep.subr.bf16.mxu0 0
    %6177 = vmatpush1.bf16.msra.mxu0 %v4393
    %6178 = vmatprep.subr.bf16.mxu0 0
    %6179 = vmatpush1.bf16.msra.mxu0 %v4394
    %6180 = vmatprep.subr.bf16.mxu0 0
    %6181 = vmatpush1.bf16.msra.mxu0 %v4395
    %6182 = vmatprep.subr.bf16.mxu0 0
    %6183 = vmatpush1.bf16.msra.mxu0 %v4396
    %6184 = vmatprep.subr.bf16.mxu0 0
    %6185 = vmatpush1.bf16.msra.mxu0 %v4397
    %6186 = vmatprep.subr.bf16.mxu0 0
    %6187 = vmatpush1.bf16.msra.mxu0 %v4398
    %6188 = vmatprep.subr.bf16.mxu0 0
    %6189 = vmatpush1.bf16.msra.mxu0 %v4399
    %6190 = vmatprep.subr.bf16.mxu0 0
    %6191 = vmatpush1.bf16.msra.mxu0 %v4400
    %6192 = vmatprep.subr.bf16.mxu0 0
    %6193 = vmatpush1.bf16.msra.mxu0 %v4401
    %6194 = vmatprep.mubr.bf16.mxu0 %v1575
    %6195 = vmatmul.mubr.bf16.gmra.mrb[0].mxu0 %v1574
    %v6196 = vpop.f32.mrb[0].mxu0
    %v6197 = vadd.f32 %v6157, %v6196
    %v6198 = vpop.f32.mrb[0].mxu0
    %v6199 = vpop.f32.mrb[0].mxu0
    %v6200 = vpop.f32.mrb[0].mxu0
    %6201 = vdwg.mxu0
    %6202 = vmatprep.subr.bf16.mxu0 0
    %6203 = vmatpush1.bf16.msra.mxu0 %v4402
    %6204 = vmatprep.subr.bf16.mxu0 0
    %6205 = vmatpush1.bf16.msra.mxu0 %v4403
    %6206 = vmatprep.subr.bf16.mxu0 0
    %6207 = vmatpush1.bf16.msra.mxu0 %v4404
    %6208 = vmatprep.subr.bf16.mxu0 0
    %6209 = vmatpush1.bf16.msra.mxu0 %v4405
    %6210 = vmatprep.subr.bf16.mxu0 0
    %6211 = vmatpush1.bf16.msra.mxu0 %v4406
    %6212 = vmatprep.subr.bf16.mxu0 0
    %6213 = vmatpush1.bf16.msra.mxu0 %v4407
    %6214 = vmatprep.subr.bf16.mxu0 0
    %6215 = vmatpush1.bf16.msra.mxu0 %v4408
    %6216 = vmatprep.subr.bf16.mxu0 0
    %6217 = vmatpush1.bf16.msra.mxu0 %v4409
    %6218 = vmatprep.subr.bf16.mxu0 0
    %6219 = vmatpush1.bf16.msra.mxu0 %v4410
    %6220 = vmatprep.subr.bf16.mxu0 0
    %6221 = vmatpush1.bf16.msra.mxu0 %v4411
    %6222 = vmatprep.subr.bf16.mxu0 0
    %6223 = vmatpush1.bf16.msra.mxu0 %v4412
    %6224 = vmatprep.subr.bf16.mxu0 0
    %6225 = vmatpush1.bf16.msra.mxu0 %v4413
    %6226 = vmatprep.subr.bf16.mxu0 0
    %6227 = vmatpush1.bf16.msra.mxu0 %v4414
    %6228 = vmatprep.subr.bf16.mxu0 0
    %6229 = vmatpush1.bf16.msra.mxu0 %v4415
    %6230 = vmatprep.subr.bf16.mxu0 0
    %6231 = vmatpush1.bf16.msra.mxu0 %v4416
    %6232 = vmatprep.subr.bf16.mxu0 0
    %6233 = vmatpush1.bf16.msra.mxu0 %v4417
    %6234 = vmatprep.mubr.bf16.mxu0 %v1577
    %6235 = vmatmul.mubr.bf16.gmra.mrb[0].mxu0 %v1576
    %v6236 = vpop.f32.mrb[0].mxu0
    %v6237 = vadd.f32 %v6197, %v6236
    %v6238 = vpop.f32.mrb[0].mxu0
    %v6239 = vpop.f32.mrb[0].mxu0
    %v6240 = vpop.f32.mrb[0].mxu0
    %6241 = vdwg.mxu0
    %6242 = vmatprep.subr.bf16.mxu0 0
    %6243 = vmatpush1.bf16.msra.mxu0 %v4418
    %6244 = vmatprep.subr.bf16.mxu0 0
    %6245 = vmatpush1.bf16.msra.mxu0 %v4419
    %6246 = vmatprep.subr.bf16.mxu0 0
    %6247 = vmatpush1.bf16.msra.mxu0 %v4420
    %6248 = vmatprep.subr.bf16.mxu0 0
    %6249 = vmatpush1.bf16.msra.mxu0 %v4421
    %6250 = vmatprep.subr.bf16.mxu0 0
    %6251 = vmatpush1.bf16.msra.mxu0 %v4422
    %6252 = vmatprep.subr.bf16.mxu0 0
    %6253 = vmatpush1.bf16.msra.mxu0 %v4423
    %6254 = vmatprep.subr.bf16.mxu0 0
    %6255 = vmatpush1.bf16.msra.mxu0 %v4424
    %6256 = vmatprep.subr.bf16.mxu0 0
    %6257 = vmatpush1.bf16.msra.mxu0 %v4425
    %6258 = vmatprep.subr.bf16.mxu0 0
    %6259 = vmatpush1.bf16.msra.mxu0 %v4426
    %6260 = vmatprep.subr.bf16.mxu0 0
    %6261 = vmatpush1.bf16.msra.mxu0 %v4427
    %6262 = vmatprep.subr.bf16.mxu0 0
    %6263 = vmatpush1.bf16.msra.mxu0 %v4428
    %6264 = vmatprep.subr.bf16.mxu0 0
    %6265 = vmatpush1.bf16.msra.mxu0 %v4429
    %6266 = vmatprep.subr.bf16.mxu0 0
    %6267 = vmatpush1.bf16.msra.mxu0 %v4430
    %6268 = vmatprep.subr.bf16.mxu0 0
    %6269 = vmatpush1.bf16.msra.mxu0 %v4431
    %6270 = vmatprep.subr.bf16.mxu0 0
    %6271 = vmatpush1.bf16.msra.mxu0 %v4432
    %6272 = vmatprep.subr.bf16.mxu0 0
    %6273 = vmatpush1.bf16.msra.mxu0 %v4433
    %6274 = vmatprep.mubr.bf16.mxu0 %v1579
    %6275 = vmatmul.mubr.bf16.gmra.mrb[0].mxu0 %v1578
    %v6276 = vpop.f32.mrb[0].mxu0
    %v6277 = vadd.f32 %v6237, %v6276
    %v6278 = vpop.f32.mrb[0].mxu0
    %v6279 = vpop.f32.mrb[0].mxu0
    %v6280 = vpop.f32.mrb[0].mxu0
    %6281 = vdwg.mxu0
    %6282 = vmatprep.subr.bf16.mxu0 0
    %6283 = vmatpush1.bf16.msra.mxu0 %v4434
    %6284 = vmatprep.subr.bf16.mxu0 0
    %6285 = vmatpush1.bf16.msra.mxu0 %v4435
    %6286 = vmatprep.subr.bf16.mxu0 0
    %6287 = vmatpush1.bf16.msra.mxu0 %v4436
    %6288 = vmatprep.subr.bf16.mxu0 0
    %6289 = vmatpush1.bf16.msra.mxu0 %v4437
    %6290 = vmatprep.subr.bf16.mxu0 0
    %6291 = vmatpush1.bf16.msra.mxu0 %v4438
    %6292 = vmatprep.subr.bf16.mxu0 0
    %6293 = vmatpush1.bf16.msra.mxu0 %v4439
    %6294 = vmatprep.subr.bf16.mxu0 0
    %6295 = vmatpush1.bf16.msra.mxu0 %v4440
    %6296 = vmatprep.subr.bf16.mxu0 0
    %6297 = vmatpush1.bf16.msra.mxu0 %v4441
    %6298 = vmatprep.subr.bf16.mxu0 0
    %6299 = vmatpush1.bf16.msra.mxu0 %v4442
    %6300 = vmatprep.subr.bf16.mxu0 0
    %6301 = vmatpush1.bf16.msra.mxu0 %v4443
    %6302 = vmatprep.subr.bf16.mxu0 0
    %6303 = vmatpush1.bf16.msra.mxu0 %v4444
    %6304 = vmatprep.subr.bf16.mxu0 0
    %6305 = vmatpush1.bf16.msra.mxu0 %v4445
    %6306 = vmatprep.subr.bf16.mxu0 0
    %6307 = vmatpush1.bf16.msra.mxu0 %v4446
    %6308 = vmatprep.subr.bf16.mxu0 0
    %6309 = vmatpush1.bf16.msra.mxu0 %v4447
    %6310 = vmatprep.subr.bf16.mxu0 0
    %6311 = vmatpush1.bf16.msra.mxu0 %v4448
    %6312 = vmatprep.subr.bf16.mxu0 0
    %6313 = vmatpush1.bf16.msra.mxu0 %v4449
    %6314 = vmatprep.mubr.bf16.mxu0 %v1581
    %6315 = vmatmul.mubr.bf16.gmra.mrb[0].mxu0 %v1580
    %v6316 = vpop.f32.mrb[0].mxu0
    %v6317 = vadd.f32 %v6277, %v6316
    %v6318 = vpop.f32.mrb[0].mxu0
    %v6319 = vpop.f32.mrb[0].mxu0
    %v6320 = vpop.f32.mrb[0].mxu0
    %6321 = vdwg.mxu0
    %6322 = vmatprep.subr.bf16.mxu0 0
    %6323 = vmatpush1.bf16.msra.mxu0 %v4450
    %6324 = vmatprep.subr.bf16.mxu0 0
    %6325 = vmatpush1.bf16.msra.mxu0 %v4451
    %6326 = vmatprep.subr.bf16.mxu0 0
    %6327 = vmatpush1.bf16.msra.mxu0 %v4452
    %6328 = vmatprep.subr.bf16.mxu0 0
    %6329 = vmatpush1.bf16.msra.mxu0 %v4453
    %6330 = vmatprep.subr.bf16.mxu0 0
    %6331 = vmatpush1.bf16.msra.mxu0 %v4454
    %6332 = vmatprep.subr.bf16.mxu0 0
    %6333 = vmatpush1.bf16.msra.mxu0 %v4455
    %6334 = vmatprep.subr.bf16.mxu0 0
    %6335 = vmatpush1.bf16.msra.mxu0 %v4456
    %6336 = vmatprep.subr.bf16.mxu0 0
    %6337 = vmatpush1.bf16.msra.mxu0 %v4457
    %6338 = vmatprep.subr.bf16.mxu0 0
    %6339 = vmatpush1.bf16.msra.mxu0 %v4458
    %6340 = vmatprep.subr.bf16.mxu0 0
    %6341 = vmatpush1.bf16.msra.mxu0 %v4459
    %6342 = vmatprep.subr.bf16.mxu0 0
    %6343 = vmatpush1.bf16.msra.mxu0 %v4460
    %6344 = vmatprep.subr.bf16.mxu0 0
    %6345 = vmatpush1.bf16.msra.mxu0 %v4461
    %6346 = vmatprep.subr.bf16.mxu0 0
    %6347 = vmatpush1.bf16.msra.mxu0 %v4462
    %6348 = vmatprep.subr.bf16.mxu0 0
    %6349 = vmatpush1.bf16.msra.mxu0 %v4463
    %6350 = vmatprep.subr.bf16.mxu0 0
    %6351 = vmatpush1.bf16.msra.mxu0 %v4464
    %6352 = vmatprep.subr.bf16.mxu0 0
    %6353 = vmatpush1.bf16.msra.mxu0 %v4465
    %6354 = vmatprep.mubr.bf16.mxu0 %v1583
    %6355 = vmatmul.mubr.bf16.gmra.mrb[0].mxu0 %v1582
    %v6356 = vpop.f32.mrb[0].mxu0
    %v6357 = vadd.f32 %v6317, %v6356
    %v6358 = vpop.f32.mrb[0].mxu0
    %v6359 = vpop.f32.mrb[0].mxu0
    %v6360 = vpop.f32.mrb[0].mxu0
    %6361 = vdwg.mxu0
    %6362 = vmatprep.subr.bf16.mxu0 0
    %6363 = vmatpush1.bf16.msra.mxu0 %v4466
    %6364 = vmatprep.subr.bf16.mxu0 0
    %6365 = vmatpush1.bf16.msra.mxu0 %v4467
    %6366 = vmatprep.subr.bf16.mxu0 0
    %6367 = vmatpush1.bf16.msra.mxu0 %v4468
    %6368 = vmatprep.subr.bf16.mxu0 0
    %6369 = vmatpush1.bf16.msra.mxu0 %v4469
    %6370 = vmatprep.subr.bf16.mxu0 0
    %6371 = vmatpush1.bf16.msra.mxu0 %v4470
    %6372 = vmatprep.subr.bf16.mxu0 0
    %6373 = vmatpush1.bf16.msra.mxu0 %v4471
    %6374 = vmatprep.subr.bf16.mxu0 0
    %6375 = vmatpush1.bf16.msra.mxu0 %v4472
    %6376 = vmatprep.subr.bf16.mxu0 0
    %6377 = vmatpush1.bf16.msra.mxu0 %v4473
    %6378 = vmatprep.subr.bf16.mxu0 0
    %6379 = vmatpush1.bf16.msra.mxu0 %v4474
    %6380 = vmatprep.subr.bf16.mxu0 0
    %6381 = vmatpush1.bf16.msra.mxu0 %v4475
    %6382 = vmatprep.subr.bf16.mxu0 0
    %6383 = vmatpush1.bf16.msra.mxu0 %v4476
    %6384 = vmatprep.subr.bf16.mxu0 0
    %6385 = vmatpush1.bf16.msra.mxu0 %v4477
    %6386 = vmatprep.subr.bf16.mxu0 0
    %6387 = vmatpush1.bf16.msra.mxu0 %v4478
    %6388 = vmatprep.subr.bf16.mxu0 0
    %6389 = vmatpush1.bf16.msra.mxu0 %v4479
    %6390 = vmatprep.subr.bf16.mxu0 0
    %6391 = vmatpush1.bf16.msra.mxu0 %v4480
    %6392 = vmatprep.subr.bf16.mxu0 0
    %6393 = vmatpush1.bf16.msra.mxu0 %v4481
    %6394 = vmatprep.mubr.bf16.mxu0 %v1585
    %6395 = vmatmul.mubr.bf16.gmra.mrb[0].mxu0 %v1584
    %v6396 = vpop.f32.mrb[0].mxu0
    %v6397 = vadd.f32 %v6357, %v6396
    %v6398 = vpop.f32.mrb[0].mxu0
    %v6399 = vpop.f32.mrb[0].mxu0
    %v6400 = vpop.f32.mrb[0].mxu0
    %6401 = vdwg.mxu0
    %6402 = vmatprep.subr.bf16.mxu0 0
    %6403 = vmatpush1.bf16.msra.mxu0 %v4482
    %6404 = vmatprep.subr.bf16.mxu0 0
    %6405 = vmatpush1.bf16.msra.mxu0 %v4483
    %6406 = vmatprep.subr.bf16.mxu0 0
    %6407 = vmatpush1.bf16.msra.mxu0 %v4484
    %6408 = vmatprep.subr.bf16.mxu0 0
    %6409 = vmatpush1.bf16.msra.mxu0 %v4485
    %6410 = vmatprep.subr.bf16.mxu0 0
    %6411 = vmatpush1.bf16.msra.mxu0 %v4486
    %6412 = vmatprep.subr.bf16.mxu0 0
    %6413 = vmatpush1.bf16.msra.mxu0 %v4487
    %6414 = vmatprep.subr.bf16.mxu0 0
    %6415 = vmatpush1.bf16.msra.mxu0 %v4488
    %6416 = vmatprep.subr.bf16.mxu0 0
    %6417 = vmatpush1.bf16.msra.mxu0 %v4489
    %6418 = vmatprep.subr.bf16.mxu0 0
    %6419 = vmatpush1.bf16.msra.mxu0 %v4490
    %6420 = vmatprep.subr.bf16.mxu0 0
    %6421 = vmatpush1.bf16.msra.mxu0 %v4491
    %6422 = vmatprep.subr.bf16.mxu0 0
    %6423 = vmatpush1.bf16.msra.mxu0 %v4492
    %6424 = vmatprep.subr.bf16.mxu0 0
    %6425 = vmatpush1.bf16.msra.mxu0 %v4493
    %6426 = vmatprep.subr.bf16.mxu0 0
    %6427 = vmatpush1.bf16.msra.mxu0 %v4494
    %6428 = vmatprep.subr.bf16.mxu0 0
    %6429 = vmatpush1.bf16.msra.mxu0 %v4495
    %6430 = vmatprep.subr.bf16.mxu0 0
    %6431 = vmatpush1.bf16.msra.mxu0 %v4496
    %6432 = vmatprep.subr.bf16.mxu0 0
    %6433 = vmatpush1.bf16.msra.mxu0 %v4497
    %6434 = vmatprep.mubr.bf16.mxu0 %v1587
    %6435 = vmatmul.mubr.bf16.gmra.mrb[0].mxu0 %v1586
    %v6436 = vpop.f32.mrb[0].mxu0
    %v6437 = vadd.f32 %v6397, %v6436
    %v6438 = vpop.f32.mrb[0].mxu0
    %v6439 = vpop.f32.mrb[0].mxu0
    %v6440 = vpop.f32.mrb[0].mxu0
    %6441 = vdwg.mxu0
    %6442 = vmatprep.subr.bf16.mxu0 0
    %6443 = vmatpush1.bf16.msra.mxu0 %v4498
    %6444 = vmatprep.subr.bf16.mxu0 0
    %6445 = vmatpush1.bf16.msra.mxu0 %v4499
    %6446 = vmatprep.subr.bf16.mxu0 0
    %6447 = vmatpush1.bf16.msra.mxu0 %v4500
    %6448 = vmatprep.subr.bf16.mxu0 0
    %6449 = vmatpush1.bf16.msra.mxu0 %v4501
    %6450 = vmatprep.subr.bf16.mxu0 0
    %6451 = vmatpush1.bf16.msra.mxu0 %v4502
    %6452 = vmatprep.subr.bf16.mxu0 0
    %6453 = vmatpush1.bf16.msra.mxu0 %v4503
    %6454 = vmatprep.subr.bf16.mxu0 0
    %6455 = vmatpush1.bf16.msra.mxu0 %v4504
    %6456 = vmatprep.subr.bf16.mxu0 0
    %6457 = vmatpush1.bf16.msra.mxu0 %v4505
    %6458 = vmatprep.subr.bf16.mxu0 0
    %6459 = vmatpush1.bf16.msra.mxu0 %v4506
    %6460 = vmatprep.subr.bf16.mxu0 0
    %6461 = vmatpush1.bf16.msra.mxu0 %v4507
    %6462 = vmatprep.subr.bf16.mxu0 0
    %6463 = vmatpush1.bf16.msra.mxu0 %v4508
    %6464 = vmatprep.subr.bf16.mxu0 0
    %6465 = vmatpush1.bf16.msra.mxu0 %v4509
    %6466 = vmatprep.subr.bf16.mxu0 0
    %6467 = vmatpush1.bf16.msra.mxu0 %v4510
    %6468 = vmatprep.subr.bf16.mxu0 0
    %6469 = vmatpush1.bf16.msra.mxu0 %v4511
    %6470 = vmatprep.subr.bf16.mxu0 0
    %6471 = vmatpush1.bf16.msra.mxu0 %v4512
    %6472 = vmatprep.subr.bf16.mxu0 0
    %6473 = vmatpush1.bf16.msra.mxu0 %v4513
    %6474 = vmatprep.mubr.bf16.mxu0 %v1589
    %6475 = vmatmul.mubr.bf16.gmra.mrb[0].mxu0 %v1588
    %v6476 = vpop.f32.mrb[0].mxu0
    %v6477 = vadd.f32 %v6437, %v6476
    %v6478 = vpop.f32.mrb[0].mxu0
    %v6479 = vpop.f32.mrb[0].mxu0
    %v6480 = vpop.f32.mrb[0].mxu0
    %6481 = vdwg.mxu0
    %6482 = vmatprep.subr.bf16.mxu0 0
    %6483 = vmatpush1.bf16.msra.mxu0 %v4514
    %6484 = vmatprep.subr.bf16.mxu0 0
    %6485 = vmatpush1.bf16.msra.mxu0 %v4515
    %6486 = vmatprep.subr.bf16.mxu0 0
    %6487 = vmatpush1.bf16.msra.mxu0 %v4516
    %6488 = vmatprep.subr.bf16.mxu0 0
    %6489 = vmatpush1.bf16.msra.mxu0 %v4517
    %6490 = vmatprep.subr.bf16.mxu0 0
    %6491 = vmatpush1.bf16.msra.mxu0 %v4518
    %6492 = vmatprep.subr.bf16.mxu0 0
    %6493 = vmatpush1.bf16.msra.mxu0 %v4519
    %6494 = vmatprep.subr.bf16.mxu0 0
    %6495 = vmatpush1.bf16.msra.mxu0 %v4520
    %6496 = vmatprep.subr.bf16.mxu0 0
    %6497 = vmatpush1.bf16.msra.mxu0 %v4521
    %6498 = vmatprep.subr.bf16.mxu0 0
    %6499 = vmatpush1.bf16.msra.mxu0 %v4522
    %6500 = vmatprep.subr.bf16.mxu0 0
    %6501 = vmatpush1.bf16.msra.mxu0 %v4523
    %6502 = vmatprep.subr.bf16.mxu0 0
    %6503 = vmatpush1.bf16.msra.mxu0 %v4524
    %6504 = vmatprep.subr.bf16.mxu0 0
    %6505 = vmatpush1.bf16.msra.mxu0 %v4525
    %6506 = vmatprep.subr.bf16.mxu0 0
    %6507 = vmatpush1.bf16.msra.mxu0 %v4526
    %6508 = vmatprep.subr.bf16.mxu0 0
    %6509 = vmatpush1.bf16.msra.mxu0 %v4527
    %6510 = vmatprep.subr.bf16.mxu0 0
    %6511 = vmatpush1.bf16.msra.mxu0 %v4528
    %6512 = vmatprep.subr.bf16.mxu0 0
    %6513 = vmatpush1.bf16.msra.mxu0 %v4529
    %6514 = vmatprep.mubr.bf16.mxu0 %v1591
    %6515 = vmatmul.mubr.bf16.gmra.mrb[0].mxu0 %v1590
    %v6516 = vpop.f32.mrb[0].mxu0
    %v6517 = vadd.f32 %v6477, %v6516
    %v6518 = vpop.f32.mrb[0].mxu0
    %v6519 = vpop.f32.mrb[0].mxu0
    %v6520 = vpop.f32.mrb[0].mxu0
    %6521 = vdwg.mxu0
    %6522 = vmatprep.subr.bf16.mxu0 0
    %6523 = vmatpush1.bf16.msra.mxu0 %v4530
    %6524 = vmatprep.subr.bf16.mxu0 0
    %6525 = vmatpush1.bf16.msra.mxu0 %v4531
    %6526 = vmatprep.subr.bf16.mxu0 0
    %6527 = vmatpush1.bf16.msra.mxu0 %v4532
    %6528 = vmatprep.subr.bf16.mxu0 0
    %6529 = vmatpush1.bf16.msra.mxu0 %v4533
    %6530 = vmatprep.subr.bf16.mxu0 0
    %6531 = vmatpush1.bf16.msra.mxu0 %v4534
    %6532 = vmatprep.subr.bf16.mxu0 0
    %6533 = vmatpush1.bf16.msra.mxu0 %v4535
    %6534 = vmatprep.subr.bf16.mxu0 0
    %6535 = vmatpush1.bf16.msra.mxu0 %v4536
    %6536 = vmatprep.subr.bf16.mxu0 0
    %6537 = vmatpush1.bf16.msra.mxu0 %v4537
    %6538 = vmatprep.subr.bf16.mxu0 0
    %6539 = vmatpush1.bf16.msra.mxu0 %v4538
    %6540 = vmatprep.subr.bf16.mxu0 0
    %6541 = vmatpush1.bf16.msra.mxu0 %v4539
    %6542 = vmatprep.subr.bf16.mxu0 0
    %6543 = vmatpush1.bf16.msra.mxu0 %v4540
    %6544 = vmatprep.subr.bf16.mxu0 0
    %6545 = vmatpush1.bf16.msra.mxu0 %v4541
    %6546 = vmatprep.subr.bf16.mxu0 0
    %6547 = vmatpush1.bf16.msra.mxu0 %v4542
    %6548 = vmatprep.subr.bf16.mxu0 0
    %6549 = vmatpush1.bf16.msra.mxu0 %v4543
    %6550 = vmatprep.subr.bf16.mxu0 0
    %6551 = vmatpush1.bf16.msra.mxu0 %v4544
    %6552 = vmatprep.subr.bf16.mxu0 0
    %6553 = vmatpush1.bf16.msra.mxu0 %v4545
    %6554 = vmatprep.mubr.bf16.mxu0 %v1593
    %6555 = vmatmul.mubr.bf16.gmra.mrb[0].mxu0 %v1592
    %v6556 = vpop.f32.mrb[0].mxu0
    %v6557 = vadd.f32 %v6517, %v6556
    %v6558 = vpop.f32.mrb[0].mxu0
    %v6559 = vpop.f32.mrb[0].mxu0
    %v6560 = vpop.f32.mrb[0].mxu0
    %6561 = vdwg.mxu0
    %v6562 = vmax.f32 %v6557, 0.0
    %v6563 = vld [vmem:[#allocation7] sm:$0xff]
    %v6564 = vmul.f32 %v6562, %v6563
    %v6565 = vpack.c.bf16 %v6564, %v6564
    %v6566 = vld [vmem:[#allocation11] sm:$0xff]
    %v6567 = vld [vmem:[#allocation11 + $0x8] sm:$0xff]
    %v6568 = vld [vmem:[#allocation11 + $0x10] sm:$0xff]
    %v6569 = vld [vmem:[#allocation11 + $0x18] sm:$0xff]
    %v6570 = vld [vmem:[#allocation11 + $0x20] sm:$0xff]
    %v6571 = vld [vmem:[#allocation11 + $0x28] sm:$0xff]
    %v6572 = vld [vmem:[#allocation11 + $0x30] sm:$0xff]
    %v6573 = vld [vmem:[#allocation11 + $0x38] sm:$0xff]
    %v6574 = vld [vmem:[#allocation11 + $0x40] sm:$0xff]
    %v6575 = vld [vmem:[#allocation11 + $0x48] sm:$0xff]
    %v6576 = vld [vmem:[#allocation11 + $0x50] sm:$0xff]
    %v6577 = vld [vmem:[#allocation11 + $0x58] sm:$0xff]
    %v6578 = vld [vmem:[#allocation11 + $0x60] sm:$0xff]
    %v6579 = vld [vmem:[#allocation11 + $0x68] sm:$0xff]
    %v6580 = vld [vmem:[#allocation11 + $0x70] sm:$0xff]
    %v6581 = vld [vmem:[#allocation11 + $0x78] sm:$0xff]
    %v6582 = vld [vmem:[#allocation13] sm:$0x3]
    %v6584 = vlaneseq
    %v6585 = vshrl.u32 %v6584, 7
    %v6586 = vsub.s32 0, %v6585
    %v6587 = vrot.slane %v6582, %v6586
    %v6588 = vlaneseq
    %v6589 = vshrl.u32 %v6588, 7
    %v6590 = vsub.s32 1, %v6589
    %v6591 = vrot.slane %v6582, %v6590
    %v6610 = vunpack.c.l.b16 %v6566
    %v6611 = vunpack.c.h.b16 %v6566
    %v6612 = vunpack.c.l.b16 %v6567
    %v6613 = vunpack.c.h.b16 %v6567
    %v6614 = vunpack.c.l.b16 %v6568
    %v6615 = vunpack.c.h.b16 %v6568
    %v6616 = vunpack.c.l.b16 %v6569
    %v6617 = vunpack.c.h.b16 %v6569
    %v6618 = vunpack.c.l.b16 %v6570
    %v6619 = vunpack.c.h.b16 %v6570
    %v6620 = vunpack.c.l.b16 %v6571
    %v6621 = vunpack.c.h.b16 %v6571
    %v6622 = vunpack.c.l.b16 %v6572
    %v6623 = vunpack.c.h.b16 %v6572
    %v6624 = vunpack.c.l.b16 %v6573
    %v6625 = vunpack.c.h.b16 %v6573
    %v6626 = vunpack.c.l.b16 %v6574
    %v6627 = vunpack.c.h.b16 %v6574
    %v6628 = vunpack.c.l.b16 %v6575
    %v6629 = vunpack.c.h.b16 %v6575
    %v6630 = vunpack.c.l.b16 %v6576
    %v6631 = vunpack.c.h.b16 %v6576
    %v6632 = vunpack.c.l.b16 %v6577
    %v6633 = vunpack.c.h.b16 %v6577
    %v6634 = vunpack.c.l.b16 %v6578
    %v6635 = vunpack.c.h.b16 %v6578
    %v6636 = vunpack.c.l.b16 %v6579
    %v6637 = vunpack.c.h.b16 %v6579
    %v6638 = vunpack.c.l.b16 %v6580
    %v6639 = vunpack.c.h.b16 %v6580
    %v6640 = vunpack.c.l.b16 %v6581
    %v6641 = vunpack.c.h.b16 %v6581
    %v6642 = vpack.c.b16 %v6612, %v6610
    %v6643 = vpack.c.b16 %v6613, %v6611
    %v6644 = vpack.c.b16 %v6616, %v6614
    %v6645 = vpack.c.b16 %v6617, %v6615
    %v6646 = vpack.c.b16 %v6620, %v6618
    %v6647 = vpack.c.b16 %v6621, %v6619
    %v6648 = vpack.c.b16 %v6624, %v6622
    %v6649 = vpack.c.b16 %v6625, %v6623
    %v6650 = vpack.c.b16 %v6628, %v6626
    %v6651 = vpack.c.b16 %v6629, %v6627
    %v6652 = vpack.c.b16 %v6632, %v6630
    %v6653 = vpack.c.b16 %v6633, %v6631
    %v6654 = vpack.c.b16 %v6636, %v6634
    %v6655 = vpack.c.b16 %v6637, %v6635
    %v6656 = vpack.c.b16 %v6640, %v6638
    %v6657 = vpack.c.b16 %v6641, %v6639
    %6674 = vmatprep.subr.bf16.mxu0 %v6643
    %6675 = vmatpush1.bf16.msra.mxu0 %v6642
    %6676 = vmatprep.subr.bf16.mxu0 %v6645
    %6677 = vmatpush1.bf16.msra.mxu0 %v6644
    %6678 = vmatprep.subr.bf16.mxu0 %v6647
    %6679 = vmatpush1.bf16.msra.mxu0 %v6646
    %6680 = vmatprep.subr.bf16.mxu0 %v6649
    %6681 = vmatpush1.bf16.msra.mxu0 %v6648
    %6682 = vmatprep.subr.bf16.mxu0 %v6651
    %6683 = vmatpush1.bf16.msra.mxu0 %v6650
    %6684 = vmatprep.subr.bf16.mxu0 %v6653
    %6685 = vmatpush1.bf16.msra.mxu0 %v6652
    %6686 = vmatprep.subr.bf16.mxu0 %v6655
    %6687 = vmatpush1.bf16.msra.mxu0 %v6654
    %6688 = vmatprep.subr.bf16.mxu0 %v6657
    %6689 = vmatpush1.bf16.msra.mxu0 %v6656
    %6690 = vmatprep.subr.bf16.mxu0 0
    %6691 = vmatpush1.bf16.msra.mxu0 0
    %6692 = vmatprep.subr.bf16.mxu0 0
    %6693 = vmatpush1.bf16.msra.mxu0 0
    %6694 = vmatprep.subr.bf16.mxu0 0
    %6695 = vmatpush1.bf16.msra.mxu0 0
    %6696 = vmatprep.subr.bf16.mxu0 0
    %6697 = vmatpush1.bf16.msra.mxu0 0
    %6698 = vmatprep.subr.bf16.mxu0 0
    %6699 = vmatpush1.bf16.msra.mxu0 0
    %6700 = vmatprep.subr.bf16.mxu0 0
    %6701 = vmatpush1.bf16.msra.mxu0 0
    %6702 = vmatprep.subr.bf16.mxu0 0
    %6703 = vmatpush1.bf16.msra.mxu0 0
    %6704 = vmatprep.subr.bf16.mxu0 0
    %6705 = vmatpush1.bf16.msra.mxu0 0
    %6706 = vmatprep.mubr.bf16.mxu0 0
    %6707 = vmatmul.mubr.bf16.gmra.mrb[0].mxu0 %v6565
    %v6708 = vpop.f32.mrb[0].mxu0
    %v6709 = vadd.f32 %v6587, %v6708
    %v6710 = vpop.f32.mrb[0].mxu0
    %v6711 = vadd.f32 %v6591, %v6710
    %v6712 = vpop.f32.mrb[0].mxu0
    %v6713 = vpop.f32.mrb[0].mxu0
    %6714 = vdwg.mxu0
    %v6715 = vmax.f32 %v6709, 0.0
    %v6716 = vmax.f32 %v6711, 0.0
    %6717 = vst [vmem:[#allocation18] sm:$0xff] %v6715
    %6718 = vst [vmem:[#allocation18 + $0x8] sm:$0xff] %v6716
    %v6719 = vpack.c.bf16 %v6715, %v6715
    %v6720 = vpack.c.bf16 %v6716, %v6716
    %v6721 = vld [vmem:[#allocation14] sm:$0xf]
    %v6722 = vld [vmem:[#allocation14 + $0x4] sm:$0xf]
    %v6723 = vld [vmem:[#allocation14 + $0x8] sm:$0xf]
    %v6724 = vld [vmem:[#allocation14 + $0xc] sm:$0xf]
    %v6725 = vld [vmem:[#allocation14 + $0x10] sm:$0xf]
    %v6726 = vld [vmem:[#allocation14 + $0x14] sm:$0xf]
    %v6727 = vld [vmem:[#allocation14 + $0x18] sm:$0xf]
    %v6728 = vld [vmem:[#allocation14 + $0x1c] sm:$0xf]
    %v6729 = vld [vmem:[#allocation14 + $0x20] sm:$0xf]
    %v6730 = vld [vmem:[#allocation14 + $0x24] sm:$0xf]
    %v6731 = vld [vmem:[#allocation14 + $0x28] sm:$0xf]
    %v6732 = vld [vmem:[#allocation14 + $0x2c] sm:$0xf]
    %v6733 = vld [vmem:[#allocation14 + $0x30] sm:$0xf]
    %v6734 = vld [vmem:[#allocation14 + $0x34] sm:$0xf]
    %v6735 = vld [vmem:[#allocation14 + $0x38] sm:$0xf]
    %v6736 = vld [vmem:[#allocation14 + $0x3c] sm:$0xf]
    %v6737 = vld [vmem:[#allocation14 + $0x40] sm:$0xf]
    %v6738 = vld [vmem:[#allocation14 + $0x44] sm:$0xf]
    %v6739 = vld [vmem:[#allocation14 + $0x48] sm:$0xf]
    %v6740 = vld [vmem:[#allocation14 + $0x4c] sm:$0xf]
    %v6741 = vld [vmem:[#allocation14 + $0x50] sm:$0xf]
    %v6742 = vld [vmem:[#allocation14 + $0x54] sm:$0xf]
    %v6743 = vld [vmem:[#allocation14 + $0x58] sm:$0xf]
    %v6744 = vld [vmem:[#allocation14 + $0x5c] sm:$0xf]
    %v6745 = vld [vmem:[#allocation14 + $0x60] sm:$0xf]
    %v6746 = vld [vmem:[#allocation14 + $0x64] sm:$0xf]
    %v6747 = vld [vmem:[#allocation14 + $0x68] sm:$0xf]
    %v6748 = vld [vmem:[#allocation14 + $0x6c] sm:$0xf]
    %v6749 = vld [vmem:[#allocation14 + $0x70] sm:$0xf]
    %v6750 = vld [vmem:[#allocation14 + $0x74] sm:$0xf]
    %v6751 = vld [vmem:[#allocation14 + $0x78] sm:$0xf]
    %v6752 = vld [vmem:[#allocation14 + $0x7c] sm:$0xf]
    %v6753 = vld [vmem:[#allocation16] sm:$0x1]
    %v6755 = vlaneseq
    %v6756 = vshrl.u32 %v6755, 7
    %v6757 = vsub.s32 0, %v6756
    %v6758 = vrot.slane %v6753, %v6757
    %v6792 = vunpack.c.l.b16 %v6721
    %v6793 = vunpack.c.l.b16 %v6722
    %v6794 = vunpack.c.l.b16 %v6723
    %v6795 = vunpack.c.l.b16 %v6724
    %v6796 = vunpack.c.l.b16 %v6725
    %v6797 = vunpack.c.l.b16 %v6726
    %v6798 = vunpack.c.l.b16 %v6727
    %v6799 = vunpack.c.l.b16 %v6728
    %v6800 = vunpack.c.l.b16 %v6729
    %v6801 = vunpack.c.l.b16 %v6730
    %v6802 = vunpack.c.l.b16 %v6731
    %v6803 = vunpack.c.l.b16 %v6732
    %v6804 = vunpack.c.l.b16 %v6733
    %v6805 = vunpack.c.l.b16 %v6734
    %v6806 = vunpack.c.l.b16 %v6735
    %v6807 = vunpack.c.l.b16 %v6736
    %v6808 = vunpack.c.l.b16 %v6737
    %v6809 = vunpack.c.l.b16 %v6738
    %v6810 = vunpack.c.l.b16 %v6739
    %v6811 = vunpack.c.l.b16 %v6740
    %v6812 = vunpack.c.l.b16 %v6741
    %v6813 = vunpack.c.l.b16 %v6742
    %v6814 = vunpack.c.l.b16 %v6743
    %v6815 = vunpack.c.l.b16 %v6744
    %v6816 = vunpack.c.l.b16 %v6745
    %v6817 = vunpack.c.l.b16 %v6746
    %v6818 = vunpack.c.l.b16 %v6747
    %v6819 = vunpack.c.l.b16 %v6748
    %v6820 = vunpack.c.l.b16 %v6749
    %v6821 = vunpack.c.l.b16 %v6750
    %v6822 = vunpack.c.l.b16 %v6751
    %v6823 = vunpack.c.l.b16 %v6752
    %v6824 = vpack.c.b16 %v6793, %v6792
    %v6825 = vpack.c.b16 %v6795, %v6794
    %v6826 = vpack.c.b16 %v6797, %v6796
    %v6827 = vpack.c.b16 %v6799, %v6798
    %v6828 = vpack.c.b16 %v6801, %v6800
    %v6829 = vpack.c.b16 %v6803, %v6802
    %v6830 = vpack.c.b16 %v6805, %v6804
    %v6831 = vpack.c.b16 %v6807, %v6806
    %v6832 = vpack.c.b16 %v6809, %v6808
    %v6833 = vpack.c.b16 %v6811, %v6810
    %v6834 = vpack.c.b16 %v6813, %v6812
    %v6835 = vpack.c.b16 %v6815, %v6814
    %v6836 = vpack.c.b16 %v6817, %v6816
    %v6837 = vpack.c.b16 %v6819, %v6818
    %v6838 = vpack.c.b16 %v6821, %v6820
    %v6839 = vpack.c.b16 %v6823, %v6822
    %6856 = vmatprep.subr.bf16.mxu0 0
    %6857 = vmatpush1.bf16.msra.mxu0 %v6824
    %6858 = vmatprep.subr.bf16.mxu0 0
    %6859 = vmatpush1.bf16.msra.mxu0 %v6825
    %6860 = vmatprep.subr.bf16.mxu0 0
    %6861 = vmatpush1.bf16.msra.mxu0 %v6826
    %6862 = vmatprep.subr.bf16.mxu0 0
    %6863 = vmatpush1.bf16.msra.mxu0 %v6827
    %6864 = vmatprep.subr.bf16.mxu0 0
    %6865 = vmatpush1.bf16.msra.mxu0 %v6828
    %6866 = vmatprep.subr.bf16.mxu0 0
    %6867 = vmatpush1.bf16.msra.mxu0 %v6829
    %6868 = vmatprep.subr.bf16.mxu0 0
    %6869 = vmatpush1.bf16.msra.mxu0 %v6830
    %6870 = vmatprep.subr.bf16.mxu0 0
    %6871 = vmatpush1.bf16.msra.mxu0 %v6831
    %6872 = vmatprep.subr.bf16.mxu0 0
    %6873 = vmatpush1.bf16.msra.mxu0 %v6832
    %6874 = vmatprep.subr.bf16.mxu0 0
    %6875 = vmatpush1.bf16.msra.mxu0 %v6833
    %6876 = vmatprep.subr.bf16.mxu0 0
    %6877 = vmatpush1.bf16.msra.mxu0 %v6834
    %6878 = vmatprep.subr.bf16.mxu0 0
    %6879 = vmatpush1.bf16.msra.mxu0 %v6835
    %6880 = vmatprep.subr.bf16.mxu0 0
    %6881 = vmatpush1.bf16.msra.mxu0 %v6836
    %6882 = vmatprep.subr.bf16.mxu0 0
    %6883 = vmatpush1.bf16.msra.mxu0 %v6837
    %6884 = vmatprep.subr.bf16.mxu0 0
    %6885 = vmatpush1.bf16.msra.mxu0 %v6838
    %6886 = vmatprep.subr.bf16.mxu0 0
    %6887 = vmatpush1.bf16.msra.mxu0 %v6839
    %6888 = vmatprep.mubr.bf16.mxu0 %v6720
    %6889 = vmatmul.mubr.bf16.gmra.mrb[0].mxu0 %v6719
    %v6890 = vpop.f32.mrb[0].mxu0
    %v6891 = vadd.f32 %v6758, %v6890
    %v6892 = vpop.f32.mrb[0].mxu0
    %v6893 = vpop.f32.mrb[0].mxu0
    %v6894 = vpop.f32.mrb[0].mxu0
    %6895 = vdwg.mxu0
    %6896 = vst [vmem:[#allocation17] sm:$0xff] %v6891
    // Predicated region
    $region74: #{tpu_custom_call.1} parent=1 // pred_check
      _
    $region75: #{tpu_custom_call.1} parent=1 // pred_check_branch
      %6898 = sbr.rel (0) target = $region77
    $region76: #{tpu_custom_call.1} parent=1 // pred_region
      %s6900 = ssub.s32 128, 128
      %6901 = vsyncadd [#allocation4], %s6900
      %s6903 = sshll.u32 [#allocation17], 4
      %s6904 = int_to_ptr.vmem [resolvable:$true] %s6903
      %6906 = dma.vmem_to_hbm [thread:$0]  %s6904, 128, %s9, [#allocation4]
    $region77: #{tpu_custom_call.1} parent=1 // pred_fallthru
      _
    // Predicated region
    $region78: #{tpu_custom_call.1} parent=1 // pred_check
      _
    $region79: #{tpu_custom_call.1} parent=1 // pred_check_branch
      %6908 = sbr.rel (0) target = $region81
    $region80: #{tpu_custom_call.1} parent=1 // pred_region
      %s6910 = ssub.s32 256, 256
      %6911 = vsyncadd [#allocation19], %s6910
      %s6913 = sshll.u32 [#allocation18], 4
      %s6914 = int_to_ptr.vmem [resolvable:$true] %s6913
      %6916 = dma.vmem_to_hbm [thread:$0]  %s6914, 256, %s10, [#allocation19]
    $region81: #{tpu_custom_call.1} parent=1 // pred_fallthru
      _
    // Predicated region
    $region82: #{tpu_custom_call.1} parent=1 // pred_check
      _
    $region83: #{tpu_custom_call.1} parent=1 // pred_check_branch
      %6918 = sbr.rel (0) target = $region85
    $region84: #{tpu_custom_call.1} parent=1 // pred_region
      %6919 = dma.done [#allocation4], 128
    $region85: #{tpu_custom_call.1} parent=1 // pred_fallthru
      _
    // Predicated region
    $region86: #{tpu_custom_call.1} parent=1 // pred_check
      _
    $region87: #{tpu_custom_call.1} parent=1 // pred_check_branch
      %6921 = sbr.rel (0) target = $region89
    $region88: #{tpu_custom_call.1} parent=1 // pred_region
      %6922 = dma.done [#allocation19], 256
    $region89: #{tpu_custom_call.1} parent=1 // pred_fallthru
      _
    %6923 = vsyncpa [#allocation3], 1
    %6924 = vsyncpa [#allocation6], 1
    %6925 = vsyncpa [#allocation9], 1
    %6926 = vsyncpa [#allocation12], 1
    %6927 = vsyncpa [#allocation15], 1
    %6928 = vsyncpa [#allocation4], 1
    %6929 = vsyncpa [#allocation19], 1

</llo_original>
